<compile_context>
chip_gen: v6e
topology: v6e:2x2x1
jax: 0.10.0
libtpu: 0.0.40
codegen_flags: <defaults>
</compile_context>

<pallas_src>
import functools

import jax
import jax.numpy as jnp
from jax.experimental import pallas as pl
from jax.experimental.pallas import tpu as pltpu


# -----------------------------------------------------------------------------
# Kernel: one batch element per grid step; all weights resident in VMEM.
# -----------------------------------------------------------------------------
def encoder_layer_kernel(
    x_ref,                      # (1, S, D)  f32
    w_in_ref, b_in_ref,         # (D, 3D) bf16 (scale folded into Q cols), (1, 3D) f32
    wo_ref, bo_ref,             # (D, D) bf16 (pre-transposed), (1, D) f32
    w1_ref, b1_ref,             # (D, F) bf16 (pre-transposed), (1, F) f32
    w2_ref, b2_ref,             # (F, D) bf16 (pre-transposed), (1, D) f32
    g1_ref, be1_ref,            # (1, D) f32 layernorm1 weight/bias
    g2_ref, be2_ref,            # (1, D) f32 layernorm2 weight/bias
    y_ref,                      # (1, S, D) f32
    *attn_refs,                 # optionally (1, S, S) f32
    nhead, eps, need_weights,
):
    x = x_ref[0]                                   # (S, D) f32
    S, D = x.shape
    hd = D // nhead

    # ---- fused QKV projection (softmax scale pre-folded into Wq / bq) --------
    qkv = jnp.dot(x.astype(jnp.bfloat16), w_in_ref[...],
                  preferred_element_type=jnp.float32) + b_in_ref[...]
    qkv_bf = qkv.astype(jnp.bfloat16)              # single cast; slice Q/K/V from it

    # ---- attention: heads stacked into one leading batch dim -----------------
    q = jnp.stack([qkv_bf[:, h * hd:(h + 1) * hd] for h in range(nhead)], axis=0)
    k = jnp.stack([qkv_bf[:, D + h * hd:D + (h + 1) * hd] for h in range(nhead)], axis=0)
    v = jnp.stack([qkv_bf[:, 2 * D + h * hd:2 * D + (h + 1) * hd]
                   for h in range(nhead)], axis=0)                      # (H, S, hd)

    scores = jnp.einsum('hqd,hkd->hqk', q, k,
                        preferred_element_type=jnp.float32)             # (H, S, S)
    m = jnp.max(scores, axis=-1, keepdims=True)
    e = jnp.exp(scores - m)
    probs = e * pl.reciprocal(jnp.sum(e, axis=-1, keepdims=True), approx=True)

    if need_weights:
        # PyTorch returns head-averaged attention weights.
        attn_refs[0][0] = jnp.mean(probs, axis=0)

    ctx = jnp.einsum('hqk,hkd->hqd', probs.astype(jnp.bfloat16), v,
                     preferred_element_type=jnp.float32)                # (H, S, hd)
    # Lane-contiguous head concat -> (S, D), then ONE full-D output projection.
    ctx_cat = jnp.concatenate([ctx[h] for h in range(nhead)], axis=-1)
    attn_out = jnp.dot(ctx_cat.astype(jnp.bfloat16), wo_ref[...],
                       preferred_element_type=jnp.float32) + bo_ref[...]

    # ---- residual + LayerNorm 1 (f32, two-pass stats) -------------------------
    x1 = x + attn_out                              # dropout1 == identity (eval)
    mu = jnp.mean(x1, axis=-1, keepdims=True)
    var = jnp.mean((x1 - mu) ** 2, axis=-1, keepdims=True)
    xn = (x1 - mu) * jax.lax.rsqrt(var + eps) * g1_ref[...] + be1_ref[...]

    # ---- feed-forward + residual + LayerNorm 2 --------------------------------
    h1 = jnp.dot(xn.astype(jnp.bfloat16), w1_ref[...],
                 preferred_element_type=jnp.float32) + b1_ref[...]
    h1 = jnp.maximum(h1, 0.0)                      # ReLU; inner dropout == identity
    ff = jnp.dot(h1.astype(jnp.bfloat16), w2_ref[...],
                 preferred_element_type=jnp.float32) + b2_ref[...]
    x2 = xn + ff                                   # dropout2 == identity (eval)
    mu2 = jnp.mean(x2, axis=-1, keepdims=True)
    var2 = jnp.mean((x2 - mu2) ** 2, axis=-1, keepdims=True)
    y_ref[0] = (x2 - mu2) * jax.lax.rsqrt(var2 + eps) * g2_ref[...] + be2_ref[...]


# -----------------------------------------------------------------------------
# Wrapper: weight pre-transpose / pre-concat / scale-fold / bf16 cast + pallas_call.
# -----------------------------------------------------------------------------
def attention_encoder_layer(x_sbd, params, *, nhead, eps=1e-5, need_weights=True):
    """x_sbd: (S, B, D) float32 (PyTorch seq-first layout).

    Returns (y_sbd, attn_bss) if need_weights else y_sbd.
    """
    S, B, D = x_sbd.shape
    F = params["w1"].shape[0]
    hd = D // nhead
    bf16 = jnp.bfloat16
    scale = 1.0 / float(hd) ** 0.5

    x_b = jnp.transpose(x_sbd, (1, 0, 2)).astype(jnp.float32)          # (B, S, D)

    # Pre-transpose / pre-concatenate weights once; fold the 1/sqrt(hd) scale
    # into the Q projection (free at trace time, removes an in-kernel multiply).
    w_in_t = jnp.concatenate(
        [params["wq"] * scale, params["wk"], params["wv"]], axis=0).T.astype(bf16)  # (D,3D)
    b_in = jnp.concatenate(
        [params["bq"] * scale, params["bk"], params["bv"]], axis=1)                 # (1,3D)
    wo_t = params["wo"].T.astype(bf16)                                               # (D,D)
    w1_t = params["w1"].T.astype(bf16)                                               # (D,F)
    w2_t = params["w2"].T.astype(bf16)                                               # (F,D)

    weights = (w_in_t, b_in, wo_t, params["bo"], w1_t, params["b1"],
               w2_t, params["b2"], params["g1"], params["be1"],
               params["g2"], params["be2"])

    # Rough cost estimate (scheduler hint) and VMEM sizing from the actual blocks.
    flops = (2 * B * S * D * 3 * D + 4 * B * nhead * S * S * hd
             + 2 * B * S * D * D + 4 * B * S * D * F)
    transcendentals = B * nhead * S * S + 2 * B * S
    w_bytes = 2 * (3 * D * D + D * D + 2 * D * F) + 4 * (2 * 3 * D + F + 5 * D)
    io_bytes = 4 * (2 * B * S * D + (B * S * S if need_weights else 0))
    cost = pl.CostEstimate(flops=flops, transcendentals=transcendentals,
                           bytes_accessed=w_bytes + io_bytes)
    block_bytes = w_bytes + 4 * (2 * S * D + S * S + S * 3 * D + nhead * S * S + S * F)
    vmem_limit = int(min(32 << 20, max(8 << 20, 4 * block_bytes)))

    kernel = functools.partial(encoder_layer_kernel, nhead=nhead, eps=eps,
                               need_weights=need_weights)

    def run(weight_mode):
        def const_spec(shape):
            n = len(shape)
            imap = lambda b, _n=n: (0,) * _n
            if weight_mode is None:
                return pl.BlockSpec(shape, imap)
            return pl.BlockSpec(shape, imap, pipeline_mode=weight_mode)

        in_specs = [pl.BlockSpec((1, S, D), lambda b: (b, 0, 0))]
        in_specs += [const_spec(tuple(w.shape)) for w in weights]
        out_specs = [pl.BlockSpec((1, S, D), lambda b: (b, 0, 0))]
        out_shape = [jax.ShapeDtypeStruct((B, S, D), jnp.float32)]
        if need_weights:
            out_specs.append(pl.BlockSpec((1, S, S), lambda b: (b, 0, 0)))
            out_shape.append(jax.ShapeDtypeStruct((B, S, S), jnp.float32))

        outs = pl.pallas_call(
            kernel,
            grid=(B,),                             # row tiling by batch element
            in_specs=in_specs,
            out_specs=out_specs,
            out_shape=out_shape,
            compiler_params=pltpu.CompilerParams(
                dimension_semantics=("parallel",),  # v7x: batches split across TCs
                vmem_limit_bytes=vmem_limit),
            cost_estimate=cost,
        )(x_b, *weights)
        return jax.block_until_ready(outs)

    # Grid-invariant weights only need a single VMEM buffer (halves resident
    # weight VMEM); fall back to default pipelining if pipeline_mode is rejected.
    try:
        outs = run(pl.Buffered(1))
    except Exception:
        outs = run(None)

    y_sbd = jnp.transpose(outs[0], (1, 0, 2))
    if need_weights:
        return y_sbd, outs[1]
    return y_sbd


# -----------------------------------------------------------------------------
# Pure-JAX f32 reference (mirrors torch.nn.MultiheadAttention eval-mode semantics)
# -----------------------------------------------------------------------------
def reference(x_sbd, params, *, nhead, eps=1e-5):
    S, B, D = x_sbd.shape
    hd = D // nhead
    x = jnp.transpose(x_sbd, (1, 0, 2))                      # (B, S, D)
    q = x @ params["wq"].T + params["bq"]
    k = x @ params["wk"].T + params["bk"]
    v = x @ params["wv"].T + params["bv"]
    split = lambda t: jnp.transpose(t.reshape(B, S, nhead, hd), (0, 2, 1, 3))
    qh, kh, vh = split(q), split(k), split(v)
    scores = jnp.einsum("bhqd,bhkd->bhqk", qh / (hd ** 0.5), kh)
    probs = jax.nn.softmax(scores, axis=-1)
    ctx = jnp.einsum("bhqk,bhkd->bhqd", probs, vh)
    ctx = jnp.transpose(ctx, (0, 2, 1, 3)).reshape(B, S, D)
    attn_out = ctx @ params["wo"].T + params["bo"]
    attn_avg = probs.mean(axis=1)

    def ln(z, g, b):
        mu = z.mean(-1, keepdims=True)
        var = ((z - mu) ** 2).mean(-1, keepdims=True)
        return (z - mu) / jnp.sqrt(var + eps) * g + b

    x1 = ln(x + attn_out, params["g1"], params["be1"])
    ff = jnp.maximum(x1 @ params["w1"].T + params["b1"], 0.0) @ params["w2"].T + params["b2"]
    y = ln(x1 + ff, params["g2"], params["be2"])
    return jnp.transpose(y, (1, 0, 2)), attn_avg


# -----------------------------------------------------------------------------
# Main
# -----------------------------------------------------------------------------
if __name__ == "__main__":
    S, B, D, H, F = 8, 2, 32, 4, 64        # seq, batch, d_model, nhead, dim_feedforward

    key = jax.random.PRNGKey(0)
    ks = jax.random.split(key, 12)
    rnd = lambda k, shape: (0.1 * jax.random.normal(k, shape)).astype(jnp.float32)

    params = {
        "wq": rnd(ks[0], (D, D)), "wk": rnd(ks[1], (D, D)), "wv": rnd(ks[2], (D, D)),
        "bq": rnd(ks[3], (1, D)), "bk": rnd(ks[4], (1, D)), "bv": rnd(ks[5], (1, D)),
        "wo": rnd(ks[6], (D, D)), "bo": rnd(ks[7], (1, D)),
        "w1": rnd(ks[8], (F, D)), "b1": rnd(ks[9], (1, F)),
        "w2": rnd(ks[10], (D, F)), "b2": rnd(ks[11], (1, D)),
        "g1": jnp.ones((1, D), jnp.float32), "be1": jnp.zeros((1, D), jnp.float32),
        "g2": jnp.ones((1, D), jnp.float32), "be2": jnp.zeros((1, D), jnp.float32),
    }

    x = jax.random.normal(jax.random.PRNGKey(1), (S, B, D), dtype=jnp.float32)

    y, attn = attention_encoder_layer(x, params, nhead=H)
    jax.block_until_ready((y, attn))

    y_ref, attn_ref = reference(x, params, nhead=H)
    assert y.shape == (S, B, D) and attn.shape == (B, S, S)
    # bf16 MXU operands with f32 accumulation (+ approx softmax reciprocal), so the
    # tolerance is looser than a pure-f32 comparison would allow.
    assert jnp.allclose(y, y_ref, atol=2e-2, rtol=2e-2)
    assert jnp.allclose(attn, attn_ref, atol=1e-2, rtol=1e-2)

    print("KERNEL_OK")
</pallas_src>

<mosaic_0001>
module attributes {stable_mosaic.version = 11 : i64} {
  func.func @encoder_layer_kernel(%arg0: i32, %arg1: memref<1x8x32xf32, #tpu.memory_space<vmem>>, %arg2: memref<32x96xbf16, #tpu.memory_space<vmem>>, %arg3: memref<1x96xf32, #tpu.memory_space<vmem>>, %arg4: memref<32x32xbf16, #tpu.memory_space<vmem>>, %arg5: memref<1x32xf32, #tpu.memory_space<vmem>>, %arg6: memref<32x64xbf16, #tpu.memory_space<vmem>>, %arg7: memref<1x64xf32, #tpu.memory_space<vmem>>, %arg8: memref<64x32xbf16, #tpu.memory_space<vmem>>, %arg9: memref<1x32xf32, #tpu.memory_space<vmem>>, %arg10: memref<1x32xf32, #tpu.memory_space<vmem>>, %arg11: memref<1x32xf32, #tpu.memory_space<vmem>>, %arg12: memref<1x32xf32, #tpu.memory_space<vmem>>, %arg13: memref<1x32xf32, #tpu.memory_space<vmem>>, %arg14: memref<1x8x32xf32, #tpu.memory_space<vmem>>, %arg15: memref<1x8x8xf32, #tpu.memory_space<vmem>>) attributes {dimension_semantics = [#tpu.dimension_semantics<parallel>], iteration_bounds = array<i64: 2>, scalar_prefetch = 0 : i64, scratch_operands = 0 : i64, tpu.core_type = #tpu.core_type<tc>, window_params = [{transform_indices = @transform_0, window_bounds = array<i64: 1, 8, 32>}, {pipeline_mode = #tpu.pipeline_mode<synchronous>, transform_indices = @transform_1, window_bounds = array<i64: 32, 96>}, {pipeline_mode = #tpu.pipeline_mode<synchronous>, transform_indices = @transform_2, window_bounds = array<i64: 1, 96>}, {pipeline_mode = #tpu.pipeline_mode<synchronous>, transform_indices = @transform_3, window_bounds = array<i64: 32, 32>}, {pipeline_mode = #tpu.pipeline_mode<synchronous>, transform_indices = @transform_4, window_bounds = array<i64: 1, 32>}, {pipeline_mode = #tpu.pipeline_mode<synchronous>, transform_indices = @transform_5, window_bounds = array<i64: 32, 64>}, {pipeline_mode = #tpu.pipeline_mode<synchronous>, transform_indices = @transform_6, window_bounds = array<i64: 1, 64>}, {pipeline_mode = #tpu.pipeline_mode<synchronous>, transform_indices = @transform_7, window_bounds = array<i64: 64, 32>}, {pipeline_mode = #tpu.pipeline_mode<synchronous>, transform_indices = @transform_8, window_bounds = array<i64: 1, 32>}, {pipeline_mode = #tpu.pipeline_mode<synchronous>, transform_indices = @transform_9, window_bounds = array<i64: 1, 32>}, {pipeline_mode = #tpu.pipeline_mode<synchronous>, transform_indices = @transform_10, window_bounds = array<i64: 1, 32>}, {pipeline_mode = #tpu.pipeline_mode<synchronous>, transform_indices = @transform_11, window_bounds = array<i64: 1, 32>}, {pipeline_mode = #tpu.pipeline_mode<synchronous>, transform_indices = @transform_12, window_bounds = array<i64: 1, 32>}, {transform_indices = @transform_13, window_bounds = array<i64: 1, 8, 32>}, {transform_indices = @transform_14, window_bounds = array<i64: 1, 8, 8>}]} {
    %c0 = arith.constant 0 : index
    %c0_0 = arith.constant 0 : index
    %c0_1 = arith.constant 0 : index
    %0 = vector.load %arg1[%c0, %c0_0, %c0_1] : memref<1x8x32xf32, #tpu.memory_space<vmem>>, vector<1x8x32xf32>
    %1 = vector.shape_cast %0 : vector<1x8x32xf32> to vector<8x32xf32>
    %2 = arith.truncf %1 : vector<8x32xf32> to vector<8x32xbf16>
    %c0_2 = arith.constant 0 : index
    %c0_3 = arith.constant 0 : index
    %3 = vector.load %arg2[%c0_2, %c0_3] : memref<32x96xbf16, #tpu.memory_space<vmem>>, vector<32x96xbf16>
    %cst = arith.constant dense<0.000000e+00> : vector<8x96xf32>
    %4 = tpu.matmul %2, %3, %cst {dimension_numbers = #tpu.dot_dimension_numbers<[1], [0], [0], [1], [0, 0, 1, 1], [], []>} : vector<8x32xbf16>, vector<32x96xbf16>, vector<8x96xf32> -> vector<8x96xf32>
    %c0_4 = arith.constant 0 : index
    %c0_5 = arith.constant 0 : index
    %5 = vector.load %arg3[%c0_4, %c0_5] : memref<1x96xf32, #tpu.memory_space<vmem>>, vector<1x96xf32>
    %6 = vector.broadcast %5 : vector<1x96xf32> to vector<8x96xf32>
    %7 = arith.addf %4, %6 : vector<8x96xf32>
    %8 = arith.truncf %7 : vector<8x96xf32> to vector<8x96xbf16>
    %9 = vector.extract_strided_slice %8 {offsets = [0, 0], sizes = [8, 8], strides = [1, 1]} : vector<8x96xbf16> to vector<8x8xbf16>
    %10 = vector.extract_strided_slice %8 {offsets = [0, 8], sizes = [8, 8], strides = [1, 1]} : vector<8x96xbf16> to vector<8x8xbf16>
    %11 = vector.extract_strided_slice %8 {offsets = [0, 16], sizes = [8, 8], strides = [1, 1]} : vector<8x96xbf16> to vector<8x8xbf16>
    %12 = vector.extract_strided_slice %8 {offsets = [0, 24], sizes = [8, 8], strides = [1, 1]} : vector<8x96xbf16> to vector<8x8xbf16>
    %13 = vector.shape_cast %9 : vector<8x8xbf16> to vector<1x8x8xbf16>
    %14 = vector.shape_cast %10 : vector<8x8xbf16> to vector<1x8x8xbf16>
    %15 = vector.shape_cast %11 : vector<8x8xbf16> to vector<1x8x8xbf16>
    %16 = vector.shape_cast %12 : vector<8x8xbf16> to vector<1x8x8xbf16>
    %17 = tpu.concatenate %13, %14, %15, %16 in 0 : vector<1x8x8xbf16>, vector<1x8x8xbf16>, vector<1x8x8xbf16>, vector<1x8x8xbf16> -> vector<4x8x8xbf16>
    %18 = vector.extract_strided_slice %8 {offsets = [0, 32], sizes = [8, 8], strides = [1, 1]} : vector<8x96xbf16> to vector<8x8xbf16>
    %19 = vector.extract_strided_slice %8 {offsets = [0, 40], sizes = [8, 8], strides = [1, 1]} : vector<8x96xbf16> to vector<8x8xbf16>
    %20 = vector.extract_strided_slice %8 {offsets = [0, 48], sizes = [8, 8], strides = [1, 1]} : vector<8x96xbf16> to vector<8x8xbf16>
    %21 = vector.extract_strided_slice %8 {offsets = [0, 56], sizes = [8, 8], strides = [1, 1]} : vector<8x96xbf16> to vector<8x8xbf16>
    %22 = vector.shape_cast %18 : vector<8x8xbf16> to vector<1x8x8xbf16>
    %23 = vector.shape_cast %19 : vector<8x8xbf16> to vector<1x8x8xbf16>
    %24 = vector.shape_cast %20 : vector<8x8xbf16> to vector<1x8x8xbf16>
    %25 = vector.shape_cast %21 : vector<8x8xbf16> to vector<1x8x8xbf16>
    %26 = tpu.concatenate %22, %23, %24, %25 in 0 : vector<1x8x8xbf16>, vector<1x8x8xbf16>, vector<1x8x8xbf16>, vector<1x8x8xbf16> -> vector<4x8x8xbf16>
    %27 = vector.extract_strided_slice %8 {offsets = [0, 64], sizes = [8, 8], strides = [1, 1]} : vector<8x96xbf16> to vector<8x8xbf16>
    %28 = vector.extract_strided_slice %8 {offsets = [0, 72], sizes = [8, 8], strides = [1, 1]} : vector<8x96xbf16> to vector<8x8xbf16>
    %29 = vector.extract_strided_slice %8 {offsets = [0, 80], sizes = [8, 8], strides = [1, 1]} : vector<8x96xbf16> to vector<8x8xbf16>
    %30 = vector.extract_strided_slice %8 {offsets = [0, 88], sizes = [8, 8], strides = [1, 1]} : vector<8x96xbf16> to vector<8x8xbf16>
    %31 = vector.shape_cast %27 : vector<8x8xbf16> to vector<1x8x8xbf16>
    %32 = vector.shape_cast %28 : vector<8x8xbf16> to vector<1x8x8xbf16>
    %33 = vector.shape_cast %29 : vector<8x8xbf16> to vector<1x8x8xbf16>
    %34 = vector.shape_cast %30 : vector<8x8xbf16> to vector<1x8x8xbf16>
    %35 = tpu.concatenate %31, %32, %33, %34 in 0 : vector<1x8x8xbf16>, vector<1x8x8xbf16>, vector<1x8x8xbf16>, vector<1x8x8xbf16> -> vector<4x8x8xbf16>
    "tpu.trace_start"() <{level = 10 : i32, message = "hqd,hkd->hqk"}> : () -> ()
    %cst_6 = arith.constant dense<0.000000e+00> : vector<4x8x8xf32>
    %36 = tpu.matmul %17, %26, %cst_6 {dimension_numbers = #tpu.dot_dimension_numbers<[2], [2], [1], [1], [0, 0, 0, 1, 1, 1], [0], [0]>} : vector<4x8x8xbf16>, vector<4x8x8xbf16>, vector<4x8x8xf32> -> vector<4x8x8xf32>
    "tpu.trace_stop"() : () -> ()
    %cst_7 = arith.constant dense<0xFF800000> : vector<4x8xf32>
    %37 = vector.multi_reduction <maximumf>, %36, %cst_7 [2] : vector<4x8x8xf32> to vector<4x8xf32>
    %38 = vector.shape_cast %37 : vector<4x8xf32> to vector<4x8x1xf32>
    %39 = vector.broadcast %38 : vector<4x8x1xf32> to vector<4x8x8xf32>
    %40 = arith.subf %36, %39 : vector<4x8x8xf32>
    %41 = math.exp %40 : vector<4x8x8xf32>
    %cst_8 = arith.constant dense<0.000000e+00> : vector<4x8xf32>
    %42 = vector.multi_reduction <add>, %41, %cst_8 [2] : vector<4x8x8xf32> to vector<4x8xf32>
    %43 = vector.shape_cast %42 : vector<4x8xf32> to vector<4x8x1xf32>
    %44 = tpu.reciprocal %43 {approx = true} : vector<4x8x1xf32> -> vector<4x8x1xf32>
    %45 = vector.broadcast %44 : vector<4x8x1xf32> to vector<4x8x8xf32>
    %46 = arith.mulf %41, %45 : vector<4x8x8xf32>
    %cst_9 = arith.constant dense<0.000000e+00> : vector<8x8xf32>
    %47 = vector.multi_reduction <add>, %46, %cst_9 [0] : vector<4x8x8xf32> to vector<8x8xf32>
    %cst_10 = arith.constant 4.000000e+00 : f32
    %48 = vector.broadcast %cst_10 : f32 to vector<8x8xf32>
    %49 = arith.divf %47, %48 : vector<8x8xf32>
    %c0_11 = arith.constant 0 : index
    %c0_12 = arith.constant 0 : index
    %c0_13 = arith.constant 0 : index
    %50 = vector.load %arg15[%c0_11, %c0_12, %c0_13] : memref<1x8x8xf32, #tpu.memory_space<vmem>>, vector<1x8x8xf32>
    %51 = vector.shape_cast %50 : vector<1x8x8xf32> to vector<8x8xf32>
    %52 = vector.shape_cast %49 : vector<8x8xf32> to vector<1x8x8xf32>
    tpu.vector_store %arg15[%c0_11, %c0_12, %c0_13], %52 {strides = array<i32>} : memref<1x8x8xf32, #tpu.memory_space<vmem>>, vector<1x8x8xf32>,
    %53 = arith.truncf %46 : vector<4x8x8xf32> to vector<4x8x8xbf16>
    "tpu.trace_start"() <{level = 10 : i32, message = "hqk,hkd->hqd"}> : () -> ()
    %cst_14 = arith.constant dense<0.000000e+00> : vector<4x8x8xf32>
    %54 = tpu.matmul %53, %35, %cst_14 {dimension_numbers = #tpu.dot_dimension_numbers<[2], [1], [1], [2], [0, 0, 0, 1, 1, 2], [0], [0]>} : vector<4x8x8xbf16>, vector<4x8x8xbf16>, vector<4x8x8xf32> -> vector<4x8x8xf32>
    "tpu.trace_stop"() : () -> ()
    %55 = vector.extract_strided_slice %54 {offsets = [0, 0, 0], sizes = [1, 8, 8], strides = [1, 1, 1]} : vector<4x8x8xf32> to vector<1x8x8xf32>
    %56 = vector.shape_cast %55 : vector<1x8x8xf32> to vector<8x8xf32>
    %57 = vector.extract_strided_slice %54 {offsets = [1, 0, 0], sizes = [1, 8, 8], strides = [1, 1, 1]} : vector<4x8x8xf32> to vector<1x8x8xf32>
    %58 = vector.shape_cast %57 : vector<1x8x8xf32> to vector<8x8xf32>
    %59 = vector.extract_strided_slice %54 {offsets = [2, 0, 0], sizes = [1, 8, 8], strides = [1, 1, 1]} : vector<4x8x8xf32> to vector<1x8x8xf32>
    %60 = vector.shape_cast %59 : vector<1x8x8xf32> to vector<8x8xf32>
    %61 = vector.extract_strided_slice %54 {offsets = [3, 0, 0], sizes = [1, 8, 8], strides = [1, 1, 1]} : vector<4x8x8xf32> to vector<1x8x8xf32>
    %62 = vector.shape_cast %61 : vector<1x8x8xf32> to vector<8x8xf32>
    %63 = tpu.concatenate %56, %58, %60, %62 in 1 : vector<8x8xf32>, vector<8x8xf32>, vector<8x8xf32>, vector<8x8xf32> -> vector<8x32xf32>
    %64 = arith.truncf %63 : vector<8x32xf32> to vector<8x32xbf16>
    %c0_15 = arith.constant 0 : index
    %c0_16 = arith.constant 0 : index
    %65 = vector.load %arg4[%c0_15, %c0_16] : memref<32x32xbf16, #tpu.memory_space<vmem>>, vector<32x32xbf16>
    %cst_17 = arith.constant dense<0.000000e+00> : vector<8x32xf32>
    %66 = tpu.matmul %64, %65, %cst_17 {dimension_numbers = #tpu.dot_dimension_numbers<[1], [0], [0], [1], [0, 0, 1, 1], [], []>} : vector<8x32xbf16>, vector<32x32xbf16>, vector<8x32xf32> -> vector<8x32xf32>
    %c0_18 = arith.constant 0 : index
    %c0_19 = arith.constant 0 : index
    %67 = vector.load %arg5[%c0_18, %c0_19] : memref<1x32xf32, #tpu.memory_space<vmem>>, vector<1x32xf32>
    %68 = vector.broadcast %67 : vector<1x32xf32> to vector<8x32xf32>
    %69 = arith.addf %66, %68 : vector<8x32xf32>
    %70 = arith.addf %1, %69 : vector<8x32xf32>
    %cst_20 = arith.constant dense<0.000000e+00> : vector<8xf32>
    %71 = vector.multi_reduction <add>, %70, %cst_20 [1] : vector<8x32xf32> to vector<8xf32>
    %72 = vector.shape_cast %71 : vector<8xf32> to vector<8x1xf32>
    %cst_21 = arith.constant 3.200000e+01 : f32
    %73 = vector.broadcast %cst_21 : f32 to vector<8x1xf32>
    %74 = arith.divf %72, %73 : vector<8x1xf32>
    %75 = vector.broadcast %74 : vector<8x1xf32> to vector<8x32xf32>
    %76 = arith.subf %70, %75 : vector<8x32xf32>
    %77 = arith.mulf %76, %76 : vector<8x32xf32>
    %cst_22 = arith.constant dense<0.000000e+00> : vector<8xf32>
    %78 = vector.multi_reduction <add>, %77, %cst_22 [1] : vector<8x32xf32> to vector<8xf32>
    %79 = vector.shape_cast %78 : vector<8xf32> to vector<8x1xf32>
    %cst_23 = arith.constant 3.200000e+01 : f32
    %80 = vector.broadcast %cst_23 : f32 to vector<8x1xf32>
    %81 = arith.divf %79, %80 : vector<8x1xf32>
    %82 = vector.broadcast %74 : vector<8x1xf32> to vector<8x32xf32>
    %83 = arith.subf %70, %82 : vector<8x32xf32>
    %cst_24 = arith.constant 9.99999974E-6 : f32
    %84 = vector.broadcast %cst_24 : f32 to vector<8x1xf32>
    %85 = arith.addf %81, %84 : vector<8x1xf32>
    %86 = math.rsqrt %85 : vector<8x1xf32>
    %87 = vector.broadcast %86 : vector<8x1xf32> to vector<8x32xf32>
    %88 = arith.mulf %83, %87 : vector<8x32xf32>
    %c0_25 = arith.constant 0 : index
    %c0_26 = arith.constant 0 : index
    %89 = vector.load %arg10[%c0_25, %c0_26] : memref<1x32xf32, #tpu.memory_space<vmem>>, vector<1x32xf32>
    %90 = vector.broadcast %89 : vector<1x32xf32> to vector<8x32xf32>
    %91 = arith.mulf %88, %90 : vector<8x32xf32>
    %c0_27 = arith.constant 0 : index
    %c0_28 = arith.constant 0 : index
    %92 = vector.load %arg11[%c0_27, %c0_28] : memref<1x32xf32, #tpu.memory_space<vmem>>, vector<1x32xf32>
    %93 = vector.broadcast %92 : vector<1x32xf32> to vector<8x32xf32>
    %94 = arith.addf %91, %93 : vector<8x32xf32>
    %95 = arith.truncf %94 : vector<8x32xf32> to vector<8x32xbf16>
    %c0_29 = arith.constant 0 : index
    %c0_30 = arith.constant 0 : index
    %96 = vector.load %arg6[%c0_29, %c0_30] : memref<32x64xbf16, #tpu.memory_space<vmem>>, vector<32x64xbf16>
    %cst_31 = arith.constant dense<0.000000e+00> : vector<8x64xf32>
    %97 = tpu.matmul %95, %96, %cst_31 {dimension_numbers = #tpu.dot_dimension_numbers<[1], [0], [0], [1], [0, 0, 1, 1], [], []>} : vector<8x32xbf16>, vector<32x64xbf16>, vector<8x64xf32> -> vector<8x64xf32>
    %c0_32 = arith.constant 0 : index
    %c0_33 = arith.constant 0 : index
    %98 = vector.load %arg7[%c0_32, %c0_33] : memref<1x64xf32, #tpu.memory_space<vmem>>, vector<1x64xf32>
    %99 = vector.broadcast %98 : vector<1x64xf32> to vector<8x64xf32>
    %100 = arith.addf %97, %99 : vector<8x64xf32>
    %cst_34 = arith.constant 0.000000e+00 : f32
    %101 = vector.broadcast %cst_34 : f32 to vector<8x64xf32>
    %102 = arith.maximumf %100, %101 : vector<8x64xf32>
    %103 = arith.truncf %102 : vector<8x64xf32> to vector<8x64xbf16>
    %c0_35 = arith.constant 0 : index
    %c0_36 = arith.constant 0 : index
    %104 = vector.load %arg8[%c0_35, %c0_36] : memref<64x32xbf16, #tpu.memory_space<vmem>>, vector<64x32xbf16>
    %cst_37 = arith.constant dense<0.000000e+00> : vector<8x32xf32>
    %105 = tpu.matmul %103, %104, %cst_37 {dimension_numbers = #tpu.dot_dimension_numbers<[1], [0], [0], [1], [0, 0, 1, 1], [], []>} : vector<8x64xbf16>, vector<64x32xbf16>, vector<8x32xf32> -> vector<8x32xf32>
    %c0_38 = arith.constant 0 : index
    %c0_39 = arith.constant 0 : index
    %106 = vector.load %arg9[%c0_38, %c0_39] : memref<1x32xf32, #tpu.memory_space<vmem>>, vector<1x32xf32>
    %107 = vector.broadcast %106 : vector<1x32xf32> to vector<8x32xf32>
    %108 = arith.addf %105, %107 : vector<8x32xf32>
    %109 = arith.addf %94, %108 : vector<8x32xf32>
    %cst_40 = arith.constant dense<0.000000e+00> : vector<8xf32>
    %110 = vector.multi_reduction <add>, %109, %cst_40 [1] : vector<8x32xf32> to vector<8xf32>
    %111 = vector.shape_cast %110 : vector<8xf32> to vector<8x1xf32>
    %cst_41 = arith.constant 3.200000e+01 : f32
    %112 = vector.broadcast %cst_41 : f32 to vector<8x1xf32>
    %113 = arith.divf %111, %112 : vector<8x1xf32>
    %114 = vector.broadcast %113 : vector<8x1xf32> to vector<8x32xf32>
    %115 = arith.subf %109, %114 : vector<8x32xf32>
    %116 = arith.mulf %115, %115 : vector<8x32xf32>
    %cst_42 = arith.constant dense<0.000000e+00> : vector<8xf32>
    %117 = vector.multi_reduction <add>, %116, %cst_42 [1] : vector<8x32xf32> to vector<8xf32>
    %118 = vector.shape_cast %117 : vector<8xf32> to vector<8x1xf32>
    %cst_43 = arith.constant 3.200000e+01 : f32
    %119 = vector.broadcast %cst_43 : f32 to vector<8x1xf32>
    %120 = arith.divf %118, %119 : vector<8x1xf32>
    %121 = vector.broadcast %113 : vector<8x1xf32> to vector<8x32xf32>
    %122 = arith.subf %109, %121 : vector<8x32xf32>
    %cst_44 = arith.constant 9.99999974E-6 : f32
    %123 = vector.broadcast %cst_44 : f32 to vector<8x1xf32>
    %124 = arith.addf %120, %123 : vector<8x1xf32>
    %125 = math.rsqrt %124 : vector<8x1xf32>
    %126 = vector.broadcast %125 : vector<8x1xf32> to vector<8x32xf32>
    %127 = arith.mulf %122, %126 : vector<8x32xf32>
    %c0_45 = arith.constant 0 : index
    %c0_46 = arith.constant 0 : index
    %128 = vector.load %arg12[%c0_45, %c0_46] : memref<1x32xf32, #tpu.memory_space<vmem>>, vector<1x32xf32>
    %129 = vector.broadcast %128 : vector<1x32xf32> to vector<8x32xf32>
    %130 = arith.mulf %127, %129 : vector<8x32xf32>
    %c0_47 = arith.constant 0 : index
    %c0_48 = arith.constant 0 : index
    %131 = vector.load %arg13[%c0_47, %c0_48] : memref<1x32xf32, #tpu.memory_space<vmem>>, vector<1x32xf32>
    %132 = vector.broadcast %131 : vector<1x32xf32> to vector<8x32xf32>
    %133 = arith.addf %130, %132 : vector<8x32xf32>
    %c0_49 = arith.constant 0 : index
    %c0_50 = arith.constant 0 : index
    %c0_51 = arith.constant 0 : index
    %134 = vector.load %arg14[%c0_49, %c0_50, %c0_51] : memref<1x8x32xf32, #tpu.memory_space<vmem>>, vector<1x8x32xf32>
    %135 = vector.shape_cast %134 : vector<1x8x32xf32> to vector<8x32xf32>
    %136 = vector.shape_cast %133 : vector<8x32xf32> to vector<1x8x32xf32>
    tpu.vector_store %arg14[%c0_49, %c0_50, %c0_51], %136 {strides = array<i32>} : memref<1x8x32xf32, #tpu.memory_space<vmem>>, vector<1x8x32xf32>,
    return
  }
  func.func @transform_0(%arg0: i32) -> (i32, i32, i32) {
    %c0_i32 = arith.constant 0 : i32
    %c0_i32_0 = arith.constant 0 : i32
    %c0_i32_1 = arith.constant 0 : i32
    return %arg0, %c0_i32, %c0_i32_0 : i32, i32, i32
  }
  func.func @transform_1(%arg0: i32) -> (i32, i32) {
    %c0_i32 = arith.constant 0 : i32
    %c0_i32_0 = arith.constant 0 : i32
    %c0_i32_1 = arith.constant 0 : i32
    return %c0_i32, %c0_i32_0 : i32, i32
  }
  func.func @transform_2(%arg0: i32) -> (i32, i32) {
    %c0_i32 = arith.constant 0 : i32
    %c0_i32_0 = arith.constant 0 : i32
    %c0_i32_1 = arith.constant 0 : i32
    return %c0_i32, %c0_i32_0 : i32, i32
  }
  func.func @transform_3(%arg0: i32) -> (i32, i32) {
    %c0_i32 = arith.constant 0 : i32
    %c0_i32_0 = arith.constant 0 : i32
    %c0_i32_1 = arith.constant 0 : i32
    return %c0_i32, %c0_i32_0 : i32, i32
  }
  func.func @transform_4(%arg0: i32) -> (i32, i32) {
    %c0_i32 = arith.constant 0 : i32
    %c0_i32_0 = arith.constant 0 : i32
    %c0_i32_1 = arith.constant 0 : i32
    return %c0_i32, %c0_i32_0 : i32, i32
  }
  func.func @transform_5(%arg0: i32) -> (i32, i32) {
    %c0_i32 = arith.constant 0 : i32
    %c0_i32_0 = arith.constant 0 : i32
    %c0_i32_1 = arith.constant 0 : i32
    return %c0_i32, %c0_i32_0 : i32, i32
  }
  func.func @transform_6(%arg0: i32) -> (i32, i32) {
    %c0_i32 = arith.constant 0 : i32
    %c0_i32_0 = arith.constant 0 : i32
    %c0_i32_1 = arith.constant 0 : i32
    return %c0_i32, %c0_i32_0 : i32, i32
  }
  func.func @transform_7(%arg0: i32) -> (i32, i32) {
    %c0_i32 = arith.constant 0 : i32
    %c0_i32_0 = arith.constant 0 : i32
    %c0_i32_1 = arith.constant 0 : i32
    return %c0_i32, %c0_i32_0 : i32, i32
  }
  func.func @transform_8(%arg0: i32) -> (i32, i32) {
    %c0_i32 = arith.constant 0 : i32
    %c0_i32_0 = arith.constant 0 : i32
    %c0_i32_1 = arith.constant 0 : i32
    return %c0_i32, %c0_i32_0 : i32, i32
  }
  func.func @transform_9(%arg0: i32) -> (i32, i32) {
    %c0_i32 = arith.constant 0 : i32
    %c0_i32_0 = arith.constant 0 : i32
    %c0_i32_1 = arith.constant 0 : i32
    return %c0_i32, %c0_i32_0 : i32, i32
  }
  func.func @transform_10(%arg0: i32) -> (i32, i32) {
    %c0_i32 = arith.constant 0 : i32
    %c0_i32_0 = arith.constant 0 : i32
    %c0_i32_1 = arith.constant 0 : i32
    return %c0_i32, %c0_i32_0 : i32, i32
  }
  func.func @transform_11(%arg0: i32) -> (i32, i32) {
    %c0_i32 = arith.constant 0 : i32
    %c0_i32_0 = arith.constant 0 : i32
    %c0_i32_1 = arith.constant 0 : i32
    return %c0_i32, %c0_i32_0 : i32, i32
  }
  func.func @transform_12(%arg0: i32) -> (i32, i32) {
    %c0_i32 = arith.constant 0 : i32
    %c0_i32_0 = arith.constant 0 : i32
    %c0_i32_1 = arith.constant 0 : i32
    return %c0_i32, %c0_i32_0 : i32, i32
  }
  func.func @transform_13(%arg0: i32) -> (i32, i32, i32) {
    %c0_i32 = arith.constant 0 : i32
    %c0_i32_0 = arith.constant 0 : i32
    %c0_i32_1 = arith.constant 0 : i32
    return %arg0, %c0_i32, %c0_i32_0 : i32, i32, i32
  }
  func.func @transform_14(%arg0: i32) -> (i32, i32, i32) {
    %c0_i32 = arith.constant 0 : i32
    %c0_i32_0 = arith.constant 0 : i32
    %c0_i32_1 = arith.constant 0 : i32
    return %arg0, %c0_i32, %c0_i32_0 : i32, i32, i32
  }
}

module attributes {stable_mosaic.version = 11 : i64} {
  func.func @encoder_layer_kernel(%arg0: i32, %arg1: memref<1x8x32xf32, #tpu.memory_space<vmem>>, %arg2: memref<32x96xbf16, #tpu.memory_space<vmem>>, %arg3: memref<1x96xf32, #tpu.memory_space<vmem>>, %arg4: memref<32x32xbf16, #tpu.memory_space<vmem>>, %arg5: memref<1x32xf32, #tpu.memory_space<vmem>>, %arg6: memref<32x64xbf16, #tpu.memory_space<vmem>>, %arg7: memref<1x64xf32, #tpu.memory_space<vmem>>, %arg8: memref<64x32xbf16, #tpu.memory_space<vmem>>, %arg9: memref<1x32xf32, #tpu.memory_space<vmem>>, %arg10: memref<1x32xf32, #tpu.memory_space<vmem>>, %arg11: memref<1x32xf32, #tpu.memory_space<vmem>>, %arg12: memref<1x32xf32, #tpu.memory_space<vmem>>, %arg13: memref<1x32xf32, #tpu.memory_space<vmem>>, %arg14: memref<1x8x32xf32, #tpu.memory_space<vmem>>, %arg15: memref<1x8x8xf32, #tpu.memory_space<vmem>>) attributes {dimension_semantics = [#tpu.dimension_semantics<parallel>], iteration_bounds = array<i64: 2>, scalar_prefetch = 0 : i64, scratch_operands = 0 : i64, tpu.core_type = #tpu.core_type<tc>, window_params = [{transform_indices = @transform_0, window_bounds = array<i64: 1, 8, 32>}, {pipeline_mode = #tpu.pipeline_mode<synchronous>, transform_indices = @transform_1, window_bounds = array<i64: 32, 96>}, {pipeline_mode = #tpu.pipeline_mode<synchronous>, transform_indices = @transform_2, window_bounds = array<i64: 1, 96>}, {pipeline_mode = #tpu.pipeline_mode<synchronous>, transform_indices = @transform_3, window_bounds = array<i64: 32, 32>}, {pipeline_mode = #tpu.pipeline_mode<synchronous>, transform_indices = @transform_4, window_bounds = array<i64: 1, 32>}, {pipeline_mode = #tpu.pipeline_mode<synchronous>, transform_indices = @transform_5, window_bounds = array<i64: 32, 64>}, {pipeline_mode = #tpu.pipeline_mode<synchronous>, transform_indices = @transform_6, window_bounds = array<i64: 1, 64>}, {pipeline_mode = #tpu.pipeline_mode<synchronous>, transform_indices = @transform_7, window_bounds = array<i64: 64, 32>}, {pipeline_mode = #tpu.pipeline_mode<synchronous>, transform_indices = @transform_8, window_bounds = array<i64: 1, 32>}, {pipeline_mode = #tpu.pipeline_mode<synchronous>, transform_indices = @transform_9, window_bounds = array<i64: 1, 32>}, {pipeline_mode = #tpu.pipeline_mode<synchronous>, transform_indices = @transform_10, window_bounds = array<i64: 1, 32>}, {pipeline_mode = #tpu.pipeline_mode<synchronous>, transform_indices = @transform_11, window_bounds = array<i64: 1, 32>}, {pipeline_mode = #tpu.pipeline_mode<synchronous>, transform_indices = @transform_12, window_bounds = array<i64: 1, 32>}, {transform_indices = @transform_13, window_bounds = array<i64: 1, 8, 32>}, {transform_indices = @transform_14, window_bounds = array<i64: 1, 8, 8>}]} {
    %c0 = arith.constant 0 : index
    %c0_0 = arith.constant 0 : index
    %c0_1 = arith.constant 0 : index
    %0 = vector.load %arg1[%c0, %c0_0, %c0_1] : memref<1x8x32xf32, #tpu.memory_space<vmem>>, vector<1x8x32xf32>
    %1 = vector.shape_cast %0 : vector<1x8x32xf32> to vector<8x32xf32>
    %2 = arith.truncf %1 : vector<8x32xf32> to vector<8x32xbf16>
    %c0_2 = arith.constant 0 : index
    %c0_3 = arith.constant 0 : index
    %3 = vector.load %arg2[%c0_2, %c0_3] : memref<32x96xbf16, #tpu.memory_space<vmem>>, vector<32x96xbf16>
    %cst = arith.constant dense<0.000000e+00> : vector<8x96xf32>
    %4 = tpu.matmul %2, %3, %cst {dimension_numbers = #tpu.dot_dimension_numbers<[1], [0], [0], [1], [0, 0, 1, 1], [], []>} : vector<8x32xbf16>, vector<32x96xbf16>, vector<8x96xf32> -> vector<8x96xf32>
    %c0_4 = arith.constant 0 : index
    %c0_5 = arith.constant 0 : index
    %5 = vector.load %arg3[%c0_4, %c0_5] : memref<1x96xf32, #tpu.memory_space<vmem>>, vector<1x96xf32>
    %6 = vector.broadcast %5 : vector<1x96xf32> to vector<8x96xf32>
    %7 = arith.addf %4, %6 : vector<8x96xf32>
    %8 = arith.truncf %7 : vector<8x96xf32> to vector<8x96xbf16>
    %9 = vector.extract_strided_slice %8 {offsets = [0, 0], sizes = [8, 8], strides = [1, 1]} : vector<8x96xbf16> to vector<8x8xbf16>
    %10 = vector.extract_strided_slice %8 {offsets = [0, 8], sizes = [8, 8], strides = [1, 1]} : vector<8x96xbf16> to vector<8x8xbf16>
    %11 = vector.extract_strided_slice %8 {offsets = [0, 16], sizes = [8, 8], strides = [1, 1]} : vector<8x96xbf16> to vector<8x8xbf16>
    %12 = vector.extract_strided_slice %8 {offsets = [0, 24], sizes = [8, 8], strides = [1, 1]} : vector<8x96xbf16> to vector<8x8xbf16>
    %13 = vector.shape_cast %9 : vector<8x8xbf16> to vector<1x8x8xbf16>
    %14 = vector.shape_cast %10 : vector<8x8xbf16> to vector<1x8x8xbf16>
    %15 = vector.shape_cast %11 : vector<8x8xbf16> to vector<1x8x8xbf16>
    %16 = vector.shape_cast %12 : vector<8x8xbf16> to vector<1x8x8xbf16>
    %17 = tpu.concatenate %13, %14, %15, %16 in 0 : vector<1x8x8xbf16>, vector<1x8x8xbf16>, vector<1x8x8xbf16>, vector<1x8x8xbf16> -> vector<4x8x8xbf16>
    %18 = vector.extract_strided_slice %8 {offsets = [0, 32], sizes = [8, 8], strides = [1, 1]} : vector<8x96xbf16> to vector<8x8xbf16>
    %19 = vector.extract_strided_slice %8 {offsets = [0, 40], sizes = [8, 8], strides = [1, 1]} : vector<8x96xbf16> to vector<8x8xbf16>
    %20 = vector.extract_strided_slice %8 {offsets = [0, 48], sizes = [8, 8], strides = [1, 1]} : vector<8x96xbf16> to vector<8x8xbf16>
    %21 = vector.extract_strided_slice %8 {offsets = [0, 56], sizes = [8, 8], strides = [1, 1]} : vector<8x96xbf16> to vector<8x8xbf16>
    %22 = vector.shape_cast %18 : vector<8x8xbf16> to vector<1x8x8xbf16>
    %23 = vector.shape_cast %19 : vector<8x8xbf16> to vector<1x8x8xbf16>
    %24 = vector.shape_cast %20 : vector<8x8xbf16> to vector<1x8x8xbf16>
    %25 = vector.shape_cast %21 : vector<8x8xbf16> to vector<1x8x8xbf16>
    %26 = tpu.concatenate %22, %23, %24, %25 in 0 : vector<1x8x8xbf16>, vector<1x8x8xbf16>, vector<1x8x8xbf16>, vector<1x8x8xbf16> -> vector<4x8x8xbf16>
    %27 = vector.extract_strided_slice %8 {offsets = [0, 64], sizes = [8, 8], strides = [1, 1]} : vector<8x96xbf16> to vector<8x8xbf16>
    %28 = vector.extract_strided_slice %8 {offsets = [0, 72], sizes = [8, 8], strides = [1, 1]} : vector<8x96xbf16> to vector<8x8xbf16>
    %29 = vector.extract_strided_slice %8 {offsets = [0, 80], sizes = [8, 8], strides = [1, 1]} : vector<8x96xbf16> to vector<8x8xbf16>
    %30 = vector.extract_strided_slice %8 {offsets = [0, 88], sizes = [8, 8], strides = [1, 1]} : vector<8x96xbf16> to vector<8x8xbf16>
    %31 = vector.shape_cast %27 : vector<8x8xbf16> to vector<1x8x8xbf16>
    %32 = vector.shape_cast %28 : vector<8x8xbf16> to vector<1x8x8xbf16>
    %33 = vector.shape_cast %29 : vector<8x8xbf16> to vector<1x8x8xbf16>
    %34 = vector.shape_cast %30 : vector<8x8xbf16> to vector<1x8x8xbf16>
    %35 = tpu.concatenate %31, %32, %33, %34 in 0 : vector<1x8x8xbf16>, vector<1x8x8xbf16>, vector<1x8x8xbf16>, vector<1x8x8xbf16> -> vector<4x8x8xbf16>
    "tpu.trace_start"() <{level = 10 : i32, message = "hqd,hkd->hqk"}> : () -> ()
    %cst_6 = arith.constant dense<0.000000e+00> : vector<4x8x8xf32>
    %36 = tpu.matmul %17, %26, %cst_6 {dimension_numbers = #tpu.dot_dimension_numbers<[2], [2], [1], [1], [0, 0, 0, 1, 1, 1], [0], [0]>} : vector<4x8x8xbf16>, vector<4x8x8xbf16>, vector<4x8x8xf32> -> vector<4x8x8xf32>
    "tpu.trace_stop"() : () -> ()
    %cst_7 = arith.constant dense<0xFF800000> : vector<4x8xf32>
    %37 = vector.multi_reduction <maximumf>, %36, %cst_7 [2] : vector<4x8x8xf32> to vector<4x8xf32>
    %38 = vector.shape_cast %37 : vector<4x8xf32> to vector<4x8x1xf32>
    %39 = vector.broadcast %38 : vector<4x8x1xf32> to vector<4x8x8xf32>
    %40 = arith.subf %36, %39 : vector<4x8x8xf32>
    %41 = math.exp %40 : vector<4x8x8xf32>
    %cst_8 = arith.constant dense<0.000000e+00> : vector<4x8xf32>
    %42 = vector.multi_reduction <add>, %41, %cst_8 [2] : vector<4x8x8xf32> to vector<4x8xf32>
    %43 = vector.shape_cast %42 : vector<4x8xf32> to vector<4x8x1xf32>
    %44 = tpu.reciprocal %43 {approx = true} : vector<4x8x1xf32> -> vector<4x8x1xf32>
    %45 = vector.broadcast %44 : vector<4x8x1xf32> to vector<4x8x8xf32>
    %46 = arith.mulf %41, %45 : vector<4x8x8xf32>
    %cst_9 = arith.constant dense<0.000000e+00> : vector<8x8xf32>
    %47 = vector.multi_reduction <add>, %46, %cst_9 [0] : vector<4x8x8xf32> to vector<8x8xf32>
    %cst_10 = arith.constant 4.000000e+00 : f32
    %48 = vector.broadcast %cst_10 : f32 to vector<8x8xf32>
    %49 = arith.divf %47, %48 : vector<8x8xf32>
    %c0_11 = arith.constant 0 : index
    %c0_12 = arith.constant 0 : index
    %c0_13 = arith.constant 0 : index
    %50 = vector.load %arg15[%c0_11, %c0_12, %c0_13] : memref<1x8x8xf32, #tpu.memory_space<vmem>>, vector<1x8x8xf32>
    %51 = vector.shape_cast %50 : vector<1x8x8xf32> to vector<8x8xf32>
    %52 = vector.shape_cast %49 : vector<8x8xf32> to vector<1x8x8xf32>
    tpu.vector_store %arg15[%c0_11, %c0_12, %c0_13], %52 {strides = array<i32>} : memref<1x8x8xf32, #tpu.memory_space<vmem>>, vector<1x8x8xf32>,
    %53 = arith.truncf %46 : vector<4x8x8xf32> to vector<4x8x8xbf16>
    "tpu.trace_start"() <{level = 10 : i32, message = "hqk,hkd->hqd"}> : () -> ()
    %cst_14 = arith.constant dense<0.000000e+00> : vector<4x8x8xf32>
    %54 = tpu.matmul %53, %35, %cst_14 {dimension_numbers = #tpu.dot_dimension_numbers<[2], [1], [1], [2], [0, 0, 0, 1, 1, 2], [0], [0]>} : vector<4x8x8xbf16>, vector<4x8x8xbf16>, vector<4x8x8xf32> -> vector<4x8x8xf32>
    "tpu.trace_stop"() : () -> ()
    %55 = vector.extract_strided_slice %54 {offsets = [0, 0, 0], sizes = [1, 8, 8], strides = [1, 1, 1]} : vector<4x8x8xf32> to vector<1x8x8xf32>
    %56 = vector.shape_cast %55 : vector<1x8x8xf32> to vector<8x8xf32>
    %57 = vector.extract_strided_slice %54 {offsets = [1, 0, 0], sizes = [1, 8, 8], strides = [1, 1, 1]} : vector<4x8x8xf32> to vector<1x8x8xf32>
    %58 = vector.shape_cast %57 : vector<1x8x8xf32> to vector<8x8xf32>
    %59 = vector.extract_strided_slice %54 {offsets = [2, 0, 0], sizes = [1, 8, 8], strides = [1, 1, 1]} : vector<4x8x8xf32> to vector<1x8x8xf32>
    %60 = vector.shape_cast %59 : vector<1x8x8xf32> to vector<8x8xf32>
    %61 = vector.extract_strided_slice %54 {offsets = [3, 0, 0], sizes = [1, 8, 8], strides = [1, 1, 1]} : vector<4x8x8xf32> to vector<1x8x8xf32>
    %62 = vector.shape_cast %61 : vector<1x8x8xf32> to vector<8x8xf32>
    %63 = tpu.concatenate %56, %58, %60, %62 in 1 : vector<8x8xf32>, vector<8x8xf32>, vector<8x8xf32>, vector<8x8xf32> -> vector<8x32xf32>
    %64 = arith.truncf %63 : vector<8x32xf32> to vector<8x32xbf16>
    %c0_15 = arith.constant 0 : index
    %c0_16 = arith.constant 0 : index
    %65 = vector.load %arg4[%c0_15, %c0_16] : memref<32x32xbf16, #tpu.memory_space<vmem>>, vector<32x32xbf16>
    %cst_17 = arith.constant dense<0.000000e+00> : vector<8x32xf32>
    %66 = tpu.matmul %64, %65, %cst_17 {dimension_numbers = #tpu.dot_dimension_numbers<[1], [0], [0], [1], [0, 0, 1, 1], [], []>} : vector<8x32xbf16>, vector<32x32xbf16>, vector<8x32xf32> -> vector<8x32xf32>
    %c0_18 = arith.constant 0 : index
    %c0_19 = arith.constant 0 : index
    %67 = vector.load %arg5[%c0_18, %c0_19] : memref<1x32xf32, #tpu.memory_space<vmem>>, vector<1x32xf32>
    %68 = vector.broadcast %67 : vector<1x32xf32> to vector<8x32xf32>
    %69 = arith.addf %66, %68 : vector<8x32xf32>
    %70 = arith.addf %1, %69 : vector<8x32xf32>
    %cst_20 = arith.constant dense<0.000000e+00> : vector<8xf32>
    %71 = vector.multi_reduction <add>, %70, %cst_20 [1] : vector<8x32xf32> to vector<8xf32>
    %72 = vector.shape_cast %71 : vector<8xf32> to vector<8x1xf32>
    %cst_21 = arith.constant 3.200000e+01 : f32
    %73 = vector.broadcast %cst_21 : f32 to vector<8x1xf32>
    %74 = arith.divf %72, %73 : vector<8x1xf32>
    %75 = vector.broadcast %74 : vector<8x1xf32> to vector<8x32xf32>
    %76 = arith.subf %70, %75 : vector<8x32xf32>
    %77 = arith.mulf %76, %76 : vector<8x32xf32>
    %cst_22 = arith.constant dense<0.000000e+00> : vector<8xf32>
    %78 = vector.multi_reduction <add>, %77, %cst_22 [1] : vector<8x32xf32> to vector<8xf32>
    %79 = vector.shape_cast %78 : vector<8xf32> to vector<8x1xf32>
    %cst_23 = arith.constant 3.200000e+01 : f32
    %80 = vector.broadcast %cst_23 : f32 to vector<8x1xf32>
    %81 = arith.divf %79, %80 : vector<8x1xf32>
    %82 = vector.broadcast %74 : vector<8x1xf32> to vector<8x32xf32>
    %83 = arith.subf %70, %82 : vector<8x32xf32>
    %cst_24 = arith.constant 9.99999974E-6 : f32
    %84 = vector.broadcast %cst_24 : f32 to vector<8x1xf32>
    %85 = arith.addf %81, %84 : vector<8x1xf32>
    %86 = math.rsqrt %85 : vector<8x1xf32>
    %87 = vector.broadcast %86 : vector<8x1xf32> to vector<8x32xf32>
    %88 = arith.mulf %83, %87 : vector<8x32xf32>
    %c0_25 = arith.constant 0 : index
    %c0_26 = arith.constant 0 : index
    %89 = vector.load %arg10[%c0_25, %c0_26] : memref<1x32xf32, #tpu.memory_space<vmem>>, vector<1x32xf32>
    %90 = vector.broadcast %89 : vector<1x32xf32> to vector<8x32xf32>
    %91 = arith.mulf %88, %90 : vector<8x32xf32>
    %c0_27 = arith.constant 0 : index
    %c0_28 = arith.constant 0 : index
    %92 = vector.load %arg11[%c0_27, %c0_28] : memref<1x32xf32, #tpu.memory_space<vmem>>, vector<1x32xf32>
    %93 = vector.broadcast %92 : vector<1x32xf32> to vector<8x32xf32>
    %94 = arith.addf %91, %93 : vector<8x32xf32>
    %95 = arith.truncf %94 : vector<8x32xf32> to vector<8x32xbf16>
    %c0_29 = arith.constant 0 : index
    %c0_30 = arith.constant 0 : index
    %96 = vector.load %arg6[%c0_29, %c0_30] : memref<32x64xbf16, #tpu.memory_space<vmem>>, vector<32x64xbf16>
    %cst_31 = arith.constant dense<0.000000e+00> : vector<8x64xf32>
    %97 = tpu.matmul %95, %96, %cst_31 {dimension_numbers = #tpu.dot_dimension_numbers<[1], [0], [0], [1], [0, 0, 1, 1], [], []>} : vector<8x32xbf16>, vector<32x64xbf16>, vector<8x64xf32> -> vector<8x64xf32>
    %c0_32 = arith.constant 0 : index
    %c0_33 = arith.constant 0 : index
    %98 = vector.load %arg7[%c0_32, %c0_33] : memref<1x64xf32, #tpu.memory_space<vmem>>, vector<1x64xf32>
    %99 = vector.broadcast %98 : vector<1x64xf32> to vector<8x64xf32>
    %100 = arith.addf %97, %99 : vector<8x64xf32>
    %cst_34 = arith.constant 0.000000e+00 : f32
    %101 = vector.broadcast %cst_34 : f32 to vector<8x64xf32>
    %102 = arith.maximumf %100, %101 : vector<8x64xf32>
    %103 = arith.truncf %102 : vector<8x64xf32> to vector<8x64xbf16>
    %c0_35 = arith.constant 0 : index
    %c0_36 = arith.constant 0 : index
    %104 = vector.load %arg8[%c0_35, %c0_36] : memref<64x32xbf16, #tpu.memory_space<vmem>>, vector<64x32xbf16>
    %cst_37 = arith.constant dense<0.000000e+00> : vector<8x32xf32>
    %105 = tpu.matmul %103, %104, %cst_37 {dimension_numbers = #tpu.dot_dimension_numbers<[1], [0], [0], [1], [0, 0, 1, 1], [], []>} : vector<8x64xbf16>, vector<64x32xbf16>, vector<8x32xf32> -> vector<8x32xf32>
    %c0_38 = arith.constant 0 : index
    %c0_39 = arith.constant 0 : index
    %106 = vector.load %arg9[%c0_38, %c0_39] : memref<1x32xf32, #tpu.memory_space<vmem>>, vector<1x32xf32>
    %107 = vector.broadcast %106 : vector<1x32xf32> to vector<8x32xf32>
    %108 = arith.addf %105, %107 : vector<8x32xf32>
    %109 = arith.addf %94, %108 : vector<8x32xf32>
    %cst_40 = arith.constant dense<0.000000e+00> : vector<8xf32>
    %110 = vector.multi_reduction <add>, %109, %cst_40 [1] : vector<8x32xf32> to vector<8xf32>
    %111 = vector.shape_cast %110 : vector<8xf32> to vector<8x1xf32>
    %cst_41 = arith.constant 3.200000e+01 : f32
    %112 = vector.broadcast %cst_41 : f32 to vector<8x1xf32>
    %113 = arith.divf %111, %112 : vector<8x1xf32>
    %114 = vector.broadcast %113 : vector<8x1xf32> to vector<8x32xf32>
    %115 = arith.subf %109, %114 : vector<8x32xf32>
    %116 = arith.mulf %115, %115 : vector<8x32xf32>
    %cst_42 = arith.constant dense<0.000000e+00> : vector<8xf32>
    %117 = vector.multi_reduction <add>, %116, %cst_42 [1] : vector<8x32xf32> to vector<8xf32>
    %118 = vector.shape_cast %117 : vector<8xf32> to vector<8x1xf32>
    %cst_43 = arith.constant 3.200000e+01 : f32
    %119 = vector.broadcast %cst_43 : f32 to vector<8x1xf32>
    %120 = arith.divf %118, %119 : vector<8x1xf32>
    %121 = vector.broadcast %113 : vector<8x1xf32> to vector<8x32xf32>
    %122 = arith.subf %109, %121 : vector<8x32xf32>
    %cst_44 = arith.constant 9.99999974E-6 : f32
    %123 = vector.broadcast %cst_44 : f32 to vector<8x1xf32>
    %124 = arith.addf %120, %123 : vector<8x1xf32>
    %125 = math.rsqrt %124 : vector<8x1xf32>
    %126 = vector.broadcast %125 : vector<8x1xf32> to vector<8x32xf32>
    %127 = arith.mulf %122, %126 : vector<8x32xf32>
    %c0_45 = arith.constant 0 : index
    %c0_46 = arith.constant 0 : index
    %128 = vector.load %arg12[%c0_45, %c0_46] : memref<1x32xf32, #tpu.memory_space<vmem>>, vector<1x32xf32>
    %129 = vector.broadcast %128 : vector<1x32xf32> to vector<8x32xf32>
    %130 = arith.mulf %127, %129 : vector<8x32xf32>
    %c0_47 = arith.constant 0 : index
    %c0_48 = arith.constant 0 : index
    %131 = vector.load %arg13[%c0_47, %c0_48] : memref<1x32xf32, #tpu.memory_space<vmem>>, vector<1x32xf32>
    %132 = vector.broadcast %131 : vector<1x32xf32> to vector<8x32xf32>
    %133 = arith.addf %130, %132 : vector<8x32xf32>
    %c0_49 = arith.constant 0 : index
    %c0_50 = arith.constant 0 : index
    %c0_51 = arith.constant 0 : index
    %134 = vector.load %arg14[%c0_49, %c0_50, %c0_51] : memref<1x8x32xf32, #tpu.memory_space<vmem>>, vector<1x8x32xf32>
    %135 = vector.shape_cast %134 : vector<1x8x32xf32> to vector<8x32xf32>
    %136 = vector.shape_cast %133 : vector<8x32xf32> to vector<1x8x32xf32>
    tpu.vector_store %arg14[%c0_49, %c0_50, %c0_51], %136 {strides = array<i32>} : memref<1x8x32xf32, #tpu.memory_space<vmem>>, vector<1x8x32xf32>,
    return
  }
  func.func @transform_0(%arg0: i32) -> (i32, i32, i32) {
    %c0_i32 = arith.constant 0 : i32
    %c0_i32_0 = arith.constant 0 : i32
    %c0_i32_1 = arith.constant 0 : i32
    return %arg0, %c0_i32, %c0_i32_0 : i32, i32, i32
  }
  func.func @transform_1(%arg0: i32) -> (i32, i32) {
    %c0_i32 = arith.constant 0 : i32
    %c0_i32_0 = arith.constant 0 : i32
    %c0_i32_1 = arith.constant 0 : i32
    return %c0_i32, %c0_i32_0 : i32, i32
  }
  func.func @transform_2(%arg0: i32) -> (i32, i32) {
    %c0_i32 = arith.constant 0 : i32
    %c0_i32_0 = arith.constant 0 : i32
    %c0_i32_1 = arith.constant 0 : i32
    return %c0_i32, %c0_i32_0 : i32, i32
  }
  func.func @transform_3(%arg0: i32) -> (i32, i32) {
    %c0_i32 = arith.constant 0 : i32
    %c0_i32_0 = arith.constant 0 : i32
    %c0_i32_1 = arith.constant 0 : i32
    return %c0_i32, %c0_i32_0 : i32, i32
  }
  func.func @transform_4(%arg0: i32) -> (i32, i32) {
    %c0_i32 = arith.constant 0 : i32
    %c0_i32_0 = arith.constant 0 : i32
    %c0_i32_1 = arith.constant 0 : i32
    return %c0_i32, %c0_i32_0 : i32, i32
  }
  func.func @transform_5(%arg0: i32) -> (i32, i32) {
    %c0_i32 = arith.constant 0 : i32
    %c0_i32_0 = arith.constant 0 : i32
    %c0_i32_1 = arith.constant 0 : i32
    return %c0_i32, %c0_i32_0 : i32, i32
  }
  func.func @transform_6(%arg0: i32) -> (i32, i32) {
    %c0_i32 = arith.constant 0 : i32
    %c0_i32_0 = arith.constant 0 : i32
    %c0_i32_1 = arith.constant 0 : i32
    return %c0_i32, %c0_i32_0 : i32, i32
  }
  func.func @transform_7(%arg0: i32) -> (i32, i32) {
    %c0_i32 = arith.constant 0 : i32
    %c0_i32_0 = arith.constant 0 : i32
    %c0_i32_1 = arith.constant 0 : i32
    return %c0_i32, %c0_i32_0 : i32, i32
  }
  func.func @transform_8(%arg0: i32) -> (i32, i32) {
    %c0_i32 = arith.constant 0 : i32
    %c0_i32_0 = arith.constant 0 : i32
    %c0_i32_1 = arith.constant 0 : i32
    return %c0_i32, %c0_i32_0 : i32, i32
  }
  func.func @transform_9(%arg0: i32) -> (i32, i32) {
    %c0_i32 = arith.constant 0 : i32
    %c0_i32_0 = arith.constant 0 : i32
    %c0_i32_1 = arith.constant 0 : i32
    return %c0_i32, %c0_i32_0 : i32, i32
  }
  func.func @transform_10(%arg0: i32) -> (i32, i32) {
    %c0_i32 = arith.constant 0 : i32
    %c0_i32_0 = arith.constant 0 : i32
    %c0_i32_1 = arith.constant 0 : i32
    return %c0_i32, %c0_i32_0 : i32, i32
  }
  func.func @transform_11(%arg0: i32) -> (i32, i32) {
    %c0_i32 = arith.constant 0 : i32
    %c0_i32_0 = arith.constant 0 : i32
    %c0_i32_1 = arith.constant 0 : i32
    return %c0_i32, %c0_i32_0 : i32, i32
  }
  func.func @transform_12(%arg0: i32) -> (i32, i32) {
    %c0_i32 = arith.constant 0 : i32
    %c0_i32_0 = arith.constant 0 : i32
    %c0_i32_1 = arith.constant 0 : i32
    return %c0_i32, %c0_i32_0 : i32, i32
  }
  func.func @transform_13(%arg0: i32) -> (i32, i32, i32) {
    %c0_i32 = arith.constant 0 : i32
    %c0_i32_0 = arith.constant 0 : i32
    %c0_i32_1 = arith.constant 0 : i32
    return %arg0, %c0_i32, %c0_i32_0 : i32, i32, i32
  }
  func.func @transform_14(%arg0: i32) -> (i32, i32, i32) {
    %c0_i32 = arith.constant 0 : i32
    %c0_i32_0 = arith.constant 0 : i32
    %c0_i32_1 = arith.constant 0 : i32
    return %arg0, %c0_i32, %c0_i32_0 : i32, i32, i32
  }
}

</mosaic_0001>

<llo_original>
// kernel: tpu_custom_call.1
$region0: #{tpu_custom_call.1}
  #allocation0 [shape = 'u32[]', space=smem, size = 0x4, offset = 0x4, fixed_abs, tag = 'smem constant byte address 0x4 - core index']
  #allocation1 [shape = 'u32[144,128]{1,0:T(1,128)}', space=vmem, size = 0x12000, scoped, tag = 'internal scratch']
  %s0 = inlined_call_operand.vmem [shape: f32[2,8,32], index: 0, kind: input, shape index: {}]
  %s1 = inlined_call_operand.vmem [shape: bf16[32,96], index: 1, kind: input, shape index: {}]
  %s2 = inlined_call_operand.vmem [shape: f32[1,96], index: 2, kind: input, shape index: {}]
  %s3 = inlined_call_operand.vmem [shape: bf16[32,32], index: 3, kind: input, shape index: {}]
  %s4 = inlined_call_operand.vmem [shape: f32[1,32], index: 4, kind: input, shape index: {}]
  %s5 = inlined_call_operand.hbm [shape: bf16[32,64], index: 5, kind: input, shape index: {}]
  %s6 = inlined_call_operand.vmem [shape: f32[1,64], index: 6, kind: input, shape index: {}]
  %s7 = inlined_call_operand.vmem [shape: bf16[64,32], index: 7, kind: input, shape index: {}]
  %s8 = inlined_call_operand.vmem [shape: f32[1,32], index: 8, kind: input, shape index: {}]
  %s9 = inlined_call_operand.vmem [shape: f32[1,32], index: 9, kind: input, shape index: {}]
  %s10 = inlined_call_operand.vmem [shape: f32[1,32], index: 10, kind: input, shape index: {}]
  %s11 = inlined_call_operand.vmem [shape: f32[1,32], index: 11, kind: input, shape index: {}]
  %s12 = inlined_call_operand.vmem [shape: f32[1,32], index: 12, kind: input, shape index: {}]
  %s13 = inlined_call_operand.hbm [shape: f32[2,8,32], index: 13, kind: output, shape index: {0}]
  %s14 = inlined_call_operand.hbm [shape: f32[2,8,8], index: 14, kind: output, shape index: {1}]
  %15 = xla_tuple %s13, %s14
  %s16 = sld [smem:[#allocation0]]
  $region97: #{tpu_custom_call.1} parent=0
    _
  %s18 = ssub.s32 1, %s16
  %s19 = scalar_select 0, %s18, %s16
  $region1: #{tpu_custom_call.1} parent=0
    #allocation2 [shape = 'u8[8192]{0}', space=vmem, size = 0x2000, scoped, tag = 'input window, operand 5, single buffered']
    #allocation3 [shape = 's32[2]{0}', space=sflag, size = 0x8, scoped, tag = 'scoped memory for tpu_custom_call.1']
    #allocation4 [shape = 's32[2]{0}', space=sflag, size = 0x8, scoped, tag = 'scoped memory for tpu_custom_call.1']
    #allocation5 [shape = 'u8[8192]{0}', space=vmem, size = 0x2000, scoped, tag = 'output window, operand 0']
    #allocation6 [shape = 'u8[8192]{0}', space=vmem, size = 0x2000, scoped, tag = 'output window, operand 1']
    #allocation7 [shape = 's32[2]{0}', space=sflag, size = 0x8, scoped, tag = 'scoped memory for tpu_custom_call.1']
    %20 = vsyncpa [#allocation3], 0
    %21 = vsyncpa [#allocation4], 0
    %s22 = scalar_lea.sflag [#allocation4], 1
    %23 = vsyncpa %s22, 0
    %24 = vsyncpa [#allocation7], 0
    %s25 = scalar_lea.sflag [#allocation7], 1
    %26 = vsyncpa %s25, 0
    loop: start=0, step=1, limit=4
    $region2: #{tpu_custom_call.1} parent=1 // loop_pre_header
      _
    $region3: #{tpu_custom_call.1} parent=1 // loop_header
      %s28 = sphi 0, %s32
      %p29 = scmp.ge.s32.totalorder %s28, 4
      %s38 = sphi 0, %s40
      %s41 = sphi 0, %s38
      %s42 = sphi 0, %s41
      %s58 = sphi 0, %s42
      %s62 = sphi 0, %s62
      %s64 = sphi 0, %s62
      %s65 = sphi 0, %s64
      %s79 = sphi 0, %s65
      %s83 = sphi 0, %s83
      %s85 = sphi 0, %s83
      %s86 = sphi 0, %s85
      %s100 = sphi 0, %s86
      %s104 = sphi 0, %s104
      %s106 = sphi 0, %s104
      %s107 = sphi 0, %s106
      %s121 = sphi 0, %s107
      %s125 = sphi 0, %s125
      %s127 = sphi 0, %s125
      %s128 = sphi 0, %s127
      %s142 = sphi 0, %s128
      %s146 = sphi 0, %s146
      %s148 = sphi 0, %s146
      %s149 = sphi 0, %s148
      %s163 = sphi 0, %s149
      %s167 = sphi 0, %s167
      %s169 = sphi 0, %s167
      %s170 = sphi 0, %s169
      %s184 = sphi 0, %s170
      %s188 = sphi 0, %s188
      %s190 = sphi 0, %s188
      %s191 = sphi 0, %s190
      %s205 = sphi 0, %s191
      %s209 = sphi 0, %s209
      %s211 = sphi 0, %s209
      %s212 = sphi 0, %s211
      %s226 = sphi 0, %s212
      %s230 = sphi 0, %s230
      %s232 = sphi 0, %s230
      %s233 = sphi 0, %s232
      %s247 = sphi 0, %s233
      %s251 = sphi 0, %s251
      %s253 = sphi 0, %s251
      %s254 = sphi 0, %s253
      %s268 = sphi 0, %s254
      %s272 = sphi 0, %s272
      %s274 = sphi 0, %s272
      %s275 = sphi 0, %s274
      %s289 = sphi 0, %s275
      %s293 = sphi 0, %s293
      %s295 = sphi 0, %s293
      %s296 = sphi 0, %s295
      %s310 = sphi 0, %s296
      %s316 = sphi 0, %s318
      %s319 = sphi 0, %s316
      %s320 = sphi 0, %s319
      %s336 = sphi 0, %s320
      %s342 = sphi 0, %s344
      %s345 = sphi 0, %s342
      %s346 = sphi 0, %s345
      %s362 = sphi 0, %s346
    $region4: #{tpu_custom_call.1} parent=1 // loop_header_branch
      %31 = sbr.rel (%p29) target = $region8
    $region5: #{tpu_custom_call.1} parent=1 // loop_body
      %s33 = ssub.s32 %s28, 1
      %s34 = ssub.s32 %s28, 2
      %s35 = sadd.s32 %s28, 1
      %s36 = ssub.s32 %s28, %s35
      %p37 = scmp.eq.s32.totalorder %s36, 0
      %s39 = sadd.s32 %s38, 1
      %s40 = scalar_select %p37, %s38, %s39
      %p43 = pneg %p37
      %p44 = scmp.eq.s32.totalorder %s28, 1
      %p45 = por %p43, %p44
      %p46 = scmp.ne.s32.totalorder %s38, %s41
      %p47 = scmp.eq.s32.totalorder %s28, 0
      %p48 = por %p46, %p47
      %p49 = scmp.ne.s32.totalorder %s38, %s41
      %p50 = scmp.eq.s32.totalorder %s33, 1
      %p51 = por %p49, %p50
      %p52 = scmp.ne.s32.totalorder %s41, %s42
      %p53 = scmp.eq.s32.totalorder %s33, 0
      %p54 = por %p52, %p53
      %p55 = scmp.ne.s32.totalorder %s41, %s42
      %p56 = scmp.eq.s32.totalorder %s34, 1
      %p57 = por %p55, %p56
      %p59 = scmp.ne.s32.totalorder %s42, %s58
      %p60 = scmp.eq.s32.totalorder %s34, 0
      %p61 = por %p59, %p60
      %s63 = sadd.s32 %s62, 1
      %p66 = scmp.eq.s32.totalorder %s28, 1
      %p67 = scmp.ne.s32.totalorder %s62, %s64
      %p68 = scmp.eq.s32.totalorder %s28, 0
      %p69 = por %p67, %p68
      %p70 = scmp.ne.s32.totalorder %s62, %s64
      %p71 = scmp.eq.s32.totalorder %s33, 1
      %p72 = por %p70, %p71
      %p73 = scmp.ne.s32.totalorder %s64, %s65
      %p74 = scmp.eq.s32.totalorder %s33, 0
      %p75 = por %p73, %p74
      %p76 = scmp.ne.s32.totalorder %s64, %s65
      %p77 = scmp.eq.s32.totalorder %s34, 1
      %p78 = por %p76, %p77
      %p80 = scmp.ne.s32.totalorder %s65, %s79
      %p81 = scmp.eq.s32.totalorder %s34, 0
      %p82 = por %p80, %p81
      %s84 = sadd.s32 %s83, 1
      %p87 = scmp.eq.s32.totalorder %s28, 1
      %p88 = scmp.ne.s32.totalorder %s83, %s85
      %p89 = scmp.eq.s32.totalorder %s28, 0
      %p90 = por %p88, %p89
      %p91 = scmp.ne.s32.totalorder %s83, %s85
      %p92 = scmp.eq.s32.totalorder %s33, 1
      %p93 = por %p91, %p92
      %p94 = scmp.ne.s32.totalorder %s85, %s86
      %p95 = scmp.eq.s32.totalorder %s33, 0
      %p96 = por %p94, %p95
      %p97 = scmp.ne.s32.totalorder %s85, %s86
      %p98 = scmp.eq.s32.totalorder %s34, 1
      %p99 = por %p97, %p98
      %p101 = scmp.ne.s32.totalorder %s86, %s100
      %p102 = scmp.eq.s32.totalorder %s34, 0
      %p103 = por %p101, %p102
      %s105 = sadd.s32 %s104, 1
      %p108 = scmp.eq.s32.totalorder %s28, 1
      %p109 = scmp.ne.s32.totalorder %s104, %s106
      %p110 = scmp.eq.s32.totalorder %s28, 0
      %p111 = por %p109, %p110
      %p112 = scmp.ne.s32.totalorder %s104, %s106
      %p113 = scmp.eq.s32.totalorder %s33, 1
      %p114 = por %p112, %p113
      %p115 = scmp.ne.s32.totalorder %s106, %s107
      %p116 = scmp.eq.s32.totalorder %s33, 0
      %p117 = por %p115, %p116
      %p118 = scmp.ne.s32.totalorder %s106, %s107
      %p119 = scmp.eq.s32.totalorder %s34, 1
      %p120 = por %p118, %p119
      %p122 = scmp.ne.s32.totalorder %s107, %s121
      %p123 = scmp.eq.s32.totalorder %s34, 0
      %p124 = por %p122, %p123
      %s126 = sadd.s32 %s125, 1
      %p129 = scmp.eq.s32.totalorder %s28, 1
      %p130 = scmp.ne.s32.totalorder %s125, %s127
      %p131 = scmp.eq.s32.totalorder %s28, 0
      %p132 = por %p130, %p131
      %p133 = scmp.ne.s32.totalorder %s125, %s127
      %p134 = scmp.eq.s32.totalorder %s33, 1
      %p135 = por %p133, %p134
      %p136 = scmp.ne.s32.totalorder %s127, %s128
      %p137 = scmp.eq.s32.totalorder %s33, 0
      %p138 = por %p136, %p137
      %p139 = scmp.ne.s32.totalorder %s127, %s128
      %p140 = scmp.eq.s32.totalorder %s34, 1
      %p141 = por %p139, %p140
      %p143 = scmp.ne.s32.totalorder %s128, %s142
      %p144 = scmp.eq.s32.totalorder %s34, 0
      %p145 = por %p143, %p144
      %s147 = sadd.s32 %s146, 1
      %p150 = scmp.eq.s32.totalorder %s28, 1
      %p151 = scmp.ne.s32.totalorder %s146, %s148
      %p152 = scmp.eq.s32.totalorder %s28, 0
      %p153 = por %p151, %p152
      %p154 = scmp.ne.s32.totalorder %s146, %s148
      %p155 = scmp.eq.s32.totalorder %s33, 1
      %p156 = por %p154, %p155
      %p157 = scmp.ne.s32.totalorder %s148, %s149
      %p158 = scmp.eq.s32.totalorder %s33, 0
      %p159 = por %p157, %p158
      %p160 = scmp.ne.s32.totalorder %s148, %s149
      %p161 = scmp.eq.s32.totalorder %s34, 1
      %p162 = por %p160, %p161
      %p164 = scmp.ne.s32.totalorder %s149, %s163
      %p165 = scmp.eq.s32.totalorder %s34, 0
      %p166 = por %p164, %p165
      %s168 = sadd.s32 %s167, 1
      %p171 = scmp.eq.s32.totalorder %s28, 1
      %p172 = scmp.ne.s32.totalorder %s167, %s169
      %p173 = scmp.eq.s32.totalorder %s28, 0
      %p174 = por %p172, %p173
      %p175 = scmp.ne.s32.totalorder %s167, %s169
      %p176 = scmp.eq.s32.totalorder %s33, 1
      %p177 = por %p175, %p176
      %p178 = scmp.ne.s32.totalorder %s169, %s170
      %p179 = scmp.eq.s32.totalorder %s33, 0
      %p180 = por %p178, %p179
      %p181 = scmp.ne.s32.totalorder %s169, %s170
      %p182 = scmp.eq.s32.totalorder %s34, 1
      %p183 = por %p181, %p182
      %p185 = scmp.ne.s32.totalorder %s170, %s184
      %p186 = scmp.eq.s32.totalorder %s34, 0
      %p187 = por %p185, %p186
      %s189 = sadd.s32 %s188, 1
      %p192 = scmp.eq.s32.totalorder %s28, 1
      %p193 = scmp.ne.s32.totalorder %s188, %s190
      %p194 = scmp.eq.s32.totalorder %s28, 0
      %p195 = por %p193, %p194
      %p196 = scmp.ne.s32.totalorder %s188, %s190
      %p197 = scmp.eq.s32.totalorder %s33, 1
      %p198 = por %p196, %p197
      %p199 = scmp.ne.s32.totalorder %s190, %s191
      %p200 = scmp.eq.s32.totalorder %s33, 0
      %p201 = por %p199, %p200
      %p202 = scmp.ne.s32.totalorder %s190, %s191
      %p203 = scmp.eq.s32.totalorder %s34, 1
      %p204 = por %p202, %p203
      %p206 = scmp.ne.s32.totalorder %s191, %s205
      %p207 = scmp.eq.s32.totalorder %s34, 0
      %p208 = por %p206, %p207
      %s210 = sadd.s32 %s209, 1
      %p213 = scmp.eq.s32.totalorder %s28, 1
      %p214 = scmp.ne.s32.totalorder %s209, %s211
      %p215 = scmp.eq.s32.totalorder %s28, 0
      %p216 = por %p214, %p215
      %p217 = scmp.ne.s32.totalorder %s209, %s211
      %p218 = scmp.eq.s32.totalorder %s33, 1
      %p219 = por %p217, %p218
      %p220 = scmp.ne.s32.totalorder %s211, %s212
      %p221 = scmp.eq.s32.totalorder %s33, 0
      %p222 = por %p220, %p221
      %p223 = scmp.ne.s32.totalorder %s211, %s212
      %p224 = scmp.eq.s32.totalorder %s34, 1
      %p225 = por %p223, %p224
      %p227 = scmp.ne.s32.totalorder %s212, %s226
      %p228 = scmp.eq.s32.totalorder %s34, 0
      %p229 = por %p227, %p228
      %s231 = sadd.s32 %s230, 1
      %p234 = scmp.eq.s32.totalorder %s28, 1
      %p235 = scmp.ne.s32.totalorder %s230, %s232
      %p236 = scmp.eq.s32.totalorder %s28, 0
      %p237 = por %p235, %p236
      %p238 = scmp.ne.s32.totalorder %s230, %s232
      %p239 = scmp.eq.s32.totalorder %s33, 1
      %p240 = por %p238, %p239
      %p241 = scmp.ne.s32.totalorder %s232, %s233
      %p242 = scmp.eq.s32.totalorder %s33, 0
      %p243 = por %p241, %p242
      %p244 = scmp.ne.s32.totalorder %s232, %s233
      %p245 = scmp.eq.s32.totalorder %s34, 1
      %p246 = por %p244, %p245
      %p248 = scmp.ne.s32.totalorder %s233, %s247
      %p249 = scmp.eq.s32.totalorder %s34, 0
      %p250 = por %p248, %p249
      %s252 = sadd.s32 %s251, 1
      %p255 = scmp.eq.s32.totalorder %s28, 1
      %p256 = scmp.ne.s32.totalorder %s251, %s253
      %p257 = scmp.eq.s32.totalorder %s28, 0
      %p258 = por %p256, %p257
      %p259 = scmp.ne.s32.totalorder %s251, %s253
      %p260 = scmp.eq.s32.totalorder %s33, 1
      %p261 = por %p259, %p260
      %p262 = scmp.ne.s32.totalorder %s253, %s254
      %p263 = scmp.eq.s32.totalorder %s33, 0
      %p264 = por %p262, %p263
      %p265 = scmp.ne.s32.totalorder %s253, %s254
      %p266 = scmp.eq.s32.totalorder %s34, 1
      %p267 = por %p265, %p266
      %p269 = scmp.ne.s32.totalorder %s254, %s268
      %p270 = scmp.eq.s32.totalorder %s34, 0
      %p271 = por %p269, %p270
      %s273 = sadd.s32 %s272, 1
      %p276 = scmp.eq.s32.totalorder %s28, 1
      %p277 = scmp.ne.s32.totalorder %s272, %s274
      %p278 = scmp.eq.s32.totalorder %s28, 0
      %p279 = por %p277, %p278
      %p280 = scmp.ne.s32.totalorder %s272, %s274
      %p281 = scmp.eq.s32.totalorder %s33, 1
      %p282 = por %p280, %p281
      %p283 = scmp.ne.s32.totalorder %s274, %s275
      %p284 = scmp.eq.s32.totalorder %s33, 0
      %p285 = por %p283, %p284
      %p286 = scmp.ne.s32.totalorder %s274, %s275
      %p287 = scmp.eq.s32.totalorder %s34, 1
      %p288 = por %p286, %p287
      %p290 = scmp.ne.s32.totalorder %s275, %s289
      %p291 = scmp.eq.s32.totalorder %s34, 0
      %p292 = por %p290, %p291
      %s294 = sadd.s32 %s293, 1
      %p297 = scmp.eq.s32.totalorder %s28, 1
      %p298 = scmp.ne.s32.totalorder %s293, %s295
      %p299 = scmp.eq.s32.totalorder %s28, 0
      %p300 = por %p298, %p299
      %p301 = scmp.ne.s32.totalorder %s293, %s295
      %p302 = scmp.eq.s32.totalorder %s33, 1
      %p303 = por %p301, %p302
      %p304 = scmp.ne.s32.totalorder %s295, %s296
      %p305 = scmp.eq.s32.totalorder %s33, 0
      %p306 = por %p304, %p305
      %p307 = scmp.ne.s32.totalorder %s295, %s296
      %p308 = scmp.eq.s32.totalorder %s34, 1
      %p309 = por %p307, %p308
      %p311 = scmp.ne.s32.totalorder %s296, %s310
      %p312 = scmp.eq.s32.totalorder %s34, 0
      %p313 = por %p311, %p312
      %s314 = ssub.s32 %s28, %s35
      %p315 = scmp.eq.s32.totalorder %s314, 0
      %s317 = sadd.s32 %s316, 1
      %s318 = scalar_select %p315, %s316, %s317
      %p321 = pneg %p315
      %p322 = scmp.eq.s32.totalorder %s28, 1
      %p323 = por %p321, %p322
      %p324 = scmp.ne.s32.totalorder %s316, %s319
      %p325 = scmp.eq.s32.totalorder %s28, 0
      %p326 = por %p324, %p325
      %p327 = scmp.ne.s32.totalorder %s316, %s319
      %p328 = scmp.eq.s32.totalorder %s33, 1
      %p329 = por %p327, %p328
      %p330 = scmp.ne.s32.totalorder %s319, %s320
      %p331 = scmp.eq.s32.totalorder %s33, 0
      %p332 = por %p330, %p331
      %p333 = scmp.ne.s32.totalorder %s319, %s320
      %p334 = scmp.eq.s32.totalorder %s34, 1
      %p335 = por %p333, %p334
      %p337 = scmp.ne.s32.totalorder %s320, %s336
      %p338 = scmp.eq.s32.totalorder %s34, 0
      %p339 = por %p337, %p338
      %s340 = ssub.s32 %s28, %s35
      %p341 = scmp.eq.s32.totalorder %s340, 0
      %s343 = sadd.s32 %s342, 1
      %s344 = scalar_select %p341, %s342, %s343
      %p347 = pneg %p341
      %p348 = scmp.eq.s32.totalorder %s28, 1
      %p349 = por %p347, %p348
      %p350 = scmp.ne.s32.totalorder %s342, %s345
      %p351 = scmp.eq.s32.totalorder %s28, 0
      %p352 = por %p350, %p351
      %p353 = scmp.ne.s32.totalorder %s342, %s345
      %p354 = scmp.eq.s32.totalorder %s33, 1
      %p355 = por %p353, %p354
      %p356 = scmp.ne.s32.totalorder %s345, %s346
      %p357 = scmp.eq.s32.totalorder %s33, 0
      %p358 = por %p356, %p357
      %p359 = scmp.ne.s32.totalorder %s345, %s346
      %p360 = scmp.eq.s32.totalorder %s34, 1
      %p361 = por %p359, %p360
      %p363 = scmp.ne.s32.totalorder %s346, %s362
      %p364 = scmp.eq.s32.totalorder %s34, 0
      %p365 = por %p363, %p364
      %p366 = scmp.le.s32.totalorder 1, %s28
      %p367 = scmp.lt.s32.totalorder %s28, 3
      %p368 = pnand %p366, %p367
      %p369 = pneg %p368
      // Predicated region
      $region9: #{tpu_custom_call.1} parent=5 // pred_check
        _
      $region10: #{tpu_custom_call.1} parent=5 // pred_check_branch
        %371 = sbr.rel (%p368) target = $region12
      $region11: #{tpu_custom_call.1} parent=5 // pred_region
        %s372 = ssub.s32 %s28, 1
        // Predicated region
        $region13: #{tpu_custom_call.1} parent=11 // pred_check
          %p373 = pneg %p75
        $region14: #{tpu_custom_call.1} parent=11 // pred_check_branch
          %375 = sbr.rel (%p373) target = $region16
        $region15: #{tpu_custom_call.1} parent=11 // pred_region
          _
        $region16: #{tpu_custom_call.1} parent=11 // pred_fallthru
          _
        // Predicated region
        $region17: #{tpu_custom_call.1} parent=11 // pred_check
          %p376 = pneg %p96
        $region18: #{tpu_custom_call.1} parent=11 // pred_check_branch
          %378 = sbr.rel (%p376) target = $region20
        $region19: #{tpu_custom_call.1} parent=11 // pred_region
          _
        $region20: #{tpu_custom_call.1} parent=11 // pred_fallthru
          _
        // Predicated region
        $region21: #{tpu_custom_call.1} parent=11 // pred_check
          %p379 = pneg %p117
        $region22: #{tpu_custom_call.1} parent=11 // pred_check_branch
          %381 = sbr.rel (%p379) target = $region24
        $region23: #{tpu_custom_call.1} parent=11 // pred_region
          _
        $region24: #{tpu_custom_call.1} parent=11 // pred_fallthru
          _
        // Predicated region
        $region25: #{tpu_custom_call.1} parent=11 // pred_check
          %p382 = pneg %p138
        $region26: #{tpu_custom_call.1} parent=11 // pred_check_branch
          %384 = sbr.rel (%p382) target = $region28
        $region27: #{tpu_custom_call.1} parent=11 // pred_region
          _
        $region28: #{tpu_custom_call.1} parent=11 // pred_fallthru
          _
        // Predicated region
        $region29: #{tpu_custom_call.1} parent=11 // pred_check
          %p385 = pneg %p159
        $region30: #{tpu_custom_call.1} parent=11 // pred_check_branch
          %387 = sbr.rel (%p385) target = $region32
        $region31: #{tpu_custom_call.1} parent=11 // pred_region
          %s389 = ssub.s32 256, 256
          %390 = vsyncadd [#allocation3], %s389
          %s391 = sshll.u32 [#allocation2], 4
          %s392 = int_to_ptr.vmem [resolvable:$true] %s391
          %397 = dma.hbm_to_vmem [thread:$0]  %s5, 256, %s392, [#allocation3], 64, 64, 4
        $region32: #{tpu_custom_call.1} parent=11 // pred_fallthru
          _
        // Predicated region
        $region33: #{tpu_custom_call.1} parent=11 // pred_check
          %p398 = pneg %p180
        $region34: #{tpu_custom_call.1} parent=11 // pred_check_branch
          %400 = sbr.rel (%p398) target = $region36
        $region35: #{tpu_custom_call.1} parent=11 // pred_region
          _
        $region36: #{tpu_custom_call.1} parent=11 // pred_fallthru
          _
        // Predicated region
        $region37: #{tpu_custom_call.1} parent=11 // pred_check
          %p401 = pneg %p201
        $region38: #{tpu_custom_call.1} parent=11 // pred_check_branch
          %403 = sbr.rel (%p401) target = $region40
        $region39: #{tpu_custom_call.1} parent=11 // pred_region
          _
        $region40: #{tpu_custom_call.1} parent=11 // pred_fallthru
          _
        // Predicated region
        $region41: #{tpu_custom_call.1} parent=11 // pred_check
          %p404 = pneg %p222
        $region42: #{tpu_custom_call.1} parent=11 // pred_check_branch
          %406 = sbr.rel (%p404) target = $region44
        $region43: #{tpu_custom_call.1} parent=11 // pred_region
          _
        $region44: #{tpu_custom_call.1} parent=11 // pred_fallthru
          _
        // Predicated region
        $region45: #{tpu_custom_call.1} parent=11 // pred_check
          %p407 = pneg %p243
        $region46: #{tpu_custom_call.1} parent=11 // pred_check_branch
          %409 = sbr.rel (%p407) target = $region48
        $region47: #{tpu_custom_call.1} parent=11 // pred_region
          _
        $region48: #{tpu_custom_call.1} parent=11 // pred_fallthru
          _
        // Predicated region
        $region49: #{tpu_custom_call.1} parent=11 // pred_check
          %p410 = pneg %p264
        $region50: #{tpu_custom_call.1} parent=11 // pred_check_branch
          %412 = sbr.rel (%p410) target = $region52
        $region51: #{tpu_custom_call.1} parent=11 // pred_region
          _
        $region52: #{tpu_custom_call.1} parent=11 // pred_fallthru
          _
        // Predicated region
        $region53: #{tpu_custom_call.1} parent=11 // pred_check
          %p413 = pneg %p285
        $region54: #{tpu_custom_call.1} parent=11 // pred_check_branch
          %415 = sbr.rel (%p413) target = $region56
        $region55: #{tpu_custom_call.1} parent=11 // pred_region
          _
        $region56: #{tpu_custom_call.1} parent=11 // pred_fallthru
          _
        // Predicated region
        $region57: #{tpu_custom_call.1} parent=11 // pred_check
          %p416 = pneg %p306
        $region58: #{tpu_custom_call.1} parent=11 // pred_check_branch
          %418 = sbr.rel (%p416) target = $region60
        $region59: #{tpu_custom_call.1} parent=11 // pred_region
          _
        $region60: #{tpu_custom_call.1} parent=11 // pred_fallthru
          _
      $region12: #{tpu_custom_call.1} parent=5 // pred_fallthru
        _
      %p419 = scmp.lt.s32.totalorder %s28, 2
      // Predicated region
      $region61: #{tpu_custom_call.1} parent=5 // pred_check
        %p420 = pneg %p419
      $region62: #{tpu_custom_call.1} parent=5 // pred_check_branch
        %422 = sbr.rel (%p420) target = $region64
      $region63: #{tpu_custom_call.1} parent=5 // pred_region
        // Predicated region
        $region65: #{tpu_custom_call.1} parent=63 // pred_check
          %p423 = pneg %p48
        $region66: #{tpu_custom_call.1} parent=63 // pred_check_branch
          %425 = sbr.rel (%p423) target = $region68
        $region67: #{tpu_custom_call.1} parent=63 // pred_region
          %p426 = scmp.lt.s32.totalorder %s28, 1
          %s427 = scalar_select %p426, %s28, 1
          %s428 = smul.addr %s427, 8
          %s429 = scalar_lea.vmem %s0, %s428
        $region68: #{tpu_custom_call.1} parent=63 // pred_fallthru
          _
      $region64: #{tpu_custom_call.1} parent=5 // pred_fallthru
        _
      %p430 = scmp.le.s32.totalorder 1, %s28
      %p431 = scmp.lt.s32.totalorder %s28, 3
      %p432 = pnand %p430, %p431
      %p433 = pneg %p432
      // Predicated region
      $region69: #{tpu_custom_call.1} parent=5 // pred_check
        _
      $region70: #{tpu_custom_call.1} parent=5 // pred_check_branch
        %435 = sbr.rel (%p432) target = $region72
      $region71: #{tpu_custom_call.1} parent=5 // pred_region
        %s436 = ssub.s32 %s28, 1
        // Predicated region
        $region73: #{tpu_custom_call.1} parent=71 // pred_check
          %p437 = pneg %p159
        $region74: #{tpu_custom_call.1} parent=71 // pred_check_branch
          %439 = sbr.rel (%p437) target = $region76
        $region75: #{tpu_custom_call.1} parent=71 // pred_region
          %440 = dma.done [#allocation3], 256
        $region76: #{tpu_custom_call.1} parent=71 // pred_fallthru
          _
        %p441 = scmp.lt.s32.totalorder %s33, 1
        %s442 = scalar_select %p441, %s33, 1
        %s443 = smul.addr %s442, 8
        %s444 = scalar_lea.vmem %s0, %s443
        %p445 = pneg %p54
        %p446 = pneg %p51
        %p447 = pneg %p75
        %p448 = pneg %p72
        %p449 = pneg %p96
        %p450 = pneg %p93
        %p451 = pneg %p117
        %p452 = pneg %p114
        %p453 = pneg %p138
        %p454 = pneg %p135
        %p455 = pneg %p159
        %p456 = pneg %p156
        %p457 = pneg %p180
        %p458 = pneg %p177
        %p459 = pneg %p201
        %p460 = pneg %p198
        %p461 = pneg %p222
        %p462 = pneg %p219
        %p463 = pneg %p243
        %p464 = pneg %p240
        %p465 = pneg %p264
        %p466 = pneg %p261
        %p467 = pneg %p285
        %p468 = pneg %p282
        %p469 = pneg %p306
        %p470 = pneg %p303
        %p471 = pneg %p332
        %p472 = pneg %p329
        %s473 = sand.u32 %s319, 1
        %s474 = scalar_lea.sflag [#allocation4], %s473
        %s475 = sand.u32 %s319, 1
        %s476 = smul.addr %s475, 8
        %s477 = scalar_lea.vmem [#allocation5], %s476
        %p478 = pneg %p358
        %p479 = pneg %p355
        %s480 = sand.u32 %s345, 1
        %s481 = scalar_lea.sflag [#allocation7], %s480
        %s482 = sand.u32 %s345, 1
        %s483 = smul.addr %s482, 8
        %s484 = scalar_lea.vmem [#allocation6], %s483
        %p485 = scmp.lt.s32.totalorder %s33, 1
        %s486 = scalar_select %p485, %s33, 1
        %s487 = smul.addr %s486, 8
        %s488 = scalar_lea.vmem %s0, %s487
        %v490 = vld [vmem:[%s488] sm:$0xff]
        %v491 = vpack.c.bf16 %v490, %v490
        %v492 = vld [vmem:[%s1] sm:$0xf]
        %v493 = vld [vmem:[%s1 + $0x4] sm:$0xf]
        %v494 = vld [vmem:[%s1 + $0x8] sm:$0xf]
        %v495 = vld [vmem:[%s1 + $0xc] sm:$0xf]
        %v496 = vld [vmem:[%s2] sm:$0x1]
        %v498 = vlaneseq
        %v499 = vshrl.u32 %v498, 7
        %v500 = vsub.s32 0, %v499
        %v501 = vrot.slane %v496, %v500
        %v507 = vunpack.c.l.b16 %v492
        %v508 = vunpack.c.l.b16 %v493
        %v509 = vunpack.c.l.b16 %v494
        %v510 = vunpack.c.l.b16 %v495
        %v511 = vpack.c.b16 %v508, %v507
        %v512 = vpack.c.b16 %v510, %v509
        %vm515 = vcmask 261120
        %v517 = vsel %vm515, %v491, 0
        %519 = vmatprep.subr.bf16.mxu0 0
        %520 = vmatpush1.bf16.msra.mxu0 0
        %521 = vmatprep.subr.bf16.mxu0 0
        %522 = vmatpush1.bf16.msra.mxu0 0
        %523 = vmatprep.subr.bf16.mxu0 0
        %524 = vmatpush1.bf16.msra.mxu0 0
        %525 = vmatprep.subr.bf16.mxu0 0
        %526 = vmatpush1.bf16.msra.mxu0 0
        %527 = vmatprep.subr.bf16.mxu0 0
        %528 = vmatpush1.bf16.msra.mxu0 0
        %529 = vmatprep.subr.bf16.mxu0 0
        %530 = vmatpush1.bf16.msra.mxu0 0
        %531 = vmatprep.subr.bf16.mxu0 0
        %532 = vmatpush1.bf16.msra.mxu0 %v512
        %533 = vmatprep.subr.bf16.mxu0 0
        %534 = vmatpush1.bf16.msra.mxu0 %v511
        %535 = vmatprep.subr.bf16.mxu0 0
        %536 = vmatpush2.bf16.msra.mxu0 0
        %537 = vmatprep.subr.bf16.mxu0 0
        %538 = vmatpush2.bf16.msra.mxu0 0
        %539 = vmatprep.subr.bf16.mxu0 0
        %540 = vmatpush2.bf16.msra.mxu0 0
        %541 = vmatprep.subr.bf16.mxu0 0
        %542 = vmatpush2.bf16.msra.mxu0 0
        %543 = vmatprep.subr.bf16.mxu0 0
        %544 = vmatpush2.bf16.msra.mxu0 0
        %545 = vmatprep.subr.bf16.mxu0 0
        %546 = vmatpush2.bf16.msra.mxu0 0
        %547 = vmatprep.subr.bf16.mxu0 0
        %548 = vmatpush2.bf16.msra.mxu0 0
        %549 = vmatprep.subr.bf16.mxu0 0
        %550 = vmatpush2.bf16.msra.mxu0 0
        %551 = vmatprep.mubr.bf16.mxu0 0
        %552 = vmatmul.mubr.bf16.gmra.mxu0 %v517
        %v553 = vpop.f32.mrf.mxu0
        %v554 = vadd.f32 %v501, %v553
        %v555 = vpop.f32.mrf.mxu0
        %v556 = vpop.f32.mrf.mxu0
        %v557 = vpop.f32.mrf.mxu0
        %558 = vdwg.mxu0
        %v559 = vpack.c.bf16 %v554, %v554
        %561 = vrot.lane.b32.xlu0 %v559, 120
        %v562 = vpop.permute.xlu0 %561
        %563 = vrot.lane.b32.xlu0 %v559, 112
        %v564 = vpop.permute.xlu0 %563
        %565 = vrot.lane.b32.xlu0 %v559, 104
        %v566 = vpop.permute.xlu0 %565
        %567 = vrot.lane.b32.xlu0 %v559, 96
        %v568 = vpop.permute.xlu0 %567
        %vm569 = vcmask 64512
        %v571 = vsel %vm569, %v559, 0
        %v574 = vsel %vm569, %v568, 0
        %576 = vmatprep.subr.bf16.mxu0 0
        %577 = vmatpush1.bf16.xpose.msra.mxu0 0
        %578 = vmatprep.subr.bf16.mxu0 0
        %579 = vmatpush1.bf16.xpose.msra.mxu0 0
        %580 = vmatprep.subr.bf16.mxu0 0
        %581 = vmatpush1.bf16.xpose.msra.mxu0 0
        %582 = vmatprep.subr.bf16.mxu0 0
        %583 = vmatpush1.bf16.xpose.msra.mxu0 0
        %584 = vmatprep.subr.bf16.mxu0 0
        %585 = vmatpush1.bf16.xpose.msra.mxu0 0
        %586 = vmatprep.subr.bf16.mxu0 0
        %587 = vmatpush1.bf16.xpose.msra.mxu0 0
        %588 = vmatprep.subr.bf16.mxu0 0
        %589 = vmatpush1.bf16.xpose.msra.mxu0 0
        %590 = vmatprep.subr.bf16.mxu0 0
        %591 = vmatpush1.bf16.xpose.msra.mxu0 %v574
        %592 = vmatprep.subr.bf16.mxu0 0
        %593 = vmatpush2.bf16.xpose.msra.mxu0 0
        %594 = vmatprep.subr.bf16.mxu0 0
        %595 = vmatpush2.bf16.xpose.msra.mxu0 0
        %596 = vmatprep.subr.bf16.mxu0 0
        %597 = vmatpush2.bf16.xpose.msra.mxu0 0
        %598 = vmatprep.subr.bf16.mxu0 0
        %599 = vmatpush2.bf16.xpose.msra.mxu0 0
        %600 = vmatprep.subr.bf16.mxu0 0
        %601 = vmatpush2.bf16.xpose.msra.mxu0 0
        %602 = vmatprep.subr.bf16.mxu0 0
        %603 = vmatpush2.bf16.xpose.msra.mxu0 0
        %604 = vmatprep.subr.bf16.mxu0 0
        %605 = vmatpush2.bf16.xpose.msra.mxu0 0
        %606 = vmatprep.subr.bf16.mxu0 0
        %607 = vmatpush2.bf16.xpose.msra.mxu0 0
        %608 = vmatprep.mubr.bf16.mxu0 0
        %609 = vmatmul.mubr.bf16.gmra.mxu0 %v571
        %v610 = vpop.f32.mrf.mxu0
        %v611 = vadd.f32 0.0, %v610
        %v612 = vpop.f32.mrf.mxu0
        %v613 = vpop.f32.mrf.mxu0
        %v614 = vpop.f32.mrf.mxu0
        %615 = vdwg.mxu0
        %616 = vrot.lane.b32.xlu0 %v562, 96
        %v617 = vpop.permute.xlu0 %616
        %v619 = vsel %vm569, %v562, 0
        %v622 = vsel %vm569, %v617, 0
        %624 = vmatprep.subr.bf16.mxu0 0
        %625 = vmatpush1.bf16.xpose.msra.mxu0 0
        %626 = vmatprep.subr.bf16.mxu0 0
        %627 = vmatpush1.bf16.xpose.msra.mxu0 0
        %628 = vmatprep.subr.bf16.mxu0 0
        %629 = vmatpush1.bf16.xpose.msra.mxu0 0
        %630 = vmatprep.subr.bf16.mxu0 0
        %631 = vmatpush1.bf16.xpose.msra.mxu0 0
        %632 = vmatprep.subr.bf16.mxu0 0
        %633 = vmatpush1.bf16.xpose.msra.mxu0 0
        %634 = vmatprep.subr.bf16.mxu0 0
        %635 = vmatpush1.bf16.xpose.msra.mxu0 0
        %636 = vmatprep.subr.bf16.mxu0 0
        %637 = vmatpush1.bf16.xpose.msra.mxu0 0
        %638 = vmatprep.subr.bf16.mxu0 0
        %639 = vmatpush1.bf16.xpose.msra.mxu0 %v622
        %640 = vmatprep.subr.bf16.mxu0 0
        %641 = vmatpush2.bf16.xpose.msra.mxu0 0
        %642 = vmatprep.subr.bf16.mxu0 0
        %643 = vmatpush2.bf16.xpose.msra.mxu0 0
        %644 = vmatprep.subr.bf16.mxu0 0
        %645 = vmatpush2.bf16.xpose.msra.mxu0 0
        %646 = vmatprep.subr.bf16.mxu0 0
        %647 = vmatpush2.bf16.xpose.msra.mxu0 0
        %648 = vmatprep.subr.bf16.mxu0 0
        %649 = vmatpush2.bf16.xpose.msra.mxu0 0
        %650 = vmatprep.subr.bf16.mxu0 0
        %651 = vmatpush2.bf16.xpose.msra.mxu0 0
        %652 = vmatprep.subr.bf16.mxu0 0
        %653 = vmatpush2.bf16.xpose.msra.mxu0 0
        %654 = vmatprep.subr.bf16.mxu0 0
        %655 = vmatpush2.bf16.xpose.msra.mxu0 0
        %656 = vmatprep.mubr.bf16.mxu0 0
        %657 = vmatmul.mubr.bf16.gmra.mxu0 %v619
        %v658 = vpop.f32.mrf.mxu0
        %v659 = vadd.f32 0.0, %v658
        %v660 = vpop.f32.mrf.mxu0
        %v661 = vpop.f32.mrf.mxu0
        %v662 = vpop.f32.mrf.mxu0
        %663 = vdwg.mxu0
        %664 = vrot.lane.b32.xlu0 %v564, 96
        %v665 = vpop.permute.xlu0 %664
        %v667 = vsel %vm569, %v564, 0
        %v670 = vsel %vm569, %v665, 0
        %672 = vmatprep.subr.bf16.mxu0 0
        %673 = vmatpush1.bf16.xpose.msra.mxu0 0
        %674 = vmatprep.subr.bf16.mxu0 0
        %675 = vmatpush1.bf16.xpose.msra.mxu0 0
        %676 = vmatprep.subr.bf16.mxu0 0
        %677 = vmatpush1.bf16.xpose.msra.mxu0 0
        %678 = vmatprep.subr.bf16.mxu0 0
        %679 = vmatpush1.bf16.xpose.msra.mxu0 0
        %680 = vmatprep.subr.bf16.mxu0 0
        %681 = vmatpush1.bf16.xpose.msra.mxu0 0
        %682 = vmatprep.subr.bf16.mxu0 0
        %683 = vmatpush1.bf16.xpose.msra.mxu0 0
        %684 = vmatprep.subr.bf16.mxu0 0
        %685 = vmatpush1.bf16.xpose.msra.mxu0 0
        %686 = vmatprep.subr.bf16.mxu0 0
        %687 = vmatpush1.bf16.xpose.msra.mxu0 %v670
        %688 = vmatprep.subr.bf16.mxu0 0
        %689 = vmatpush2.bf16.xpose.msra.mxu0 0
        %690 = vmatprep.subr.bf16.mxu0 0
        %691 = vmatpush2.bf16.xpose.msra.mxu0 0
        %692 = vmatprep.subr.bf16.mxu0 0
        %693 = vmatpush2.bf16.xpose.msra.mxu0 0
        %694 = vmatprep.subr.bf16.mxu0 0
        %695 = vmatpush2.bf16.xpose.msra.mxu0 0
        %696 = vmatprep.subr.bf16.mxu0 0
        %697 = vmatpush2.bf16.xpose.msra.mxu0 0
        %698 = vmatprep.subr.bf16.mxu0 0
        %699 = vmatpush2.bf16.xpose.msra.mxu0 0
        %700 = vmatprep.subr.bf16.mxu0 0
        %701 = vmatpush2.bf16.xpose.msra.mxu0 0
        %702 = vmatprep.subr.bf16.mxu0 0
        %703 = vmatpush2.bf16.xpose.msra.mxu0 0
        %704 = vmatprep.mubr.bf16.mxu0 0
        %705 = vmatmul.mubr.bf16.gmra.mxu0 %v667
        %v706 = vpop.f32.mrf.mxu0
        %v707 = vadd.f32 0.0, %v706
        %v708 = vpop.f32.mrf.mxu0
        %v709 = vpop.f32.mrf.mxu0
        %v710 = vpop.f32.mrf.mxu0
        %711 = vdwg.mxu0
        %712 = vrot.lane.b32.xlu0 %v566, 96
        %v713 = vpop.permute.xlu0 %712
        %v715 = vsel %vm569, %v566, 0
        %v718 = vsel %vm569, %v713, 0
        %720 = vmatprep.subr.bf16.mxu0 0
        %721 = vmatpush1.bf16.xpose.msra.mxu0 0
        %722 = vmatprep.subr.bf16.mxu0 0
        %723 = vmatpush1.bf16.xpose.msra.mxu0 0
        %724 = vmatprep.subr.bf16.mxu0 0
        %725 = vmatpush1.bf16.xpose.msra.mxu0 0
        %726 = vmatprep.subr.bf16.mxu0 0
        %727 = vmatpush1.bf16.xpose.msra.mxu0 0
        %728 = vmatprep.subr.bf16.mxu0 0
        %729 = vmatpush1.bf16.xpose.msra.mxu0 0
        %730 = vmatprep.subr.bf16.mxu0 0
        %731 = vmatpush1.bf16.xpose.msra.mxu0 0
        %732 = vmatprep.subr.bf16.mxu0 0
        %733 = vmatpush1.bf16.xpose.msra.mxu0 0
        %734 = vmatprep.subr.bf16.mxu0 0
        %735 = vmatpush1.bf16.xpose.msra.mxu0 %v718
        %736 = vmatprep.subr.bf16.mxu0 0
        %737 = vmatpush2.bf16.xpose.msra.mxu0 0
        %738 = vmatprep.subr.bf16.mxu0 0
        %739 = vmatpush2.bf16.xpose.msra.mxu0 0
        %740 = vmatprep.subr.bf16.mxu0 0
        %741 = vmatpush2.bf16.xpose.msra.mxu0 0
        %742 = vmatprep.subr.bf16.mxu0 0
        %743 = vmatpush2.bf16.xpose.msra.mxu0 0
        %744 = vmatprep.subr.bf16.mxu0 0
        %745 = vmatpush2.bf16.xpose.msra.mxu0 0
        %746 = vmatprep.subr.bf16.mxu0 0
        %747 = vmatpush2.bf16.xpose.msra.mxu0 0
        %748 = vmatprep.subr.bf16.mxu0 0
        %749 = vmatpush2.bf16.xpose.msra.mxu0 0
        %750 = vmatprep.subr.bf16.mxu0 0
        %751 = vmatpush2.bf16.xpose.msra.mxu0 0
        %752 = vmatprep.mubr.bf16.mxu0 0
        %753 = vmatmul.mubr.bf16.gmra.mxu0 %v715
        %v754 = vpop.f32.mrf.mxu0
        %v755 = vadd.f32 0.0, %v754
        %v756 = vpop.f32.mrf.mxu0
        %v757 = vpop.f32.mrf.mxu0
        %v758 = vpop.f32.mrf.mxu0
        %759 = vdwg.mxu0
        %v760 = vsel %vm569, %v611, -inf
        %761 = vmax.xlane.f32.xlu0 %v760
        %v762 = vpop.xlane.xlu0 %761
        %v763 = vsel %vm569, %v659, -inf
        %764 = vmax.xlane.f32.xlu0 %v763
        %v765 = vpop.xlane.xlu0 %764
        %v766 = vsel %vm569, %v707, -inf
        %767 = vmax.xlane.f32.xlu0 %v766
        %v768 = vpop.xlane.xlu0 %767
        %v769 = vsel %vm569, %v755, -inf
        %770 = vmax.xlane.f32.xlu0 %v769
        %v771 = vpop.xlane.xlu0 %770
        %v772 = vsub.f32 %v611, %v762
        %v773 = vsub.f32 %v659, %v765
        %v774 = vsub.f32 %v707, %v768
        %v775 = vsub.f32 %v755, %v771
        %v776 = vmul.f32 %v772, 1.442695
        %v777 = vpow.pop %v776
        %v778 = vmul.f32 %v773, 1.442695
        %v779 = vpow.pop %v778
        %v780 = vmul.f32 %v774, 1.442695
        %v781 = vpow.pop %v780
        %v782 = vmul.f32 %v775, 1.442695
        %v783 = vpow.pop %v782
        %v784 = vsel %vm569, %v777, 0.0
        %785 = vadd.xlane.f32.xlu0 %v784
        %v786 = vpop.xlane.xlu0 %785
        %v787 = vsel %vm569, %v779, 0.0
        %788 = vadd.xlane.f32.xlu0 %v787
        %v789 = vpop.xlane.xlu0 %788
        %v790 = vsel %vm569, %v781, 0.0
        %791 = vadd.xlane.f32.xlu0 %v790
        %v792 = vpop.xlane.xlu0 %791
        %v793 = vsel %vm569, %v783, 0.0
        %794 = vadd.xlane.f32.xlu0 %v793
        %v795 = vpop.xlane.xlu0 %794
        %v796 = vrcp.pop %v786
        %v797 = vrcp.pop %v789
        %v798 = vrcp.pop %v792
        %v799 = vrcp.pop %v795
        %v800 = vmul.f32 %v777, %v796
        %v801 = vmul.f32 %v779, %v797
        %v802 = vmul.f32 %v781, %v798
        %v803 = vmul.f32 %v783, %v799
        %v804 = vsel %vm569, %v800, 0.0
        %v805 = vsel %vm569, %v801, 0.0
        %v806 = vadd.f32 %v804, %v805
        %v807 = vsel %vm569, %v802, 0.0
        %v808 = vadd.f32 %v806, %v807
        %v809 = vsel %vm569, %v803, 0.0
        %v810 = vadd.f32 %v808, %v809
        %v811 = vrcp.pop 4.0
        %v812 = vmul.f32 %v810, %v811
        %813 = vst.msk [vmem:[%s484] sm:$0xff] %vm569, %v812
        %v814 = vpack.c.bf16 %v800, %v800
        %v815 = vpack.c.bf16 %v801, %v801
        %v816 = vpack.c.bf16 %v802, %v802
        %v817 = vpack.c.bf16 %v803, %v803
        %818 = vrot.lane.b32.xlu0 %v559, 64
        %v819 = vpop.permute.xlu0 %818
        %v821 = vsel %vm569, %v814, 0
        %vm823 = vcmask 1043456
        %v825 = vsel %vm823, %v819, 0
        %827 = vmatprep.subr.bf16.mxu0 0
        %828 = vmatpush1.bf16.msra.mxu0 0
        %829 = vmatprep.subr.bf16.mxu0 0
        %830 = vmatpush1.bf16.msra.mxu0 0
        %831 = vmatprep.subr.bf16.mxu0 0
        %832 = vmatpush1.bf16.msra.mxu0 0
        %833 = vmatprep.subr.bf16.mxu0 0
        %834 = vmatpush1.bf16.msra.mxu0 0
        %835 = vmatprep.subr.bf16.mxu0 0
        %836 = vmatpush1.bf16.msra.mxu0 0
        %837 = vmatprep.subr.bf16.mxu0 0
        %838 = vmatpush1.bf16.msra.mxu0 0
        %839 = vmatprep.subr.bf16.mxu0 0
        %840 = vmatpush1.bf16.msra.mxu0 0
        %841 = vmatprep.subr.bf16.mxu0 0
        %842 = vmatpush1.bf16.msra.mxu0 %v825
        %843 = vmatprep.subr.bf16.mxu0 0
        %844 = vmatpush2.bf16.msra.mxu0 0
        %845 = vmatprep.subr.bf16.mxu0 0
        %846 = vmatpush2.bf16.msra.mxu0 0
        %847 = vmatprep.subr.bf16.mxu0 0
        %848 = vmatpush2.bf16.msra.mxu0 0
        %849 = vmatprep.subr.bf16.mxu0 0
        %850 = vmatpush2.bf16.msra.mxu0 0
        %851 = vmatprep.subr.bf16.mxu0 0
        %852 = vmatpush2.bf16.msra.mxu0 0
        %853 = vmatprep.subr.bf16.mxu0 0
        %854 = vmatpush2.bf16.msra.mxu0 0
        %855 = vmatprep.subr.bf16.mxu0 0
        %856 = vmatpush2.bf16.msra.mxu0 0
        %857 = vmatprep.subr.bf16.mxu0 0
        %858 = vmatpush2.bf16.msra.mxu0 0
        %859 = vmatprep.mubr.bf16.mxu0 0
        %860 = vmatmul.mubr.bf16.gmra.mxu0 %v821
        %v861 = vpop.f32.mrf.mxu0
        %v862 = vadd.f32 0.0, %v861
        %v863 = vpop.f32.mrf.mxu0
        %v864 = vpop.f32.mrf.mxu0
        %v865 = vpop.f32.mrf.mxu0
        %866 = vdwg.mxu0
        %867 = vrot.lane.b32.xlu0 %v562, 64
        %v868 = vpop.permute.xlu0 %867
        %v870 = vsel %vm569, %v815, 0
        %v873 = vsel %vm823, %v868, 0
        %875 = vmatprep.subr.bf16.mxu0 0
        %876 = vmatpush1.bf16.msra.mxu0 0
        %877 = vmatprep.subr.bf16.mxu0 0
        %878 = vmatpush1.bf16.msra.mxu0 0
        %879 = vmatprep.subr.bf16.mxu0 0
        %880 = vmatpush1.bf16.msra.mxu0 0
        %881 = vmatprep.subr.bf16.mxu0 0
        %882 = vmatpush1.bf16.msra.mxu0 0
        %883 = vmatprep.subr.bf16.mxu0 0
        %884 = vmatpush1.bf16.msra.mxu0 0
        %885 = vmatprep.subr.bf16.mxu0 0
        %886 = vmatpush1.bf16.msra.mxu0 0
        %887 = vmatprep.subr.bf16.mxu0 0
        %888 = vmatpush1.bf16.msra.mxu0 0
        %889 = vmatprep.subr.bf16.mxu0 0
        %890 = vmatpush1.bf16.msra.mxu0 %v873
        %891 = vmatprep.subr.bf16.mxu0 0
        %892 = vmatpush2.bf16.msra.mxu0 0
        %893 = vmatprep.subr.bf16.mxu0 0
        %894 = vmatpush2.bf16.msra.mxu0 0
        %895 = vmatprep.subr.bf16.mxu0 0
        %896 = vmatpush2.bf16.msra.mxu0 0
        %897 = vmatprep.subr.bf16.mxu0 0
        %898 = vmatpush2.bf16.msra.mxu0 0
        %899 = vmatprep.subr.bf16.mxu0 0
        %900 = vmatpush2.bf16.msra.mxu0 0
        %901 = vmatprep.subr.bf16.mxu0 0
        %902 = vmatpush2.bf16.msra.mxu0 0
        %903 = vmatprep.subr.bf16.mxu0 0
        %904 = vmatpush2.bf16.msra.mxu0 0
        %905 = vmatprep.subr.bf16.mxu0 0
        %906 = vmatpush2.bf16.msra.mxu0 0
        %907 = vmatprep.mubr.bf16.mxu0 0
        %908 = vmatmul.mubr.bf16.gmra.mxu0 %v870
        %v909 = vpop.f32.mrf.mxu0
        %v910 = vadd.f32 0.0, %v909
        %v911 = vpop.f32.mrf.mxu0
        %v912 = vpop.f32.mrf.mxu0
        %v913 = vpop.f32.mrf.mxu0
        %914 = vdwg.mxu0
        %915 = vrot.lane.b32.xlu0 %v564, 64
        %v916 = vpop.permute.xlu0 %915
        %v918 = vsel %vm569, %v816, 0
        %v921 = vsel %vm823, %v916, 0
        %923 = vmatprep.subr.bf16.mxu0 0
        %924 = vmatpush1.bf16.msra.mxu0 0
        %925 = vmatprep.subr.bf16.mxu0 0
        %926 = vmatpush1.bf16.msra.mxu0 0
        %927 = vmatprep.subr.bf16.mxu0 0
        %928 = vmatpush1.bf16.msra.mxu0 0
        %929 = vmatprep.subr.bf16.mxu0 0
        %930 = vmatpush1.bf16.msra.mxu0 0
        %931 = vmatprep.subr.bf16.mxu0 0
        %932 = vmatpush1.bf16.msra.mxu0 0
        %933 = vmatprep.subr.bf16.mxu0 0
        %934 = vmatpush1.bf16.msra.mxu0 0
        %935 = vmatprep.subr.bf16.mxu0 0
        %936 = vmatpush1.bf16.msra.mxu0 0
        %937 = vmatprep.subr.bf16.mxu0 0
        %938 = vmatpush1.bf16.msra.mxu0 %v921
        %939 = vmatprep.subr.bf16.mxu0 0
        %940 = vmatpush2.bf16.msra.mxu0 0
        %941 = vmatprep.subr.bf16.mxu0 0
        %942 = vmatpush2.bf16.msra.mxu0 0
        %943 = vmatprep.subr.bf16.mxu0 0
        %944 = vmatpush2.bf16.msra.mxu0 0
        %945 = vmatprep.subr.bf16.mxu0 0
        %946 = vmatpush2.bf16.msra.mxu0 0
        %947 = vmatprep.subr.bf16.mxu0 0
        %948 = vmatpush2.bf16.msra.mxu0 0
        %949 = vmatprep.subr.bf16.mxu0 0
        %950 = vmatpush2.bf16.msra.mxu0 0
        %951 = vmatprep.subr.bf16.mxu0 0
        %952 = vmatpush2.bf16.msra.mxu0 0
        %953 = vmatprep.subr.bf16.mxu0 0
        %954 = vmatpush2.bf16.msra.mxu0 0
        %955 = vmatprep.mubr.bf16.mxu0 0
        %956 = vmatmul.mubr.bf16.gmra.mxu0 %v918
        %v957 = vpop.f32.mrf.mxu0
        %v958 = vadd.f32 0.0, %v957
        %v959 = vpop.f32.mrf.mxu0
        %v960 = vpop.f32.mrf.mxu0
        %v961 = vpop.f32.mrf.mxu0
        %962 = vdwg.mxu0
        %963 = vrot.lane.b32.xlu0 %v566, 64
        %v964 = vpop.permute.xlu0 %963
        %v966 = vsel %vm569, %v817, 0
        %v969 = vsel %vm823, %v964, 0
        %971 = vmatprep.subr.bf16.mxu0 0
        %972 = vmatpush1.bf16.msra.mxu0 0
        %973 = vmatprep.subr.bf16.mxu0 0
        %974 = vmatpush1.bf16.msra.mxu0 0
        %975 = vmatprep.subr.bf16.mxu0 0
        %976 = vmatpush1.bf16.msra.mxu0 0
        %977 = vmatprep.subr.bf16.mxu0 0
        %978 = vmatpush1.bf16.msra.mxu0 0
        %979 = vmatprep.subr.bf16.mxu0 0
        %980 = vmatpush1.bf16.msra.mxu0 0
        %981 = vmatprep.subr.bf16.mxu0 0
        %982 = vmatpush1.bf16.msra.mxu0 0
        %983 = vmatprep.subr.bf16.mxu0 0
        %984 = vmatpush1.bf16.msra.mxu0 0
        %985 = vmatprep.subr.bf16.mxu0 0
        %986 = vmatpush1.bf16.msra.mxu0 %v969
        %987 = vmatprep.subr.bf16.mxu0 0
        %988 = vmatpush2.bf16.msra.mxu0 0
        %989 = vmatprep.subr.bf16.mxu0 0
        %990 = vmatpush2.bf16.msra.mxu0 0
        %991 = vmatprep.subr.bf16.mxu0 0
        %992 = vmatpush2.bf16.msra.mxu0 0
        %993 = vmatprep.subr.bf16.mxu0 0
        %994 = vmatpush2.bf16.msra.mxu0 0
        %995 = vmatprep.subr.bf16.mxu0 0
        %996 = vmatpush2.bf16.msra.mxu0 0
        %997 = vmatprep.subr.bf16.mxu0 0
        %998 = vmatpush2.bf16.msra.mxu0 0
        %999 = vmatprep.subr.bf16.mxu0 0
        %1000 = vmatpush2.bf16.msra.mxu0 0
        %1001 = vmatprep.subr.bf16.mxu0 0
        %1002 = vmatpush2.bf16.msra.mxu0 0
        %1003 = vmatprep.mubr.bf16.mxu0 0
        %1004 = vmatmul.mubr.bf16.gmra.mxu0 %v966
        %v1005 = vpop.f32.mrf.mxu0
        %v1006 = vadd.f32 0.0, %v1005
        %v1007 = vpop.f32.mrf.mxu0
        %v1008 = vpop.f32.mrf.mxu0
        %v1009 = vpop.f32.mrf.mxu0
        %1010 = vdwg.mxu0
        %1012 = vrot.lane.b32.xlu0 %v910, 8
        %v1013 = vpop.permute.xlu0 %1012
        %1016 = vrot.lane.b32.xlu0 %v958, 16
        %v1017 = vpop.permute.xlu0 %1016
        %1020 = vrot.lane.b32.xlu0 %v1006, 24
        %v1021 = vpop.permute.xlu0 %1020
        %v1023 = vsel %vm569, %v862, %v1013
        %vm1024 = vcmask 130048
        %v1025 = vsel %vm1024, %v1023, %v1017
        %vm1026 = vcmask 195584
        %v1027 = vsel %vm1026, %v1025, %v1021
        %v1028 = vpack.c.bf16 %v1027, %v1027
        %v1029 = vld [vmem:[%s3] sm:$0xf]
        %v1030 = vld [vmem:[%s3 + $0x4] sm:$0xf]
        %v1031 = vld [vmem:[%s3 + $0x8] sm:$0xf]
        %v1032 = vld [vmem:[%s3 + $0xc] sm:$0xf]
        %v1033 = vld [vmem:[%s4] sm:$0x1]
        %v1035 = vlaneseq
        %v1036 = vshrl.u32 %v1035, 7
        %v1037 = vsub.s32 0, %v1036
        %v1038 = vrot.slane %v1033, %v1037
        %v1044 = vunpack.c.l.b16 %v1029
        %v1045 = vunpack.c.l.b16 %v1030
        %v1046 = vunpack.c.l.b16 %v1031
        %v1047 = vunpack.c.l.b16 %v1032
        %v1048 = vpack.c.b16 %v1045, %v1044
        %v1049 = vpack.c.b16 %v1047, %v1046
        %v1053 = vsel %vm515, %v1028, 0
        %1055 = vmatprep.subr.bf16.mxu0 0
        %1056 = vmatpush1.bf16.msra.mxu0 0
        %1057 = vmatprep.subr.bf16.mxu0 0
        %1058 = vmatpush1.bf16.msra.mxu0 0
        %1059 = vmatprep.subr.bf16.mxu0 0
        %1060 = vmatpush1.bf16.msra.mxu0 0
        %1061 = vmatprep.subr.bf16.mxu0 0
        %1062 = vmatpush1.bf16.msra.mxu0 0
        %1063 = vmatprep.subr.bf16.mxu0 0
        %1064 = vmatpush1.bf16.msra.mxu0 0
        %1065 = vmatprep.subr.bf16.mxu0 0
        %1066 = vmatpush1.bf16.msra.mxu0 0
        %1067 = vmatprep.subr.bf16.mxu0 0
        %1068 = vmatpush1.bf16.msra.mxu0 %v1049
        %1069 = vmatprep.subr.bf16.mxu0 0
        %1070 = vmatpush1.bf16.msra.mxu0 %v1048
        %1071 = vmatprep.subr.bf16.mxu0 0
        %1072 = vmatpush2.bf16.msra.mxu0 0
        %1073 = vmatprep.subr.bf16.mxu0 0
        %1074 = vmatpush2.bf16.msra.mxu0 0
        %1075 = vmatprep.subr.bf16.mxu0 0
        %1076 = vmatpush2.bf16.msra.mxu0 0
        %1077 = vmatprep.subr.bf16.mxu0 0
        %1078 = vmatpush2.bf16.msra.mxu0 0
        %1079 = vmatprep.subr.bf16.mxu0 0
        %1080 = vmatpush2.bf16.msra.mxu0 0
        %1081 = vmatprep.subr.bf16.mxu0 0
        %1082 = vmatpush2.bf16.msra.mxu0 0
        %1083 = vmatprep.subr.bf16.mxu0 0
        %1084 = vmatpush2.bf16.msra.mxu0 0
        %1085 = vmatprep.subr.bf16.mxu0 0
        %1086 = vmatpush2.bf16.msra.mxu0 0
        %1087 = vmatprep.mubr.bf16.mxu0 0
        %1088 = vmatmul.mubr.bf16.gmra.mxu0 %v1053
        %v1089 = vpop.f32.mrf.mxu0
        %v1090 = vadd.f32 %v1038, %v1089
        %v1091 = vpop.f32.mrf.mxu0
        %v1092 = vpop.f32.mrf.mxu0
        %v1093 = vpop.f32.mrf.mxu0
        %1094 = vdwg.mxu0
        %v1095 = vadd.f32 %v490, %v1090
        %v1096 = vsel %vm515, %v1095, 0.0
        %1097 = vadd.xlane.f32.xlu0 %v1096
        %v1098 = vpop.xlane.xlu0 %1097
        %v1099 = vrcp.pop 32.0
        %v1100 = vmul.f32 %v1098, %v1099
        %v1101 = vsub.f32 %v1095, %v1100
        %v1102 = vmul.f32 %v1101, %v1101
        %v1103 = vsel %vm515, %v1102, 0.0
        %1104 = vadd.xlane.f32.xlu0 %v1103
        %v1105 = vpop.xlane.xlu0 %1104
        %v1106 = vmul.f32 %v1105, %v1099
        %v1107 = vadd.f32 %v1106, 1e-05
        %v1108 = vrsqrt.pop %v1107
        %v1109 = vmul.f32 %v1101, %v1108
        %v1110 = vld [vmem:[%s9] sm:$0x1]
        %v1112 = vlaneseq
        %v1113 = vshrl.u32 %v1112, 7
        %v1114 = vsub.s32 0, %v1113
        %v1115 = vrot.slane %v1110, %v1114
        %v1117 = vmul.f32 %v1109, %v1115
        %v1118 = vld [vmem:[%s10] sm:$0x1]
        %v1120 = vlaneseq
        %v1121 = vshrl.u32 %v1120, 7
        %v1122 = vsub.s32 0, %v1121
        %v1123 = vrot.slane %v1118, %v1122
        %v1125 = vadd.f32 %v1117, %v1123
        %v1126 = vpack.c.bf16 %v1125, %v1125
        %v1127 = vld [vmem:[#allocation2] sm:$0xf]
        %v1128 = vld [vmem:[#allocation2 + $0x4] sm:$0xf]
        %v1129 = vld [vmem:[#allocation2 + $0x8] sm:$0xf]
        %v1130 = vld [vmem:[#allocation2 + $0xc] sm:$0xf]
        %v1131 = vld [vmem:[%s6] sm:$0x1]
        %v1133 = vlaneseq
        %v1134 = vshrl.u32 %v1133, 7
        %v1135 = vsub.s32 0, %v1134
        %v1136 = vrot.slane %v1131, %v1135
        %v1142 = vunpack.c.l.b16 %v1127
        %v1143 = vunpack.c.l.b16 %v1128
        %v1144 = vunpack.c.l.b16 %v1129
        %v1145 = vunpack.c.l.b16 %v1130
        %v1146 = vpack.c.b16 %v1143, %v1142
        %v1147 = vpack.c.b16 %v1145, %v1144
        %v1151 = vsel %vm515, %v1126, 0
        %1153 = vmatprep.subr.bf16.mxu0 0
        %1154 = vmatpush1.bf16.msra.mxu0 0
        %1155 = vmatprep.subr.bf16.mxu0 0
        %1156 = vmatpush1.bf16.msra.mxu0 0
        %1157 = vmatprep.subr.bf16.mxu0 0
        %1158 = vmatpush1.bf16.msra.mxu0 0
        %1159 = vmatprep.subr.bf16.mxu0 0
        %1160 = vmatpush1.bf16.msra.mxu0 0
        %1161 = vmatprep.subr.bf16.mxu0 0
        %1162 = vmatpush1.bf16.msra.mxu0 0
        %1163 = vmatprep.subr.bf16.mxu0 0
        %1164 = vmatpush1.bf16.msra.mxu0 0
        %1165 = vmatprep.subr.bf16.mxu0 0
        %1166 = vmatpush1.bf16.msra.mxu0 %v1147
        %1167 = vmatprep.subr.bf16.mxu0 0
        %1168 = vmatpush1.bf16.msra.mxu0 %v1146
        %1169 = vmatprep.subr.bf16.mxu0 0
        %1170 = vmatpush2.bf16.msra.mxu0 0
        %1171 = vmatprep.subr.bf16.mxu0 0
        %1172 = vmatpush2.bf16.msra.mxu0 0
        %1173 = vmatprep.subr.bf16.mxu0 0
        %1174 = vmatpush2.bf16.msra.mxu0 0
        %1175 = vmatprep.subr.bf16.mxu0 0
        %1176 = vmatpush2.bf16.msra.mxu0 0
        %1177 = vmatprep.subr.bf16.mxu0 0
        %1178 = vmatpush2.bf16.msra.mxu0 0
        %1179 = vmatprep.subr.bf16.mxu0 0
        %1180 = vmatpush2.bf16.msra.mxu0 0
        %1181 = vmatprep.subr.bf16.mxu0 0
        %1182 = vmatpush2.bf16.msra.mxu0 0
        %1183 = vmatprep.subr.bf16.mxu0 0
        %1184 = vmatpush2.bf16.msra.mxu0 0
        %1185 = vmatprep.mubr.bf16.mxu0 0
        %1186 = vmatmul.mubr.bf16.gmra.mxu0 %v1151
        %v1187 = vpop.f32.mrf.mxu0
        %v1188 = vadd.f32 %v1136, %v1187
        %v1189 = vpop.f32.mrf.mxu0
        %v1190 = vpop.f32.mrf.mxu0
        %v1191 = vpop.f32.mrf.mxu0
        %1192 = vdwg.mxu0
        %v1193 = vmax.f32 %v1188, 0.0
        %v1194 = vpack.c.bf16 %v1193, %v1193
        %v1195 = vld [vmem:[%s7] sm:$0xf]
        %v1196 = vld [vmem:[%s7 + $0x4] sm:$0xf]
        %v1197 = vld [vmem:[%s7 + $0x8] sm:$0xf]
        %v1198 = vld [vmem:[%s7 + $0xc] sm:$0xf]
        %v1199 = vld [vmem:[%s7 + $0x10] sm:$0xf]
        %v1200 = vld [vmem:[%s7 + $0x14] sm:$0xf]
        %v1201 = vld [vmem:[%s7 + $0x18] sm:$0xf]
        %v1202 = vld [vmem:[%s7 + $0x1c] sm:$0xf]
        %v1203 = vld [vmem:[%s8] sm:$0x1]
        %v1205 = vlaneseq
        %v1206 = vshrl.u32 %v1205, 7
        %v1207 = vsub.s32 0, %v1206
        %v1208 = vrot.slane %v1203, %v1207
        %v1218 = vunpack.c.l.b16 %v1195
        %v1219 = vunpack.c.l.b16 %v1196
        %v1220 = vunpack.c.l.b16 %v1197
        %v1221 = vunpack.c.l.b16 %v1198
        %v1222 = vunpack.c.l.b16 %v1199
        %v1223 = vunpack.c.l.b16 %v1200
        %v1224 = vunpack.c.l.b16 %v1201
        %v1225 = vunpack.c.l.b16 %v1202
        %v1226 = vpack.c.b16 %v1219, %v1218
        %v1227 = vpack.c.b16 %v1221, %v1220
        %v1228 = vpack.c.b16 %v1223, %v1222
        %v1229 = vpack.c.b16 %v1225, %v1224
        %vm1234 = vcmask 523264
        %v1236 = vsel %vm1234, %v1194, 0
        %1238 = vmatprep.subr.bf16.mxu0 0
        %1239 = vmatpush1.bf16.msra.mxu0 0
        %1240 = vmatprep.subr.bf16.mxu0 0
        %1241 = vmatpush1.bf16.msra.mxu0 0
        %1242 = vmatprep.subr.bf16.mxu0 0
        %1243 = vmatpush1.bf16.msra.mxu0 0
        %1244 = vmatprep.subr.bf16.mxu0 0
        %1245 = vmatpush1.bf16.msra.mxu0 0
        %1246 = vmatprep.subr.bf16.mxu0 0
        %1247 = vmatpush1.bf16.msra.mxu0 %v1229
        %1248 = vmatprep.subr.bf16.mxu0 0
        %1249 = vmatpush1.bf16.msra.mxu0 %v1228
        %1250 = vmatprep.subr.bf16.mxu0 0
        %1251 = vmatpush1.bf16.msra.mxu0 %v1227
        %1252 = vmatprep.subr.bf16.mxu0 0
        %1253 = vmatpush1.bf16.msra.mxu0 %v1226
        %1254 = vmatprep.subr.bf16.mxu0 0
        %1255 = vmatpush2.bf16.msra.mxu0 0
        %1256 = vmatprep.subr.bf16.mxu0 0
        %1257 = vmatpush2.bf16.msra.mxu0 0
        %1258 = vmatprep.subr.bf16.mxu0 0
        %1259 = vmatpush2.bf16.msra.mxu0 0
        %1260 = vmatprep.subr.bf16.mxu0 0
        %1261 = vmatpush2.bf16.msra.mxu0 0
        %1262 = vmatprep.subr.bf16.mxu0 0
        %1263 = vmatpush2.bf16.msra.mxu0 0
        %1264 = vmatprep.subr.bf16.mxu0 0
        %1265 = vmatpush2.bf16.msra.mxu0 0
        %1266 = vmatprep.subr.bf16.mxu0 0
        %1267 = vmatpush2.bf16.msra.mxu0 0
        %1268 = vmatprep.subr.bf16.mxu0 0
        %1269 = vmatpush2.bf16.msra.mxu0 0
        %1270 = vmatprep.mubr.bf16.mxu0 0
        %1271 = vmatmul.mubr.bf16.gmra.mxu0 %v1236
        %v1272 = vpop.f32.mrf.mxu0
        %v1273 = vadd.f32 %v1208, %v1272
        %v1274 = vpop.f32.mrf.mxu0
        %v1275 = vpop.f32.mrf.mxu0
        %v1276 = vpop.f32.mrf.mxu0
        %1277 = vdwg.mxu0
        %v1278 = vadd.f32 %v1125, %v1273
        %v1279 = vsel %vm515, %v1278, 0.0
        %1280 = vadd.xlane.f32.xlu0 %v1279
        %v1281 = vpop.xlane.xlu0 %1280
        %v1282 = vmul.f32 %v1281, %v1099
        %v1283 = vsub.f32 %v1278, %v1282
        %v1284 = vmul.f32 %v1283, %v1283
        %v1285 = vsel %vm515, %v1284, 0.0
        %1286 = vadd.xlane.f32.xlu0 %v1285
        %v1287 = vpop.xlane.xlu0 %1286
        %v1288 = vmul.f32 %v1287, %v1099
        %v1289 = vadd.f32 %v1288, 1e-05
        %v1290 = vrsqrt.pop %v1289
        %v1291 = vmul.f32 %v1283, %v1290
        %v1292 = vld [vmem:[%s11] sm:$0x1]
        %v1294 = vlaneseq
        %v1295 = vshrl.u32 %v1294, 7
        %v1296 = vsub.s32 0, %v1295
        %v1297 = vrot.slane %v1292, %v1296
        %v1299 = vmul.f32 %v1291, %v1297
        %v1300 = vld [vmem:[%s12] sm:$0x1]
        %v1302 = vlaneseq
        %v1303 = vshrl.u32 %v1302, 7
        %v1304 = vsub.s32 0, %v1303
        %v1305 = vrot.slane %v1300, %v1304
        %v1307 = vadd.f32 %v1299, %v1305
        %1308 = vst.msk [vmem:[%s477] sm:$0xff] %vm515, %v1307
        %s1309 = sand.u32 %s319, 1
        %s1310 = scalar_lea.sflag [#allocation4], %s1309
        %s1311 = sand.u32 %s319, 1
        %s1312 = smul.addr %s1311, 8
        %s1313 = scalar_lea.vmem [#allocation5], %s1312
        %s1314 = sand.u32 %s345, 1
        %s1315 = scalar_lea.sflag [#allocation7], %s1314
        %s1316 = sand.u32 %s345, 1
        %s1317 = smul.addr %s1316, 8
        %s1318 = scalar_lea.vmem [#allocation6], %s1317
        // Predicated region
        $region77: #{tpu_custom_call.1} parent=71 // pred_check
          %p1319 = pneg %p329
        $region78: #{tpu_custom_call.1} parent=71 // pred_check_branch
          %1321 = sbr.rel (%p1319) target = $region80
        $region79: #{tpu_custom_call.1} parent=71 // pred_region
          %s1323 = ssub.s32 128, 128
          %1324 = vsyncadd %s1310, %s1323
          %s1325 = smul.addr %s33, 128
          %s1326 = scalar_lea.hbm %s13, %s1325
          %s1328 = sshll.u32 %s1313, 4
          %s1329 = int_to_ptr.vmem [resolvable:$true] %s1328
          %1331 = dma.vmem_to_hbm [thread:$0]  %s1329, 128, %s1326, %s1310
        $region80: #{tpu_custom_call.1} parent=71 // pred_fallthru
          _
        // Predicated region
        $region81: #{tpu_custom_call.1} parent=71 // pred_check
          %p1332 = pneg %p355
        $region82: #{tpu_custom_call.1} parent=71 // pred_check_branch
          %1334 = sbr.rel (%p1332) target = $region84
        $region83: #{tpu_custom_call.1} parent=71 // pred_region
          %s1336 = ssub.s32 128, 128
          %1337 = vsyncadd %s1315, %s1336
          %s1338 = smul.addr %s33, 128
          %s1339 = scalar_lea.hbm %s14, %s1338
          %s1341 = sshll.u32 %s1318, 4
          %s1342 = int_to_ptr.vmem [resolvable:$true] %s1341
          %1344 = dma.vmem_to_hbm [thread:$0]  %s1342, 128, %s1339, %s1315
        $region84: #{tpu_custom_call.1} parent=71 // pred_fallthru
          _
      $region72: #{tpu_custom_call.1} parent=5 // pred_fallthru
        _
      %p1345 = scmp.le.s32.totalorder 2, %s28
      // Predicated region
      $region85: #{tpu_custom_call.1} parent=5 // pred_check
        %p1346 = pneg %p1345
      $region86: #{tpu_custom_call.1} parent=5 // pred_check_branch
        %1348 = sbr.rel (%p1346) target = $region88
      $region87: #{tpu_custom_call.1} parent=5 // pred_region
        %s1349 = ssub.s32 %s28, 2
        // Predicated region
        $region89: #{tpu_custom_call.1} parent=87 // pred_check
          %p1350 = pneg %p335
        $region90: #{tpu_custom_call.1} parent=87 // pred_check_branch
          %1352 = sbr.rel (%p1350) target = $region92
        $region91: #{tpu_custom_call.1} parent=87 // pred_region
          %s1353 = sand.u32 %s320, 1
          %s1354 = scalar_lea.sflag [#allocation4], %s1353
          %s1355 = sand.u32 %s320, 1
          %s1356 = smul.addr %s1355, 8
          %s1357 = scalar_lea.vmem [#allocation5], %s1356
          %1358 = dma.done %s1354, 128
        $region92: #{tpu_custom_call.1} parent=87 // pred_fallthru
          _
        // Predicated region
        $region93: #{tpu_custom_call.1} parent=87 // pred_check
          %p1359 = pneg %p361
        $region94: #{tpu_custom_call.1} parent=87 // pred_check_branch
          %1361 = sbr.rel (%p1359) target = $region96
        $region95: #{tpu_custom_call.1} parent=87 // pred_region
          %s1362 = sand.u32 %s346, 1
          %s1363 = scalar_lea.sflag [#allocation7], %s1362
          %s1364 = sand.u32 %s346, 1
          %s1365 = smul.addr %s1364, 8
          %s1366 = scalar_lea.vmem [#allocation6], %s1365
          %1367 = dma.done %s1363, 128
        $region96: #{tpu_custom_call.1} parent=87 // pred_fallthru
          _
      $region88: #{tpu_custom_call.1} parent=5 // pred_fallthru
        _
    $region6: #{tpu_custom_call.1} parent=1 // loop_footer
      %s32 = sadd.s32 1, %s28
    $region7: #{tpu_custom_call.1} parent=1 // loop_footer_branch
      %27 = sbr.rel target = $region3
    $region8: #{tpu_custom_call.1} parent=1 // loop_exit
      _
    %1368 = vsyncpa [#allocation3], 1
    %s1369 = scalar_lea.sflag [#allocation3], 1
    %1370 = vsyncpa %s1369, 1
    %1371 = vsyncpa [#allocation4], 1
    %s1372 = scalar_lea.sflag [#allocation4], 1
    %1373 = vsyncpa %s1372, 1
    %1374 = vsyncpa [#allocation7], 1
    %s1375 = scalar_lea.sflag [#allocation7], 1
    %1376 = vsyncpa %s1375, 1

// kernel: tpu_custom_call.1
$region0: #{tpu_custom_call.1}
  #allocation0 [shape = 'u32[]', space=smem, size = 0x4, offset = 0x4, fixed_abs, tag = 'smem constant byte address 0x4 - core index']
  #allocation1 [shape = 'u32[144,128]{1,0:T(1,128)}', space=vmem, size = 0x12000, scoped, tag = 'internal scratch']
  %s0 = inlined_call_operand.vmem [shape: f32[2,8,32], index: 0, kind: input, shape index: {}]
  %s1 = inlined_call_operand.vmem [shape: bf16[32,96], index: 1, kind: input, shape index: {}]
  %s2 = inlined_call_operand.vmem [shape: f32[1,96], index: 2, kind: input, shape index: {}]
  %s3 = inlined_call_operand.vmem [shape: bf16[32,32], index: 3, kind: input, shape index: {}]
  %s4 = inlined_call_operand.vmem [shape: f32[1,32], index: 4, kind: input, shape index: {}]
  %s5 = inlined_call_operand.hbm [shape: bf16[32,64], index: 5, kind: input, shape index: {}]
  %s6 = inlined_call_operand.vmem [shape: f32[1,64], index: 6, kind: input, shape index: {}]
  %s7 = inlined_call_operand.vmem [shape: bf16[64,32], index: 7, kind: input, shape index: {}]
  %s8 = inlined_call_operand.vmem [shape: f32[1,32], index: 8, kind: input, shape index: {}]
  %s9 = inlined_call_operand.vmem [shape: f32[1,32], index: 9, kind: input, shape index: {}]
  %s10 = inlined_call_operand.vmem [shape: f32[1,32], index: 10, kind: input, shape index: {}]
  %s11 = inlined_call_operand.vmem [shape: f32[1,32], index: 11, kind: input, shape index: {}]
  %s12 = inlined_call_operand.vmem [shape: f32[1,32], index: 12, kind: input, shape index: {}]
  %s13 = inlined_call_operand.hbm [shape: f32[2,8,32], index: 13, kind: output, shape index: {0}]
  %s14 = inlined_call_operand.hbm [shape: f32[2,8,8], index: 14, kind: output, shape index: {1}]
  %15 = xla_tuple %s13, %s14
  %s16 = sld [smem:[#allocation0]]
  $region97: #{tpu_custom_call.1} parent=0
    _
  %s18 = ssub.s32 1, %s16
  %s19 = scalar_select 0, %s18, %s16
  $region1: #{tpu_custom_call.1} parent=0
    #allocation2 [shape = 'u8[8192]{0}', space=vmem, size = 0x2000, scoped, tag = 'input window, operand 5, single buffered']
    #allocation3 [shape = 's32[2]{0}', space=sflag, size = 0x8, scoped, tag = 'scoped memory for tpu_custom_call.1']
    #allocation4 [shape = 's32[2]{0}', space=sflag, size = 0x8, scoped, tag = 'scoped memory for tpu_custom_call.1']
    #allocation5 [shape = 'u8[8192]{0}', space=vmem, size = 0x2000, scoped, tag = 'output window, operand 0']
    #allocation6 [shape = 'u8[8192]{0}', space=vmem, size = 0x2000, scoped, tag = 'output window, operand 1']
    #allocation7 [shape = 's32[2]{0}', space=sflag, size = 0x8, scoped, tag = 'scoped memory for tpu_custom_call.1']
    %20 = vsyncpa [#allocation3], 0
    %21 = vsyncpa [#allocation4], 0
    %s22 = scalar_lea.sflag [#allocation4], 1
    %23 = vsyncpa %s22, 0
    %24 = vsyncpa [#allocation7], 0
    %s25 = scalar_lea.sflag [#allocation7], 1
    %26 = vsyncpa %s25, 0
    loop: start=0, step=1, limit=4
    $region2: #{tpu_custom_call.1} parent=1 // loop_pre_header
      _
    $region3: #{tpu_custom_call.1} parent=1 // loop_header
      %s28 = sphi 0, %s32
      %p29 = scmp.ge.s32.totalorder %s28, 4
      %s38 = sphi 0, %s40
      %s41 = sphi 0, %s38
      %s42 = sphi 0, %s41
      %s58 = sphi 0, %s42
      %s62 = sphi 0, %s62
      %s64 = sphi 0, %s62
      %s65 = sphi 0, %s64
      %s79 = sphi 0, %s65
      %s83 = sphi 0, %s83
      %s85 = sphi 0, %s83
      %s86 = sphi 0, %s85
      %s100 = sphi 0, %s86
      %s104 = sphi 0, %s104
      %s106 = sphi 0, %s104
      %s107 = sphi 0, %s106
      %s121 = sphi 0, %s107
      %s125 = sphi 0, %s125
      %s127 = sphi 0, %s125
      %s128 = sphi 0, %s127
      %s142 = sphi 0, %s128
      %s146 = sphi 0, %s146
      %s148 = sphi 0, %s146
      %s149 = sphi 0, %s148
      %s163 = sphi 0, %s149
      %s167 = sphi 0, %s167
      %s169 = sphi 0, %s167
      %s170 = sphi 0, %s169
      %s184 = sphi 0, %s170
      %s188 = sphi 0, %s188
      %s190 = sphi 0, %s188
      %s191 = sphi 0, %s190
      %s205 = sphi 0, %s191
      %s209 = sphi 0, %s209
      %s211 = sphi 0, %s209
      %s212 = sphi 0, %s211
      %s226 = sphi 0, %s212
      %s230 = sphi 0, %s230
      %s232 = sphi 0, %s230
      %s233 = sphi 0, %s232
      %s247 = sphi 0, %s233
      %s251 = sphi 0, %s251
      %s253 = sphi 0, %s251
      %s254 = sphi 0, %s253
      %s268 = sphi 0, %s254
      %s272 = sphi 0, %s272
      %s274 = sphi 0, %s272
      %s275 = sphi 0, %s274
      %s289 = sphi 0, %s275
      %s293 = sphi 0, %s293
      %s295 = sphi 0, %s293
      %s296 = sphi 0, %s295
      %s310 = sphi 0, %s296
      %s316 = sphi 0, %s318
      %s319 = sphi 0, %s316
      %s320 = sphi 0, %s319
      %s336 = sphi 0, %s320
      %s342 = sphi 0, %s344
      %s345 = sphi 0, %s342
      %s346 = sphi 0, %s345
      %s362 = sphi 0, %s346
    $region4: #{tpu_custom_call.1} parent=1 // loop_header_branch
      %31 = sbr.rel (%p29) target = $region8
    $region5: #{tpu_custom_call.1} parent=1 // loop_body
      %s33 = ssub.s32 %s28, 1
      %s34 = ssub.s32 %s28, 2
      %s35 = sadd.s32 %s28, 1
      %s36 = ssub.s32 %s28, %s35
      %p37 = scmp.eq.s32.totalorder %s36, 0
      %s39 = sadd.s32 %s38, 1
      %s40 = scalar_select %p37, %s38, %s39
      %p43 = pneg %p37
      %p44 = scmp.eq.s32.totalorder %s28, 1
      %p45 = por %p43, %p44
      %p46 = scmp.ne.s32.totalorder %s38, %s41
      %p47 = scmp.eq.s32.totalorder %s28, 0
      %p48 = por %p46, %p47
      %p49 = scmp.ne.s32.totalorder %s38, %s41
      %p50 = scmp.eq.s32.totalorder %s33, 1
      %p51 = por %p49, %p50
      %p52 = scmp.ne.s32.totalorder %s41, %s42
      %p53 = scmp.eq.s32.totalorder %s33, 0
      %p54 = por %p52, %p53
      %p55 = scmp.ne.s32.totalorder %s41, %s42
      %p56 = scmp.eq.s32.totalorder %s34, 1
      %p57 = por %p55, %p56
      %p59 = scmp.ne.s32.totalorder %s42, %s58
      %p60 = scmp.eq.s32.totalorder %s34, 0
      %p61 = por %p59, %p60
      %s63 = sadd.s32 %s62, 1
      %p66 = scmp.eq.s32.totalorder %s28, 1
      %p67 = scmp.ne.s32.totalorder %s62, %s64
      %p68 = scmp.eq.s32.totalorder %s28, 0
      %p69 = por %p67, %p68
      %p70 = scmp.ne.s32.totalorder %s62, %s64
      %p71 = scmp.eq.s32.totalorder %s33, 1
      %p72 = por %p70, %p71
      %p73 = scmp.ne.s32.totalorder %s64, %s65
      %p74 = scmp.eq.s32.totalorder %s33, 0
      %p75 = por %p73, %p74
      %p76 = scmp.ne.s32.totalorder %s64, %s65
      %p77 = scmp.eq.s32.totalorder %s34, 1
      %p78 = por %p76, %p77
      %p80 = scmp.ne.s32.totalorder %s65, %s79
      %p81 = scmp.eq.s32.totalorder %s34, 0
      %p82 = por %p80, %p81
      %s84 = sadd.s32 %s83, 1
      %p87 = scmp.eq.s32.totalorder %s28, 1
      %p88 = scmp.ne.s32.totalorder %s83, %s85
      %p89 = scmp.eq.s32.totalorder %s28, 0
      %p90 = por %p88, %p89
      %p91 = scmp.ne.s32.totalorder %s83, %s85
      %p92 = scmp.eq.s32.totalorder %s33, 1
      %p93 = por %p91, %p92
      %p94 = scmp.ne.s32.totalorder %s85, %s86
      %p95 = scmp.eq.s32.totalorder %s33, 0
      %p96 = por %p94, %p95
      %p97 = scmp.ne.s32.totalorder %s85, %s86
      %p98 = scmp.eq.s32.totalorder %s34, 1
      %p99 = por %p97, %p98
      %p101 = scmp.ne.s32.totalorder %s86, %s100
      %p102 = scmp.eq.s32.totalorder %s34, 0
      %p103 = por %p101, %p102
      %s105 = sadd.s32 %s104, 1
      %p108 = scmp.eq.s32.totalorder %s28, 1
      %p109 = scmp.ne.s32.totalorder %s104, %s106
      %p110 = scmp.eq.s32.totalorder %s28, 0
      %p111 = por %p109, %p110
      %p112 = scmp.ne.s32.totalorder %s104, %s106
      %p113 = scmp.eq.s32.totalorder %s33, 1
      %p114 = por %p112, %p113
      %p115 = scmp.ne.s32.totalorder %s106, %s107
      %p116 = scmp.eq.s32.totalorder %s33, 0
      %p117 = por %p115, %p116
      %p118 = scmp.ne.s32.totalorder %s106, %s107
      %p119 = scmp.eq.s32.totalorder %s34, 1
      %p120 = por %p118, %p119
      %p122 = scmp.ne.s32.totalorder %s107, %s121
      %p123 = scmp.eq.s32.totalorder %s34, 0
      %p124 = por %p122, %p123
      %s126 = sadd.s32 %s125, 1
      %p129 = scmp.eq.s32.totalorder %s28, 1
      %p130 = scmp.ne.s32.totalorder %s125, %s127
      %p131 = scmp.eq.s32.totalorder %s28, 0
      %p132 = por %p130, %p131
      %p133 = scmp.ne.s32.totalorder %s125, %s127
      %p134 = scmp.eq.s32.totalorder %s33, 1
      %p135 = por %p133, %p134
      %p136 = scmp.ne.s32.totalorder %s127, %s128
      %p137 = scmp.eq.s32.totalorder %s33, 0
      %p138 = por %p136, %p137
      %p139 = scmp.ne.s32.totalorder %s127, %s128
      %p140 = scmp.eq.s32.totalorder %s34, 1
      %p141 = por %p139, %p140
      %p143 = scmp.ne.s32.totalorder %s128, %s142
      %p144 = scmp.eq.s32.totalorder %s34, 0
      %p145 = por %p143, %p144
      %s147 = sadd.s32 %s146, 1
      %p150 = scmp.eq.s32.totalorder %s28, 1
      %p151 = scmp.ne.s32.totalorder %s146, %s148
      %p152 = scmp.eq.s32.totalorder %s28, 0
      %p153 = por %p151, %p152
      %p154 = scmp.ne.s32.totalorder %s146, %s148
      %p155 = scmp.eq.s32.totalorder %s33, 1
      %p156 = por %p154, %p155
      %p157 = scmp.ne.s32.totalorder %s148, %s149
      %p158 = scmp.eq.s32.totalorder %s33, 0
      %p159 = por %p157, %p158
      %p160 = scmp.ne.s32.totalorder %s148, %s149
      %p161 = scmp.eq.s32.totalorder %s34, 1
      %p162 = por %p160, %p161
      %p164 = scmp.ne.s32.totalorder %s149, %s163
      %p165 = scmp.eq.s32.totalorder %s34, 0
      %p166 = por %p164, %p165
      %s168 = sadd.s32 %s167, 1
      %p171 = scmp.eq.s32.totalorder %s28, 1
      %p172 = scmp.ne.s32.totalorder %s167, %s169
      %p173 = scmp.eq.s32.totalorder %s28, 0
      %p174 = por %p172, %p173
      %p175 = scmp.ne.s32.totalorder %s167, %s169
      %p176 = scmp.eq.s32.totalorder %s33, 1
      %p177 = por %p175, %p176
      %p178 = scmp.ne.s32.totalorder %s169, %s170
      %p179 = scmp.eq.s32.totalorder %s33, 0
      %p180 = por %p178, %p179
      %p181 = scmp.ne.s32.totalorder %s169, %s170
      %p182 = scmp.eq.s32.totalorder %s34, 1
      %p183 = por %p181, %p182
      %p185 = scmp.ne.s32.totalorder %s170, %s184
      %p186 = scmp.eq.s32.totalorder %s34, 0
      %p187 = por %p185, %p186
      %s189 = sadd.s32 %s188, 1
      %p192 = scmp.eq.s32.totalorder %s28, 1
      %p193 = scmp.ne.s32.totalorder %s188, %s190
      %p194 = scmp.eq.s32.totalorder %s28, 0
      %p195 = por %p193, %p194
      %p196 = scmp.ne.s32.totalorder %s188, %s190
      %p197 = scmp.eq.s32.totalorder %s33, 1
      %p198 = por %p196, %p197
      %p199 = scmp.ne.s32.totalorder %s190, %s191
      %p200 = scmp.eq.s32.totalorder %s33, 0
      %p201 = por %p199, %p200
      %p202 = scmp.ne.s32.totalorder %s190, %s191
      %p203 = scmp.eq.s32.totalorder %s34, 1
      %p204 = por %p202, %p203
      %p206 = scmp.ne.s32.totalorder %s191, %s205
      %p207 = scmp.eq.s32.totalorder %s34, 0
      %p208 = por %p206, %p207
      %s210 = sadd.s32 %s209, 1
      %p213 = scmp.eq.s32.totalorder %s28, 1
      %p214 = scmp.ne.s32.totalorder %s209, %s211
      %p215 = scmp.eq.s32.totalorder %s28, 0
      %p216 = por %p214, %p215
      %p217 = scmp.ne.s32.totalorder %s209, %s211
      %p218 = scmp.eq.s32.totalorder %s33, 1
      %p219 = por %p217, %p218
      %p220 = scmp.ne.s32.totalorder %s211, %s212
      %p221 = scmp.eq.s32.totalorder %s33, 0
      %p222 = por %p220, %p221
      %p223 = scmp.ne.s32.totalorder %s211, %s212
      %p224 = scmp.eq.s32.totalorder %s34, 1
      %p225 = por %p223, %p224
      %p227 = scmp.ne.s32.totalorder %s212, %s226
      %p228 = scmp.eq.s32.totalorder %s34, 0
      %p229 = por %p227, %p228
      %s231 = sadd.s32 %s230, 1
      %p234 = scmp.eq.s32.totalorder %s28, 1
      %p235 = scmp.ne.s32.totalorder %s230, %s232
      %p236 = scmp.eq.s32.totalorder %s28, 0
      %p237 = por %p235, %p236
      %p238 = scmp.ne.s32.totalorder %s230, %s232
      %p239 = scmp.eq.s32.totalorder %s33, 1
      %p240 = por %p238, %p239
      %p241 = scmp.ne.s32.totalorder %s232, %s233
      %p242 = scmp.eq.s32.totalorder %s33, 0
      %p243 = por %p241, %p242
      %p244 = scmp.ne.s32.totalorder %s232, %s233
      %p245 = scmp.eq.s32.totalorder %s34, 1
      %p246 = por %p244, %p245
      %p248 = scmp.ne.s32.totalorder %s233, %s247
      %p249 = scmp.eq.s32.totalorder %s34, 0
      %p250 = por %p248, %p249
      %s252 = sadd.s32 %s251, 1
      %p255 = scmp.eq.s32.totalorder %s28, 1
      %p256 = scmp.ne.s32.totalorder %s251, %s253
      %p257 = scmp.eq.s32.totalorder %s28, 0
      %p258 = por %p256, %p257
      %p259 = scmp.ne.s32.totalorder %s251, %s253
      %p260 = scmp.eq.s32.totalorder %s33, 1
      %p261 = por %p259, %p260
      %p262 = scmp.ne.s32.totalorder %s253, %s254
      %p263 = scmp.eq.s32.totalorder %s33, 0
      %p264 = por %p262, %p263
      %p265 = scmp.ne.s32.totalorder %s253, %s254
      %p266 = scmp.eq.s32.totalorder %s34, 1
      %p267 = por %p265, %p266
      %p269 = scmp.ne.s32.totalorder %s254, %s268
      %p270 = scmp.eq.s32.totalorder %s34, 0
      %p271 = por %p269, %p270
      %s273 = sadd.s32 %s272, 1
      %p276 = scmp.eq.s32.totalorder %s28, 1
      %p277 = scmp.ne.s32.totalorder %s272, %s274
      %p278 = scmp.eq.s32.totalorder %s28, 0
      %p279 = por %p277, %p278
      %p280 = scmp.ne.s32.totalorder %s272, %s274
      %p281 = scmp.eq.s32.totalorder %s33, 1
      %p282 = por %p280, %p281
      %p283 = scmp.ne.s32.totalorder %s274, %s275
      %p284 = scmp.eq.s32.totalorder %s33, 0
      %p285 = por %p283, %p284
      %p286 = scmp.ne.s32.totalorder %s274, %s275
      %p287 = scmp.eq.s32.totalorder %s34, 1
      %p288 = por %p286, %p287
      %p290 = scmp.ne.s32.totalorder %s275, %s289
      %p291 = scmp.eq.s32.totalorder %s34, 0
      %p292 = por %p290, %p291
      %s294 = sadd.s32 %s293, 1
      %p297 = scmp.eq.s32.totalorder %s28, 1
      %p298 = scmp.ne.s32.totalorder %s293, %s295
      %p299 = scmp.eq.s32.totalorder %s28, 0
      %p300 = por %p298, %p299
      %p301 = scmp.ne.s32.totalorder %s293, %s295
      %p302 = scmp.eq.s32.totalorder %s33, 1
      %p303 = por %p301, %p302
      %p304 = scmp.ne.s32.totalorder %s295, %s296
      %p305 = scmp.eq.s32.totalorder %s33, 0
      %p306 = por %p304, %p305
      %p307 = scmp.ne.s32.totalorder %s295, %s296
      %p308 = scmp.eq.s32.totalorder %s34, 1
      %p309 = por %p307, %p308
      %p311 = scmp.ne.s32.totalorder %s296, %s310
      %p312 = scmp.eq.s32.totalorder %s34, 0
      %p313 = por %p311, %p312
      %s314 = ssub.s32 %s28, %s35
      %p315 = scmp.eq.s32.totalorder %s314, 0
      %s317 = sadd.s32 %s316, 1
      %s318 = scalar_select %p315, %s316, %s317
      %p321 = pneg %p315
      %p322 = scmp.eq.s32.totalorder %s28, 1
      %p323 = por %p321, %p322
      %p324 = scmp.ne.s32.totalorder %s316, %s319
      %p325 = scmp.eq.s32.totalorder %s28, 0
      %p326 = por %p324, %p325
      %p327 = scmp.ne.s32.totalorder %s316, %s319
      %p328 = scmp.eq.s32.totalorder %s33, 1
      %p329 = por %p327, %p328
      %p330 = scmp.ne.s32.totalorder %s319, %s320
      %p331 = scmp.eq.s32.totalorder %s33, 0
      %p332 = por %p330, %p331
      %p333 = scmp.ne.s32.totalorder %s319, %s320
      %p334 = scmp.eq.s32.totalorder %s34, 1
      %p335 = por %p333, %p334
      %p337 = scmp.ne.s32.totalorder %s320, %s336
      %p338 = scmp.eq.s32.totalorder %s34, 0
      %p339 = por %p337, %p338
      %s340 = ssub.s32 %s28, %s35
      %p341 = scmp.eq.s32.totalorder %s340, 0
      %s343 = sadd.s32 %s342, 1
      %s344 = scalar_select %p341, %s342, %s343
      %p347 = pneg %p341
      %p348 = scmp.eq.s32.totalorder %s28, 1
      %p349 = por %p347, %p348
      %p350 = scmp.ne.s32.totalorder %s342, %s345
      %p351 = scmp.eq.s32.totalorder %s28, 0
      %p352 = por %p350, %p351
      %p353 = scmp.ne.s32.totalorder %s342, %s345
      %p354 = scmp.eq.s32.totalorder %s33, 1
      %p355 = por %p353, %p354
      %p356 = scmp.ne.s32.totalorder %s345, %s346
      %p357 = scmp.eq.s32.totalorder %s33, 0
      %p358 = por %p356, %p357
      %p359 = scmp.ne.s32.totalorder %s345, %s346
      %p360 = scmp.eq.s32.totalorder %s34, 1
      %p361 = por %p359, %p360
      %p363 = scmp.ne.s32.totalorder %s346, %s362
      %p364 = scmp.eq.s32.totalorder %s34, 0
      %p365 = por %p363, %p364
      %p366 = scmp.le.s32.totalorder 1, %s28
      %p367 = scmp.lt.s32.totalorder %s28, 3
      %p368 = pnand %p366, %p367
      %p369 = pneg %p368
      // Predicated region
      $region9: #{tpu_custom_call.1} parent=5 // pred_check
        _
      $region10: #{tpu_custom_call.1} parent=5 // pred_check_branch
        %371 = sbr.rel (%p368) target = $region12
      $region11: #{tpu_custom_call.1} parent=5 // pred_region
        %s372 = ssub.s32 %s28, 1
        // Predicated region
        $region13: #{tpu_custom_call.1} parent=11 // pred_check
          %p373 = pneg %p75
        $region14: #{tpu_custom_call.1} parent=11 // pred_check_branch
          %375 = sbr.rel (%p373) target = $region16
        $region15: #{tpu_custom_call.1} parent=11 // pred_region
          _
        $region16: #{tpu_custom_call.1} parent=11 // pred_fallthru
          _
        // Predicated region
        $region17: #{tpu_custom_call.1} parent=11 // pred_check
          %p376 = pneg %p96
        $region18: #{tpu_custom_call.1} parent=11 // pred_check_branch
          %378 = sbr.rel (%p376) target = $region20
        $region19: #{tpu_custom_call.1} parent=11 // pred_region
          _
        $region20: #{tpu_custom_call.1} parent=11 // pred_fallthru
          _
        // Predicated region
        $region21: #{tpu_custom_call.1} parent=11 // pred_check
          %p379 = pneg %p117
        $region22: #{tpu_custom_call.1} parent=11 // pred_check_branch
          %381 = sbr.rel (%p379) target = $region24
        $region23: #{tpu_custom_call.1} parent=11 // pred_region
          _
        $region24: #{tpu_custom_call.1} parent=11 // pred_fallthru
          _
        // Predicated region
        $region25: #{tpu_custom_call.1} parent=11 // pred_check
          %p382 = pneg %p138
        $region26: #{tpu_custom_call.1} parent=11 // pred_check_branch
          %384 = sbr.rel (%p382) target = $region28
        $region27: #{tpu_custom_call.1} parent=11 // pred_region
          _
        $region28: #{tpu_custom_call.1} parent=11 // pred_fallthru
          _
        // Predicated region
        $region29: #{tpu_custom_call.1} parent=11 // pred_check
          %p385 = pneg %p159
        $region30: #{tpu_custom_call.1} parent=11 // pred_check_branch
          %387 = sbr.rel (%p385) target = $region32
        $region31: #{tpu_custom_call.1} parent=11 // pred_region
          %s389 = ssub.s32 256, 256
          %390 = vsyncadd [#allocation3], %s389
          %s391 = sshll.u32 [#allocation2], 4
          %s392 = int_to_ptr.vmem [resolvable:$true] %s391
          %397 = dma.hbm_to_vmem [thread:$0]  %s5, 256, %s392, [#allocation3], 64, 64, 4
        $region32: #{tpu_custom_call.1} parent=11 // pred_fallthru
          _
        // Predicated region
        $region33: #{tpu_custom_call.1} parent=11 // pred_check
          %p398 = pneg %p180
        $region34: #{tpu_custom_call.1} parent=11 // pred_check_branch
          %400 = sbr.rel (%p398) target = $region36
        $region35: #{tpu_custom_call.1} parent=11 // pred_region
          _
        $region36: #{tpu_custom_call.1} parent=11 // pred_fallthru
          _
        // Predicated region
        $region37: #{tpu_custom_call.1} parent=11 // pred_check
          %p401 = pneg %p201
        $region38: #{tpu_custom_call.1} parent=11 // pred_check_branch
          %403 = sbr.rel (%p401) target = $region40
        $region39: #{tpu_custom_call.1} parent=11 // pred_region
          _
        $region40: #{tpu_custom_call.1} parent=11 // pred_fallthru
          _
        // Predicated region
        $region41: #{tpu_custom_call.1} parent=11 // pred_check
          %p404 = pneg %p222
        $region42: #{tpu_custom_call.1} parent=11 // pred_check_branch
          %406 = sbr.rel (%p404) target = $region44
        $region43: #{tpu_custom_call.1} parent=11 // pred_region
          _
        $region44: #{tpu_custom_call.1} parent=11 // pred_fallthru
          _
        // Predicated region
        $region45: #{tpu_custom_call.1} parent=11 // pred_check
          %p407 = pneg %p243
        $region46: #{tpu_custom_call.1} parent=11 // pred_check_branch
          %409 = sbr.rel (%p407) target = $region48
        $region47: #{tpu_custom_call.1} parent=11 // pred_region
          _
        $region48: #{tpu_custom_call.1} parent=11 // pred_fallthru
          _
        // Predicated region
        $region49: #{tpu_custom_call.1} parent=11 // pred_check
          %p410 = pneg %p264
        $region50: #{tpu_custom_call.1} parent=11 // pred_check_branch
          %412 = sbr.rel (%p410) target = $region52
        $region51: #{tpu_custom_call.1} parent=11 // pred_region
          _
        $region52: #{tpu_custom_call.1} parent=11 // pred_fallthru
          _
        // Predicated region
        $region53: #{tpu_custom_call.1} parent=11 // pred_check
          %p413 = pneg %p285
        $region54: #{tpu_custom_call.1} parent=11 // pred_check_branch
          %415 = sbr.rel (%p413) target = $region56
        $region55: #{tpu_custom_call.1} parent=11 // pred_region
          _
        $region56: #{tpu_custom_call.1} parent=11 // pred_fallthru
          _
        // Predicated region
        $region57: #{tpu_custom_call.1} parent=11 // pred_check
          %p416 = pneg %p306
        $region58: #{tpu_custom_call.1} parent=11 // pred_check_branch
          %418 = sbr.rel (%p416) target = $region60
        $region59: #{tpu_custom_call.1} parent=11 // pred_region
          _
        $region60: #{tpu_custom_call.1} parent=11 // pred_fallthru
          _
      $region12: #{tpu_custom_call.1} parent=5 // pred_fallthru
        _
      %p419 = scmp.lt.s32.totalorder %s28, 2
      // Predicated region
      $region61: #{tpu_custom_call.1} parent=5 // pred_check
        %p420 = pneg %p419
      $region62: #{tpu_custom_call.1} parent=5 // pred_check_branch
        %422 = sbr.rel (%p420) target = $region64
      $region63: #{tpu_custom_call.1} parent=5 // pred_region
        // Predicated region
        $region65: #{tpu_custom_call.1} parent=63 // pred_check
          %p423 = pneg %p48
        $region66: #{tpu_custom_call.1} parent=63 // pred_check_branch
          %425 = sbr.rel (%p423) target = $region68
        $region67: #{tpu_custom_call.1} parent=63 // pred_region
          %p426 = scmp.lt.s32.totalorder %s28, 1
          %s427 = scalar_select %p426, %s28, 1
          %s428 = smul.addr %s427, 8
          %s429 = scalar_lea.vmem %s0, %s428
        $region68: #{tpu_custom_call.1} parent=63 // pred_fallthru
          _
      $region64: #{tpu_custom_call.1} parent=5 // pred_fallthru
        _
      %p430 = scmp.le.s32.totalorder 1, %s28
      %p431 = scmp.lt.s32.totalorder %s28, 3
      %p432 = pnand %p430, %p431
      %p433 = pneg %p432
      // Predicated region
      $region69: #{tpu_custom_call.1} parent=5 // pred_check
        _
      $region70: #{tpu_custom_call.1} parent=5 // pred_check_branch
        %435 = sbr.rel (%p432) target = $region72
      $region71: #{tpu_custom_call.1} parent=5 // pred_region
        %s436 = ssub.s32 %s28, 1
        // Predicated region
        $region73: #{tpu_custom_call.1} parent=71 // pred_check
          %p437 = pneg %p159
        $region74: #{tpu_custom_call.1} parent=71 // pred_check_branch
          %439 = sbr.rel (%p437) target = $region76
        $region75: #{tpu_custom_call.1} parent=71 // pred_region
          %440 = dma.done [#allocation3], 256
        $region76: #{tpu_custom_call.1} parent=71 // pred_fallthru
          _
        %p441 = scmp.lt.s32.totalorder %s33, 1
        %s442 = scalar_select %p441, %s33, 1
        %s443 = smul.addr %s442, 8
        %s444 = scalar_lea.vmem %s0, %s443
        %p445 = pneg %p54
        %p446 = pneg %p51
        %p447 = pneg %p75
        %p448 = pneg %p72
        %p449 = pneg %p96
        %p450 = pneg %p93
        %p451 = pneg %p117
        %p452 = pneg %p114
        %p453 = pneg %p138
        %p454 = pneg %p135
        %p455 = pneg %p159
        %p456 = pneg %p156
        %p457 = pneg %p180
        %p458 = pneg %p177
        %p459 = pneg %p201
        %p460 = pneg %p198
        %p461 = pneg %p222
        %p462 = pneg %p219
        %p463 = pneg %p243
        %p464 = pneg %p240
        %p465 = pneg %p264
        %p466 = pneg %p261
        %p467 = pneg %p285
        %p468 = pneg %p282
        %p469 = pneg %p306
        %p470 = pneg %p303
        %p471 = pneg %p332
        %p472 = pneg %p329
        %s473 = sand.u32 %s319, 1
        %s474 = scalar_lea.sflag [#allocation4], %s473
        %s475 = sand.u32 %s319, 1
        %s476 = smul.addr %s475, 8
        %s477 = scalar_lea.vmem [#allocation5], %s476
        %p478 = pneg %p358
        %p479 = pneg %p355
        %s480 = sand.u32 %s345, 1
        %s481 = scalar_lea.sflag [#allocation7], %s480
        %s482 = sand.u32 %s345, 1
        %s483 = smul.addr %s482, 8
        %s484 = scalar_lea.vmem [#allocation6], %s483
        %p485 = scmp.lt.s32.totalorder %s33, 1
        %s486 = scalar_select %p485, %s33, 1
        %s487 = smul.addr %s486, 8
        %s488 = scalar_lea.vmem %s0, %s487
        %v490 = vld [vmem:[%s488] sm:$0xff]
        %v491 = vpack.c.bf16 %v490, %v490
        %v492 = vld [vmem:[%s1] sm:$0xf]
        %v493 = vld [vmem:[%s1 + $0x4] sm:$0xf]
        %v494 = vld [vmem:[%s1 + $0x8] sm:$0xf]
        %v495 = vld [vmem:[%s1 + $0xc] sm:$0xf]
        %v496 = vld [vmem:[%s2] sm:$0x1]
        %v498 = vlaneseq
        %v499 = vshrl.u32 %v498, 7
        %v500 = vsub.s32 0, %v499
        %v501 = vrot.slane %v496, %v500
        %v507 = vunpack.c.l.b16 %v492
        %v508 = vunpack.c.l.b16 %v493
        %v509 = vunpack.c.l.b16 %v494
        %v510 = vunpack.c.l.b16 %v495
        %v511 = vpack.c.b16 %v508, %v507
        %v512 = vpack.c.b16 %v510, %v509
        %vm515 = vcmask 261120
        %v517 = vsel %vm515, %v491, 0
        %519 = vmatprep.subr.bf16.mxu0 0
        %520 = vmatpush1.bf16.msra.mxu0 0
        %521 = vmatprep.subr.bf16.mxu0 0
        %522 = vmatpush1.bf16.msra.mxu0 0
        %523 = vmatprep.subr.bf16.mxu0 0
        %524 = vmatpush1.bf16.msra.mxu0 0
        %525 = vmatprep.subr.bf16.mxu0 0
        %526 = vmatpush1.bf16.msra.mxu0 0
        %527 = vmatprep.subr.bf16.mxu0 0
        %528 = vmatpush1.bf16.msra.mxu0 0
        %529 = vmatprep.subr.bf16.mxu0 0
        %530 = vmatpush1.bf16.msra.mxu0 0
        %531 = vmatprep.subr.bf16.mxu0 0
        %532 = vmatpush1.bf16.msra.mxu0 %v512
        %533 = vmatprep.subr.bf16.mxu0 0
        %534 = vmatpush1.bf16.msra.mxu0 %v511
        %535 = vmatprep.subr.bf16.mxu0 0
        %536 = vmatpush2.bf16.msra.mxu0 0
        %537 = vmatprep.subr.bf16.mxu0 0
        %538 = vmatpush2.bf16.msra.mxu0 0
        %539 = vmatprep.subr.bf16.mxu0 0
        %540 = vmatpush2.bf16.msra.mxu0 0
        %541 = vmatprep.subr.bf16.mxu0 0
        %542 = vmatpush2.bf16.msra.mxu0 0
        %543 = vmatprep.subr.bf16.mxu0 0
        %544 = vmatpush2.bf16.msra.mxu0 0
        %545 = vmatprep.subr.bf16.mxu0 0
        %546 = vmatpush2.bf16.msra.mxu0 0
        %547 = vmatprep.subr.bf16.mxu0 0
        %548 = vmatpush2.bf16.msra.mxu0 0
        %549 = vmatprep.subr.bf16.mxu0 0
        %550 = vmatpush2.bf16.msra.mxu0 0
        %551 = vmatprep.mubr.bf16.mxu0 0
        %552 = vmatmul.mubr.bf16.gmra.mxu0 %v517
        %v553 = vpop.f32.mrf.mxu0
        %v554 = vadd.f32 %v501, %v553
        %v555 = vpop.f32.mrf.mxu0
        %v556 = vpop.f32.mrf.mxu0
        %v557 = vpop.f32.mrf.mxu0
        %558 = vdwg.mxu0
        %v559 = vpack.c.bf16 %v554, %v554
        %561 = vrot.lane.b32.xlu0 %v559, 120
        %v562 = vpop.permute.xlu0 %561
        %563 = vrot.lane.b32.xlu0 %v559, 112
        %v564 = vpop.permute.xlu0 %563
        %565 = vrot.lane.b32.xlu0 %v559, 104
        %v566 = vpop.permute.xlu0 %565
        %567 = vrot.lane.b32.xlu0 %v559, 96
        %v568 = vpop.permute.xlu0 %567
        %vm569 = vcmask 64512
        %v571 = vsel %vm569, %v559, 0
        %v574 = vsel %vm569, %v568, 0
        %576 = vmatprep.subr.bf16.mxu0 0
        %577 = vmatpush1.bf16.xpose.msra.mxu0 0
        %578 = vmatprep.subr.bf16.mxu0 0
        %579 = vmatpush1.bf16.xpose.msra.mxu0 0
        %580 = vmatprep.subr.bf16.mxu0 0
        %581 = vmatpush1.bf16.xpose.msra.mxu0 0
        %582 = vmatprep.subr.bf16.mxu0 0
        %583 = vmatpush1.bf16.xpose.msra.mxu0 0
        %584 = vmatprep.subr.bf16.mxu0 0
        %585 = vmatpush1.bf16.xpose.msra.mxu0 0
        %586 = vmatprep.subr.bf16.mxu0 0
        %587 = vmatpush1.bf16.xpose.msra.mxu0 0
        %588 = vmatprep.subr.bf16.mxu0 0
        %589 = vmatpush1.bf16.xpose.msra.mxu0 0
        %590 = vmatprep.subr.bf16.mxu0 0
        %591 = vmatpush1.bf16.xpose.msra.mxu0 %v574
        %592 = vmatprep.subr.bf16.mxu0 0
        %593 = vmatpush2.bf16.xpose.msra.mxu0 0
        %594 = vmatprep.subr.bf16.mxu0 0
        %595 = vmatpush2.bf16.xpose.msra.mxu0 0
        %596 = vmatprep.subr.bf16.mxu0 0
        %597 = vmatpush2.bf16.xpose.msra.mxu0 0
        %598 = vmatprep.subr.bf16.mxu0 0
        %599 = vmatpush2.bf16.xpose.msra.mxu0 0
        %600 = vmatprep.subr.bf16.mxu0 0
        %601 = vmatpush2.bf16.xpose.msra.mxu0 0
        %602 = vmatprep.subr.bf16.mxu0 0
        %603 = vmatpush2.bf16.xpose.msra.mxu0 0
        %604 = vmatprep.subr.bf16.mxu0 0
        %605 = vmatpush2.bf16.xpose.msra.mxu0 0
        %606 = vmatprep.subr.bf16.mxu0 0
        %607 = vmatpush2.bf16.xpose.msra.mxu0 0
        %608 = vmatprep.mubr.bf16.mxu0 0
        %609 = vmatmul.mubr.bf16.gmra.mxu0 %v571
        %v610 = vpop.f32.mrf.mxu0
        %v611 = vadd.f32 0.0, %v610
        %v612 = vpop.f32.mrf.mxu0
        %v613 = vpop.f32.mrf.mxu0
        %v614 = vpop.f32.mrf.mxu0
        %615 = vdwg.mxu0
        %616 = vrot.lane.b32.xlu0 %v562, 96
        %v617 = vpop.permute.xlu0 %616
        %v619 = vsel %vm569, %v562, 0
        %v622 = vsel %vm569, %v617, 0
        %624 = vmatprep.subr.bf16.mxu0 0
        %625 = vmatpush1.bf16.xpose.msra.mxu0 0
        %626 = vmatprep.subr.bf16.mxu0 0
        %627 = vmatpush1.bf16.xpose.msra.mxu0 0
        %628 = vmatprep.subr.bf16.mxu0 0
        %629 = vmatpush1.bf16.xpose.msra.mxu0 0
        %630 = vmatprep.subr.bf16.mxu0 0
        %631 = vmatpush1.bf16.xpose.msra.mxu0 0
        %632 = vmatprep.subr.bf16.mxu0 0
        %633 = vmatpush1.bf16.xpose.msra.mxu0 0
        %634 = vmatprep.subr.bf16.mxu0 0
        %635 = vmatpush1.bf16.xpose.msra.mxu0 0
        %636 = vmatprep.subr.bf16.mxu0 0
        %637 = vmatpush1.bf16.xpose.msra.mxu0 0
        %638 = vmatprep.subr.bf16.mxu0 0
        %639 = vmatpush1.bf16.xpose.msra.mxu0 %v622
        %640 = vmatprep.subr.bf16.mxu0 0
        %641 = vmatpush2.bf16.xpose.msra.mxu0 0
        %642 = vmatprep.subr.bf16.mxu0 0
        %643 = vmatpush2.bf16.xpose.msra.mxu0 0
        %644 = vmatprep.subr.bf16.mxu0 0
        %645 = vmatpush2.bf16.xpose.msra.mxu0 0
        %646 = vmatprep.subr.bf16.mxu0 0
        %647 = vmatpush2.bf16.xpose.msra.mxu0 0
        %648 = vmatprep.subr.bf16.mxu0 0
        %649 = vmatpush2.bf16.xpose.msra.mxu0 0
        %650 = vmatprep.subr.bf16.mxu0 0
        %651 = vmatpush2.bf16.xpose.msra.mxu0 0
        %652 = vmatprep.subr.bf16.mxu0 0
        %653 = vmatpush2.bf16.xpose.msra.mxu0 0
        %654 = vmatprep.subr.bf16.mxu0 0
        %655 = vmatpush2.bf16.xpose.msra.mxu0 0
        %656 = vmatprep.mubr.bf16.mxu0 0
        %657 = vmatmul.mubr.bf16.gmra.mxu0 %v619
        %v658 = vpop.f32.mrf.mxu0
        %v659 = vadd.f32 0.0, %v658
        %v660 = vpop.f32.mrf.mxu0
        %v661 = vpop.f32.mrf.mxu0
        %v662 = vpop.f32.mrf.mxu0
        %663 = vdwg.mxu0
        %664 = vrot.lane.b32.xlu0 %v564, 96
        %v665 = vpop.permute.xlu0 %664
        %v667 = vsel %vm569, %v564, 0
        %v670 = vsel %vm569, %v665, 0
        %672 = vmatprep.subr.bf16.mxu0 0
        %673 = vmatpush1.bf16.xpose.msra.mxu0 0
        %674 = vmatprep.subr.bf16.mxu0 0
        %675 = vmatpush1.bf16.xpose.msra.mxu0 0
        %676 = vmatprep.subr.bf16.mxu0 0
        %677 = vmatpush1.bf16.xpose.msra.mxu0 0
        %678 = vmatprep.subr.bf16.mxu0 0
        %679 = vmatpush1.bf16.xpose.msra.mxu0 0
        %680 = vmatprep.subr.bf16.mxu0 0
        %681 = vmatpush1.bf16.xpose.msra.mxu0 0
        %682 = vmatprep.subr.bf16.mxu0 0
        %683 = vmatpush1.bf16.xpose.msra.mxu0 0
        %684 = vmatprep.subr.bf16.mxu0 0
        %685 = vmatpush1.bf16.xpose.msra.mxu0 0
        %686 = vmatprep.subr.bf16.mxu0 0
        %687 = vmatpush1.bf16.xpose.msra.mxu0 %v670
        %688 = vmatprep.subr.bf16.mxu0 0
        %689 = vmatpush2.bf16.xpose.msra.mxu0 0
        %690 = vmatprep.subr.bf16.mxu0 0
        %691 = vmatpush2.bf16.xpose.msra.mxu0 0
        %692 = vmatprep.subr.bf16.mxu0 0
        %693 = vmatpush2.bf16.xpose.msra.mxu0 0
        %694 = vmatprep.subr.bf16.mxu0 0
        %695 = vmatpush2.bf16.xpose.msra.mxu0 0
        %696 = vmatprep.subr.bf16.mxu0 0
        %697 = vmatpush2.bf16.xpose.msra.mxu0 0
        %698 = vmatprep.subr.bf16.mxu0 0
        %699 = vmatpush2.bf16.xpose.msra.mxu0 0
        %700 = vmatprep.subr.bf16.mxu0 0
        %701 = vmatpush2.bf16.xpose.msra.mxu0 0
        %702 = vmatprep.subr.bf16.mxu0 0
        %703 = vmatpush2.bf16.xpose.msra.mxu0 0
        %704 = vmatprep.mubr.bf16.mxu0 0
        %705 = vmatmul.mubr.bf16.gmra.mxu0 %v667
        %v706 = vpop.f32.mrf.mxu0
        %v707 = vadd.f32 0.0, %v706
        %v708 = vpop.f32.mrf.mxu0
        %v709 = vpop.f32.mrf.mxu0
        %v710 = vpop.f32.mrf.mxu0
        %711 = vdwg.mxu0
        %712 = vrot.lane.b32.xlu0 %v566, 96
        %v713 = vpop.permute.xlu0 %712
        %v715 = vsel %vm569, %v566, 0
        %v718 = vsel %vm569, %v713, 0
        %720 = vmatprep.subr.bf16.mxu0 0
        %721 = vmatpush1.bf16.xpose.msra.mxu0 0
        %722 = vmatprep.subr.bf16.mxu0 0
        %723 = vmatpush1.bf16.xpose.msra.mxu0 0
        %724 = vmatprep.subr.bf16.mxu0 0
        %725 = vmatpush1.bf16.xpose.msra.mxu0 0
        %726 = vmatprep.subr.bf16.mxu0 0
        %727 = vmatpush1.bf16.xpose.msra.mxu0 0
        %728 = vmatprep.subr.bf16.mxu0 0
        %729 = vmatpush1.bf16.xpose.msra.mxu0 0
        %730 = vmatprep.subr.bf16.mxu0 0
        %731 = vmatpush1.bf16.xpose.msra.mxu0 0
        %732 = vmatprep.subr.bf16.mxu0 0
        %733 = vmatpush1.bf16.xpose.msra.mxu0 0
        %734 = vmatprep.subr.bf16.mxu0 0
        %735 = vmatpush1.bf16.xpose.msra.mxu0 %v718
        %736 = vmatprep.subr.bf16.mxu0 0
        %737 = vmatpush2.bf16.xpose.msra.mxu0 0
        %738 = vmatprep.subr.bf16.mxu0 0
        %739 = vmatpush2.bf16.xpose.msra.mxu0 0
        %740 = vmatprep.subr.bf16.mxu0 0
        %741 = vmatpush2.bf16.xpose.msra.mxu0 0
        %742 = vmatprep.subr.bf16.mxu0 0
        %743 = vmatpush2.bf16.xpose.msra.mxu0 0
        %744 = vmatprep.subr.bf16.mxu0 0
        %745 = vmatpush2.bf16.xpose.msra.mxu0 0
        %746 = vmatprep.subr.bf16.mxu0 0
        %747 = vmatpush2.bf16.xpose.msra.mxu0 0
        %748 = vmatprep.subr.bf16.mxu0 0
        %749 = vmatpush2.bf16.xpose.msra.mxu0 0
        %750 = vmatprep.subr.bf16.mxu0 0
        %751 = vmatpush2.bf16.xpose.msra.mxu0 0
        %752 = vmatprep.mubr.bf16.mxu0 0
        %753 = vmatmul.mubr.bf16.gmra.mxu0 %v715
        %v754 = vpop.f32.mrf.mxu0
        %v755 = vadd.f32 0.0, %v754
        %v756 = vpop.f32.mrf.mxu0
        %v757 = vpop.f32.mrf.mxu0
        %v758 = vpop.f32.mrf.mxu0
        %759 = vdwg.mxu0
        %v760 = vsel %vm569, %v611, -inf
        %761 = vmax.xlane.f32.xlu0 %v760
        %v762 = vpop.xlane.xlu0 %761
        %v763 = vsel %vm569, %v659, -inf
        %764 = vmax.xlane.f32.xlu0 %v763
        %v765 = vpop.xlane.xlu0 %764
        %v766 = vsel %vm569, %v707, -inf
        %767 = vmax.xlane.f32.xlu0 %v766
        %v768 = vpop.xlane.xlu0 %767
        %v769 = vsel %vm569, %v755, -inf
        %770 = vmax.xlane.f32.xlu0 %v769
        %v771 = vpop.xlane.xlu0 %770
        %v772 = vsub.f32 %v611, %v762
        %v773 = vsub.f32 %v659, %v765
        %v774 = vsub.f32 %v707, %v768
        %v775 = vsub.f32 %v755, %v771
        %v776 = vmul.f32 %v772, 1.442695
        %v777 = vpow.pop %v776
        %v778 = vmul.f32 %v773, 1.442695
        %v779 = vpow.pop %v778
        %v780 = vmul.f32 %v774, 1.442695
        %v781 = vpow.pop %v780
        %v782 = vmul.f32 %v775, 1.442695
        %v783 = vpow.pop %v782
        %v784 = vsel %vm569, %v777, 0.0
        %785 = vadd.xlane.f32.xlu0 %v784
        %v786 = vpop.xlane.xlu0 %785
        %v787 = vsel %vm569, %v779, 0.0
        %788 = vadd.xlane.f32.xlu0 %v787
        %v789 = vpop.xlane.xlu0 %788
        %v790 = vsel %vm569, %v781, 0.0
        %791 = vadd.xlane.f32.xlu0 %v790
        %v792 = vpop.xlane.xlu0 %791
        %v793 = vsel %vm569, %v783, 0.0
        %794 = vadd.xlane.f32.xlu0 %v793
        %v795 = vpop.xlane.xlu0 %794
        %v796 = vrcp.pop %v786
        %v797 = vrcp.pop %v789
        %v798 = vrcp.pop %v792
        %v799 = vrcp.pop %v795
        %v800 = vmul.f32 %v777, %v796
        %v801 = vmul.f32 %v779, %v797
        %v802 = vmul.f32 %v781, %v798
        %v803 = vmul.f32 %v783, %v799
        %v804 = vsel %vm569, %v800, 0.0
        %v805 = vsel %vm569, %v801, 0.0
        %v806 = vadd.f32 %v804, %v805
        %v807 = vsel %vm569, %v802, 0.0
        %v808 = vadd.f32 %v806, %v807
        %v809 = vsel %vm569, %v803, 0.0
        %v810 = vadd.f32 %v808, %v809
        %v811 = vrcp.pop 4.0
        %v812 = vmul.f32 %v810, %v811
        %813 = vst.msk [vmem:[%s484] sm:$0xff] %vm569, %v812
        %v814 = vpack.c.bf16 %v800, %v800
        %v815 = vpack.c.bf16 %v801, %v801
        %v816 = vpack.c.bf16 %v802, %v802
        %v817 = vpack.c.bf16 %v803, %v803
        %818 = vrot.lane.b32.xlu0 %v559, 64
        %v819 = vpop.permute.xlu0 %818
        %v821 = vsel %vm569, %v814, 0
        %vm823 = vcmask 1043456
        %v825 = vsel %vm823, %v819, 0
        %827 = vmatprep.subr.bf16.mxu0 0
        %828 = vmatpush1.bf16.msra.mxu0 0
        %829 = vmatprep.subr.bf16.mxu0 0
        %830 = vmatpush1.bf16.msra.mxu0 0
        %831 = vmatprep.subr.bf16.mxu0 0
        %832 = vmatpush1.bf16.msra.mxu0 0
        %833 = vmatprep.subr.bf16.mxu0 0
        %834 = vmatpush1.bf16.msra.mxu0 0
        %835 = vmatprep.subr.bf16.mxu0 0
        %836 = vmatpush1.bf16.msra.mxu0 0
        %837 = vmatprep.subr.bf16.mxu0 0
        %838 = vmatpush1.bf16.msra.mxu0 0
        %839 = vmatprep.subr.bf16.mxu0 0
        %840 = vmatpush1.bf16.msra.mxu0 0
        %841 = vmatprep.subr.bf16.mxu0 0
        %842 = vmatpush1.bf16.msra.mxu0 %v825
        %843 = vmatprep.subr.bf16.mxu0 0
        %844 = vmatpush2.bf16.msra.mxu0 0
        %845 = vmatprep.subr.bf16.mxu0 0
        %846 = vmatpush2.bf16.msra.mxu0 0
        %847 = vmatprep.subr.bf16.mxu0 0
        %848 = vmatpush2.bf16.msra.mxu0 0
        %849 = vmatprep.subr.bf16.mxu0 0
        %850 = vmatpush2.bf16.msra.mxu0 0
        %851 = vmatprep.subr.bf16.mxu0 0
        %852 = vmatpush2.bf16.msra.mxu0 0
        %853 = vmatprep.subr.bf16.mxu0 0
        %854 = vmatpush2.bf16.msra.mxu0 0
        %855 = vmatprep.subr.bf16.mxu0 0
        %856 = vmatpush2.bf16.msra.mxu0 0
        %857 = vmatprep.subr.bf16.mxu0 0
        %858 = vmatpush2.bf16.msra.mxu0 0
        %859 = vmatprep.mubr.bf16.mxu0 0
        %860 = vmatmul.mubr.bf16.gmra.mxu0 %v821
        %v861 = vpop.f32.mrf.mxu0
        %v862 = vadd.f32 0.0, %v861
        %v863 = vpop.f32.mrf.mxu0
        %v864 = vpop.f32.mrf.mxu0
        %v865 = vpop.f32.mrf.mxu0
        %866 = vdwg.mxu0
        %867 = vrot.lane.b32.xlu0 %v562, 64
        %v868 = vpop.permute.xlu0 %867
        %v870 = vsel %vm569, %v815, 0
        %v873 = vsel %vm823, %v868, 0
        %875 = vmatprep.subr.bf16.mxu0 0
        %876 = vmatpush1.bf16.msra.mxu0 0
        %877 = vmatprep.subr.bf16.mxu0 0
        %878 = vmatpush1.bf16.msra.mxu0 0
        %879 = vmatprep.subr.bf16.mxu0 0
        %880 = vmatpush1.bf16.msra.mxu0 0
        %881 = vmatprep.subr.bf16.mxu0 0
        %882 = vmatpush1.bf16.msra.mxu0 0
        %883 = vmatprep.subr.bf16.mxu0 0
        %884 = vmatpush1.bf16.msra.mxu0 0
        %885 = vmatprep.subr.bf16.mxu0 0
        %886 = vmatpush1.bf16.msra.mxu0 0
        %887 = vmatprep.subr.bf16.mxu0 0
        %888 = vmatpush1.bf16.msra.mxu0 0
        %889 = vmatprep.subr.bf16.mxu0 0
        %890 = vmatpush1.bf16.msra.mxu0 %v873
        %891 = vmatprep.subr.bf16.mxu0 0
        %892 = vmatpush2.bf16.msra.mxu0 0
        %893 = vmatprep.subr.bf16.mxu0 0
        %894 = vmatpush2.bf16.msra.mxu0 0
        %895 = vmatprep.subr.bf16.mxu0 0
        %896 = vmatpush2.bf16.msra.mxu0 0
        %897 = vmatprep.subr.bf16.mxu0 0
        %898 = vmatpush2.bf16.msra.mxu0 0
        %899 = vmatprep.subr.bf16.mxu0 0
        %900 = vmatpush2.bf16.msra.mxu0 0
        %901 = vmatprep.subr.bf16.mxu0 0
        %902 = vmatpush2.bf16.msra.mxu0 0
        %903 = vmatprep.subr.bf16.mxu0 0
        %904 = vmatpush2.bf16.msra.mxu0 0
        %905 = vmatprep.subr.bf16.mxu0 0
        %906 = vmatpush2.bf16.msra.mxu0 0
        %907 = vmatprep.mubr.bf16.mxu0 0
        %908 = vmatmul.mubr.bf16.gmra.mxu0 %v870
        %v909 = vpop.f32.mrf.mxu0
        %v910 = vadd.f32 0.0, %v909
        %v911 = vpop.f32.mrf.mxu0
        %v912 = vpop.f32.mrf.mxu0
        %v913 = vpop.f32.mrf.mxu0
        %914 = vdwg.mxu0
        %915 = vrot.lane.b32.xlu0 %v564, 64
        %v916 = vpop.permute.xlu0 %915
        %v918 = vsel %vm569, %v816, 0
        %v921 = vsel %vm823, %v916, 0
        %923 = vmatprep.subr.bf16.mxu0 0
        %924 = vmatpush1.bf16.msra.mxu0 0
        %925 = vmatprep.subr.bf16.mxu0 0
        %926 = vmatpush1.bf16.msra.mxu0 0
        %927 = vmatprep.subr.bf16.mxu0 0
        %928 = vmatpush1.bf16.msra.mxu0 0
        %929 = vmatprep.subr.bf16.mxu0 0
        %930 = vmatpush1.bf16.msra.mxu0 0
        %931 = vmatprep.subr.bf16.mxu0 0
        %932 = vmatpush1.bf16.msra.mxu0 0
        %933 = vmatprep.subr.bf16.mxu0 0
        %934 = vmatpush1.bf16.msra.mxu0 0
        %935 = vmatprep.subr.bf16.mxu0 0
        %936 = vmatpush1.bf16.msra.mxu0 0
        %937 = vmatprep.subr.bf16.mxu0 0
        %938 = vmatpush1.bf16.msra.mxu0 %v921
        %939 = vmatprep.subr.bf16.mxu0 0
        %940 = vmatpush2.bf16.msra.mxu0 0
        %941 = vmatprep.subr.bf16.mxu0 0
        %942 = vmatpush2.bf16.msra.mxu0 0
        %943 = vmatprep.subr.bf16.mxu0 0
        %944 = vmatpush2.bf16.msra.mxu0 0
        %945 = vmatprep.subr.bf16.mxu0 0
        %946 = vmatpush2.bf16.msra.mxu0 0
        %947 = vmatprep.subr.bf16.mxu0 0
        %948 = vmatpush2.bf16.msra.mxu0 0
        %949 = vmatprep.subr.bf16.mxu0 0
        %950 = vmatpush2.bf16.msra.mxu0 0
        %951 = vmatprep.subr.bf16.mxu0 0
        %952 = vmatpush2.bf16.msra.mxu0 0
        %953 = vmatprep.subr.bf16.mxu0 0
        %954 = vmatpush2.bf16.msra.mxu0 0
        %955 = vmatprep.mubr.bf16.mxu0 0
        %956 = vmatmul.mubr.bf16.gmra.mxu0 %v918
        %v957 = vpop.f32.mrf.mxu0
        %v958 = vadd.f32 0.0, %v957
        %v959 = vpop.f32.mrf.mxu0
        %v960 = vpop.f32.mrf.mxu0
        %v961 = vpop.f32.mrf.mxu0
        %962 = vdwg.mxu0
        %963 = vrot.lane.b32.xlu0 %v566, 64
        %v964 = vpop.permute.xlu0 %963
        %v966 = vsel %vm569, %v817, 0
        %v969 = vsel %vm823, %v964, 0
        %971 = vmatprep.subr.bf16.mxu0 0
        %972 = vmatpush1.bf16.msra.mxu0 0
        %973 = vmatprep.subr.bf16.mxu0 0
        %974 = vmatpush1.bf16.msra.mxu0 0
        %975 = vmatprep.subr.bf16.mxu0 0
        %976 = vmatpush1.bf16.msra.mxu0 0
        %977 = vmatprep.subr.bf16.mxu0 0
        %978 = vmatpush1.bf16.msra.mxu0 0
        %979 = vmatprep.subr.bf16.mxu0 0
        %980 = vmatpush1.bf16.msra.mxu0 0
        %981 = vmatprep.subr.bf16.mxu0 0
        %982 = vmatpush1.bf16.msra.mxu0 0
        %983 = vmatprep.subr.bf16.mxu0 0
        %984 = vmatpush1.bf16.msra.mxu0 0
        %985 = vmatprep.subr.bf16.mxu0 0
        %986 = vmatpush1.bf16.msra.mxu0 %v969
        %987 = vmatprep.subr.bf16.mxu0 0
        %988 = vmatpush2.bf16.msra.mxu0 0
        %989 = vmatprep.subr.bf16.mxu0 0
        %990 = vmatpush2.bf16.msra.mxu0 0
        %991 = vmatprep.subr.bf16.mxu0 0
        %992 = vmatpush2.bf16.msra.mxu0 0
        %993 = vmatprep.subr.bf16.mxu0 0
        %994 = vmatpush2.bf16.msra.mxu0 0
        %995 = vmatprep.subr.bf16.mxu0 0
        %996 = vmatpush2.bf16.msra.mxu0 0
        %997 = vmatprep.subr.bf16.mxu0 0
        %998 = vmatpush2.bf16.msra.mxu0 0
        %999 = vmatprep.subr.bf16.mxu0 0
        %1000 = vmatpush2.bf16.msra.mxu0 0
        %1001 = vmatprep.subr.bf16.mxu0 0
        %1002 = vmatpush2.bf16.msra.mxu0 0
        %1003 = vmatprep.mubr.bf16.mxu0 0
        %1004 = vmatmul.mubr.bf16.gmra.mxu0 %v966
        %v1005 = vpop.f32.mrf.mxu0
        %v1006 = vadd.f32 0.0, %v1005
        %v1007 = vpop.f32.mrf.mxu0
        %v1008 = vpop.f32.mrf.mxu0
        %v1009 = vpop.f32.mrf.mxu0
        %1010 = vdwg.mxu0
        %1012 = vrot.lane.b32.xlu0 %v910, 8
        %v1013 = vpop.permute.xlu0 %1012
        %1016 = vrot.lane.b32.xlu0 %v958, 16
        %v1017 = vpop.permute.xlu0 %1016
        %1020 = vrot.lane.b32.xlu0 %v1006, 24
        %v1021 = vpop.permute.xlu0 %1020
        %v1023 = vsel %vm569, %v862, %v1013
        %vm1024 = vcmask 130048
        %v1025 = vsel %vm1024, %v1023, %v1017
        %vm1026 = vcmask 195584
        %v1027 = vsel %vm1026, %v1025, %v1021
        %v1028 = vpack.c.bf16 %v1027, %v1027
        %v1029 = vld [vmem:[%s3] sm:$0xf]
        %v1030 = vld [vmem:[%s3 + $0x4] sm:$0xf]
        %v1031 = vld [vmem:[%s3 + $0x8] sm:$0xf]
        %v1032 = vld [vmem:[%s3 + $0xc] sm:$0xf]
        %v1033 = vld [vmem:[%s4] sm:$0x1]
        %v1035 = vlaneseq
        %v1036 = vshrl.u32 %v1035, 7
        %v1037 = vsub.s32 0, %v1036
        %v1038 = vrot.slane %v1033, %v1037
        %v1044 = vunpack.c.l.b16 %v1029
        %v1045 = vunpack.c.l.b16 %v1030
        %v1046 = vunpack.c.l.b16 %v1031
        %v1047 = vunpack.c.l.b16 %v1032
        %v1048 = vpack.c.b16 %v1045, %v1044
        %v1049 = vpack.c.b16 %v1047, %v1046
        %v1053 = vsel %vm515, %v1028, 0
        %1055 = vmatprep.subr.bf16.mxu0 0
        %1056 = vmatpush1.bf16.msra.mxu0 0
        %1057 = vmatprep.subr.bf16.mxu0 0
        %1058 = vmatpush1.bf16.msra.mxu0 0
        %1059 = vmatprep.subr.bf16.mxu0 0
        %1060 = vmatpush1.bf16.msra.mxu0 0
        %1061 = vmatprep.subr.bf16.mxu0 0
        %1062 = vmatpush1.bf16.msra.mxu0 0
        %1063 = vmatprep.subr.bf16.mxu0 0
        %1064 = vmatpush1.bf16.msra.mxu0 0
        %1065 = vmatprep.subr.bf16.mxu0 0
        %1066 = vmatpush1.bf16.msra.mxu0 0
        %1067 = vmatprep.subr.bf16.mxu0 0
        %1068 = vmatpush1.bf16.msra.mxu0 %v1049
        %1069 = vmatprep.subr.bf16.mxu0 0
        %1070 = vmatpush1.bf16.msra.mxu0 %v1048
        %1071 = vmatprep.subr.bf16.mxu0 0
        %1072 = vmatpush2.bf16.msra.mxu0 0
        %1073 = vmatprep.subr.bf16.mxu0 0
        %1074 = vmatpush2.bf16.msra.mxu0 0
        %1075 = vmatprep.subr.bf16.mxu0 0
        %1076 = vmatpush2.bf16.msra.mxu0 0
        %1077 = vmatprep.subr.bf16.mxu0 0
        %1078 = vmatpush2.bf16.msra.mxu0 0
        %1079 = vmatprep.subr.bf16.mxu0 0
        %1080 = vmatpush2.bf16.msra.mxu0 0
        %1081 = vmatprep.subr.bf16.mxu0 0
        %1082 = vmatpush2.bf16.msra.mxu0 0
        %1083 = vmatprep.subr.bf16.mxu0 0
        %1084 = vmatpush2.bf16.msra.mxu0 0
        %1085 = vmatprep.subr.bf16.mxu0 0
        %1086 = vmatpush2.bf16.msra.mxu0 0
        %1087 = vmatprep.mubr.bf16.mxu0 0
        %1088 = vmatmul.mubr.bf16.gmra.mxu0 %v1053
        %v1089 = vpop.f32.mrf.mxu0
        %v1090 = vadd.f32 %v1038, %v1089
        %v1091 = vpop.f32.mrf.mxu0
        %v1092 = vpop.f32.mrf.mxu0
        %v1093 = vpop.f32.mrf.mxu0
        %1094 = vdwg.mxu0
        %v1095 = vadd.f32 %v490, %v1090
        %v1096 = vsel %vm515, %v1095, 0.0
        %1097 = vadd.xlane.f32.xlu0 %v1096
        %v1098 = vpop.xlane.xlu0 %1097
        %v1099 = vrcp.pop 32.0
        %v1100 = vmul.f32 %v1098, %v1099
        %v1101 = vsub.f32 %v1095, %v1100
        %v1102 = vmul.f32 %v1101, %v1101
        %v1103 = vsel %vm515, %v1102, 0.0
        %1104 = vadd.xlane.f32.xlu0 %v1103
        %v1105 = vpop.xlane.xlu0 %1104
        %v1106 = vmul.f32 %v1105, %v1099
        %v1107 = vadd.f32 %v1106, 1e-05
        %v1108 = vrsqrt.pop %v1107
        %v1109 = vmul.f32 %v1101, %v1108
        %v1110 = vld [vmem:[%s9] sm:$0x1]
        %v1112 = vlaneseq
        %v1113 = vshrl.u32 %v1112, 7
        %v1114 = vsub.s32 0, %v1113
        %v1115 = vrot.slane %v1110, %v1114
        %v1117 = vmul.f32 %v1109, %v1115
        %v1118 = vld [vmem:[%s10] sm:$0x1]
        %v1120 = vlaneseq
        %v1121 = vshrl.u32 %v1120, 7
        %v1122 = vsub.s32 0, %v1121
        %v1123 = vrot.slane %v1118, %v1122
        %v1125 = vadd.f32 %v1117, %v1123
        %v1126 = vpack.c.bf16 %v1125, %v1125
        %v1127 = vld [vmem:[#allocation2] sm:$0xf]
        %v1128 = vld [vmem:[#allocation2 + $0x4] sm:$0xf]
        %v1129 = vld [vmem:[#allocation2 + $0x8] sm:$0xf]
        %v1130 = vld [vmem:[#allocation2 + $0xc] sm:$0xf]
        %v1131 = vld [vmem:[%s6] sm:$0x1]
        %v1133 = vlaneseq
        %v1134 = vshrl.u32 %v1133, 7
        %v1135 = vsub.s32 0, %v1134
        %v1136 = vrot.slane %v1131, %v1135
        %v1142 = vunpack.c.l.b16 %v1127
        %v1143 = vunpack.c.l.b16 %v1128
        %v1144 = vunpack.c.l.b16 %v1129
        %v1145 = vunpack.c.l.b16 %v1130
        %v1146 = vpack.c.b16 %v1143, %v1142
        %v1147 = vpack.c.b16 %v1145, %v1144
        %v1151 = vsel %vm515, %v1126, 0
        %1153 = vmatprep.subr.bf16.mxu0 0
        %1154 = vmatpush1.bf16.msra.mxu0 0
        %1155 = vmatprep.subr.bf16.mxu0 0
        %1156 = vmatpush1.bf16.msra.mxu0 0
        %1157 = vmatprep.subr.bf16.mxu0 0
        %1158 = vmatpush1.bf16.msra.mxu0 0
        %1159 = vmatprep.subr.bf16.mxu0 0
        %1160 = vmatpush1.bf16.msra.mxu0 0
        %1161 = vmatprep.subr.bf16.mxu0 0
        %1162 = vmatpush1.bf16.msra.mxu0 0
        %1163 = vmatprep.subr.bf16.mxu0 0
        %1164 = vmatpush1.bf16.msra.mxu0 0
        %1165 = vmatprep.subr.bf16.mxu0 0
        %1166 = vmatpush1.bf16.msra.mxu0 %v1147
        %1167 = vmatprep.subr.bf16.mxu0 0
        %1168 = vmatpush1.bf16.msra.mxu0 %v1146
        %1169 = vmatprep.subr.bf16.mxu0 0
        %1170 = vmatpush2.bf16.msra.mxu0 0
        %1171 = vmatprep.subr.bf16.mxu0 0
        %1172 = vmatpush2.bf16.msra.mxu0 0
        %1173 = vmatprep.subr.bf16.mxu0 0
        %1174 = vmatpush2.bf16.msra.mxu0 0
        %1175 = vmatprep.subr.bf16.mxu0 0
        %1176 = vmatpush2.bf16.msra.mxu0 0
        %1177 = vmatprep.subr.bf16.mxu0 0
        %1178 = vmatpush2.bf16.msra.mxu0 0
        %1179 = vmatprep.subr.bf16.mxu0 0
        %1180 = vmatpush2.bf16.msra.mxu0 0
        %1181 = vmatprep.subr.bf16.mxu0 0
        %1182 = vmatpush2.bf16.msra.mxu0 0
        %1183 = vmatprep.subr.bf16.mxu0 0
        %1184 = vmatpush2.bf16.msra.mxu0 0
        %1185 = vmatprep.mubr.bf16.mxu0 0
        %1186 = vmatmul.mubr.bf16.gmra.mxu0 %v1151
        %v1187 = vpop.f32.mrf.mxu0
        %v1188 = vadd.f32 %v1136, %v1187
        %v1189 = vpop.f32.mrf.mxu0
        %v1190 = vpop.f32.mrf.mxu0
        %v1191 = vpop.f32.mrf.mxu0
        %1192 = vdwg.mxu0
        %v1193 = vmax.f32 %v1188, 0.0
        %v1194 = vpack.c.bf16 %v1193, %v1193
        %v1195 = vld [vmem:[%s7] sm:$0xf]
        %v1196 = vld [vmem:[%s7 + $0x4] sm:$0xf]
        %v1197 = vld [vmem:[%s7 + $0x8] sm:$0xf]
        %v1198 = vld [vmem:[%s7 + $0xc] sm:$0xf]
        %v1199 = vld [vmem:[%s7 + $0x10] sm:$0xf]
        %v1200 = vld [vmem:[%s7 + $0x14] sm:$0xf]
        %v1201 = vld [vmem:[%s7 + $0x18] sm:$0xf]
        %v1202 = vld [vmem:[%s7 + $0x1c] sm:$0xf]
        %v1203 = vld [vmem:[%s8] sm:$0x1]
        %v1205 = vlaneseq
        %v1206 = vshrl.u32 %v1205, 7
        %v1207 = vsub.s32 0, %v1206
        %v1208 = vrot.slane %v1203, %v1207
        %v1218 = vunpack.c.l.b16 %v1195
        %v1219 = vunpack.c.l.b16 %v1196
        %v1220 = vunpack.c.l.b16 %v1197
        %v1221 = vunpack.c.l.b16 %v1198
        %v1222 = vunpack.c.l.b16 %v1199
        %v1223 = vunpack.c.l.b16 %v1200
        %v1224 = vunpack.c.l.b16 %v1201
        %v1225 = vunpack.c.l.b16 %v1202
        %v1226 = vpack.c.b16 %v1219, %v1218
        %v1227 = vpack.c.b16 %v1221, %v1220
        %v1228 = vpack.c.b16 %v1223, %v1222
        %v1229 = vpack.c.b16 %v1225, %v1224
        %vm1234 = vcmask 523264
        %v1236 = vsel %vm1234, %v1194, 0
        %1238 = vmatprep.subr.bf16.mxu0 0
        %1239 = vmatpush1.bf16.msra.mxu0 0
        %1240 = vmatprep.subr.bf16.mxu0 0
        %1241 = vmatpush1.bf16.msra.mxu0 0
        %1242 = vmatprep.subr.bf16.mxu0 0
        %1243 = vmatpush1.bf16.msra.mxu0 0
        %1244 = vmatprep.subr.bf16.mxu0 0
        %1245 = vmatpush1.bf16.msra.mxu0 0
        %1246 = vmatprep.subr.bf16.mxu0 0
        %1247 = vmatpush1.bf16.msra.mxu0 %v1229
        %1248 = vmatprep.subr.bf16.mxu0 0
        %1249 = vmatpush1.bf16.msra.mxu0 %v1228
        %1250 = vmatprep.subr.bf16.mxu0 0
        %1251 = vmatpush1.bf16.msra.mxu0 %v1227
        %1252 = vmatprep.subr.bf16.mxu0 0
        %1253 = vmatpush1.bf16.msra.mxu0 %v1226
        %1254 = vmatprep.subr.bf16.mxu0 0
        %1255 = vmatpush2.bf16.msra.mxu0 0
        %1256 = vmatprep.subr.bf16.mxu0 0
        %1257 = vmatpush2.bf16.msra.mxu0 0
        %1258 = vmatprep.subr.bf16.mxu0 0
        %1259 = vmatpush2.bf16.msra.mxu0 0
        %1260 = vmatprep.subr.bf16.mxu0 0
        %1261 = vmatpush2.bf16.msra.mxu0 0
        %1262 = vmatprep.subr.bf16.mxu0 0
        %1263 = vmatpush2.bf16.msra.mxu0 0
        %1264 = vmatprep.subr.bf16.mxu0 0
        %1265 = vmatpush2.bf16.msra.mxu0 0
        %1266 = vmatprep.subr.bf16.mxu0 0
        %1267 = vmatpush2.bf16.msra.mxu0 0
        %1268 = vmatprep.subr.bf16.mxu0 0
        %1269 = vmatpush2.bf16.msra.mxu0 0
        %1270 = vmatprep.mubr.bf16.mxu0 0
        %1271 = vmatmul.mubr.bf16.gmra.mxu0 %v1236
        %v1272 = vpop.f32.mrf.mxu0
        %v1273 = vadd.f32 %v1208, %v1272
        %v1274 = vpop.f32.mrf.mxu0
        %v1275 = vpop.f32.mrf.mxu0
        %v1276 = vpop.f32.mrf.mxu0
        %1277 = vdwg.mxu0
        %v1278 = vadd.f32 %v1125, %v1273
        %v1279 = vsel %vm515, %v1278, 0.0
        %1280 = vadd.xlane.f32.xlu0 %v1279
        %v1281 = vpop.xlane.xlu0 %1280
        %v1282 = vmul.f32 %v1281, %v1099
        %v1283 = vsub.f32 %v1278, %v1282
        %v1284 = vmul.f32 %v1283, %v1283
        %v1285 = vsel %vm515, %v1284, 0.0
        %1286 = vadd.xlane.f32.xlu0 %v1285
        %v1287 = vpop.xlane.xlu0 %1286
        %v1288 = vmul.f32 %v1287, %v1099
        %v1289 = vadd.f32 %v1288, 1e-05
        %v1290 = vrsqrt.pop %v1289
        %v1291 = vmul.f32 %v1283, %v1290
        %v1292 = vld [vmem:[%s11] sm:$0x1]
        %v1294 = vlaneseq
        %v1295 = vshrl.u32 %v1294, 7
        %v1296 = vsub.s32 0, %v1295
        %v1297 = vrot.slane %v1292, %v1296
        %v1299 = vmul.f32 %v1291, %v1297
        %v1300 = vld [vmem:[%s12] sm:$0x1]
        %v1302 = vlaneseq
        %v1303 = vshrl.u32 %v1302, 7
        %v1304 = vsub.s32 0, %v1303
        %v1305 = vrot.slane %v1300, %v1304
        %v1307 = vadd.f32 %v1299, %v1305
        %1308 = vst.msk [vmem:[%s477] sm:$0xff] %vm515, %v1307
        %s1309 = sand.u32 %s319, 1
        %s1310 = scalar_lea.sflag [#allocation4], %s1309
        %s1311 = sand.u32 %s319, 1
        %s1312 = smul.addr %s1311, 8
        %s1313 = scalar_lea.vmem [#allocation5], %s1312
        %s1314 = sand.u32 %s345, 1
        %s1315 = scalar_lea.sflag [#allocation7], %s1314
        %s1316 = sand.u32 %s345, 1
        %s1317 = smul.addr %s1316, 8
        %s1318 = scalar_lea.vmem [#allocation6], %s1317
        // Predicated region
        $region77: #{tpu_custom_call.1} parent=71 // pred_check
          %p1319 = pneg %p329
        $region78: #{tpu_custom_call.1} parent=71 // pred_check_branch
          %1321 = sbr.rel (%p1319) target = $region80
        $region79: #{tpu_custom_call.1} parent=71 // pred_region
          %s1323 = ssub.s32 128, 128
          %1324 = vsyncadd %s1310, %s1323
          %s1325 = smul.addr %s33, 128
          %s1326 = scalar_lea.hbm %s13, %s1325
          %s1328 = sshll.u32 %s1313, 4
          %s1329 = int_to_ptr.vmem [resolvable:$true] %s1328
          %1331 = dma.vmem_to_hbm [thread:$0]  %s1329, 128, %s1326, %s1310
        $region80: #{tpu_custom_call.1} parent=71 // pred_fallthru
          _
        // Predicated region
        $region81: #{tpu_custom_call.1} parent=71 // pred_check
          %p1332 = pneg %p355
        $region82: #{tpu_custom_call.1} parent=71 // pred_check_branch
          %1334 = sbr.rel (%p1332) target = $region84
        $region83: #{tpu_custom_call.1} parent=71 // pred_region
          %s1336 = ssub.s32 128, 128
          %1337 = vsyncadd %s1315, %s1336
          %s1338 = smul.addr %s33, 128
          %s1339 = scalar_lea.hbm %s14, %s1338
          %s1341 = sshll.u32 %s1318, 4
          %s1342 = int_to_ptr.vmem [resolvable:$true] %s1341
          %1344 = dma.vmem_to_hbm [thread:$0]  %s1342, 128, %s1339, %s1315
        $region84: #{tpu_custom_call.1} parent=71 // pred_fallthru
          _
      $region72: #{tpu_custom_call.1} parent=5 // pred_fallthru
        _
      %p1345 = scmp.le.s32.totalorder 2, %s28
      // Predicated region
      $region85: #{tpu_custom_call.1} parent=5 // pred_check
        %p1346 = pneg %p1345
      $region86: #{tpu_custom_call.1} parent=5 // pred_check_branch
        %1348 = sbr.rel (%p1346) target = $region88
      $region87: #{tpu_custom_call.1} parent=5 // pred_region
        %s1349 = ssub.s32 %s28, 2
        // Predicated region
        $region89: #{tpu_custom_call.1} parent=87 // pred_check
          %p1350 = pneg %p335
        $region90: #{tpu_custom_call.1} parent=87 // pred_check_branch
          %1352 = sbr.rel (%p1350) target = $region92
        $region91: #{tpu_custom_call.1} parent=87 // pred_region
          %s1353 = sand.u32 %s320, 1
          %s1354 = scalar_lea.sflag [#allocation4], %s1353
          %s1355 = sand.u32 %s320, 1
          %s1356 = smul.addr %s1355, 8
          %s1357 = scalar_lea.vmem [#allocation5], %s1356
          %1358 = dma.done %s1354, 128
        $region92: #{tpu_custom_call.1} parent=87 // pred_fallthru
          _
        // Predicated region
        $region93: #{tpu_custom_call.1} parent=87 // pred_check
          %p1359 = pneg %p361
        $region94: #{tpu_custom_call.1} parent=87 // pred_check_branch
          %1361 = sbr.rel (%p1359) target = $region96
        $region95: #{tpu_custom_call.1} parent=87 // pred_region
          %s1362 = sand.u32 %s346, 1
          %s1363 = scalar_lea.sflag [#allocation7], %s1362
          %s1364 = sand.u32 %s346, 1
          %s1365 = smul.addr %s1364, 8
          %s1366 = scalar_lea.vmem [#allocation6], %s1365
          %1367 = dma.done %s1363, 128
        $region96: #{tpu_custom_call.1} parent=87 // pred_fallthru
          _
      $region88: #{tpu_custom_call.1} parent=5 // pred_fallthru
        _
    $region6: #{tpu_custom_call.1} parent=1 // loop_footer
      %s32 = sadd.s32 1, %s28
    $region7: #{tpu_custom_call.1} parent=1 // loop_footer_branch
      %27 = sbr.rel target = $region3
    $region8: #{tpu_custom_call.1} parent=1 // loop_exit
      _
    %1368 = vsyncpa [#allocation3], 1
    %s1369 = scalar_lea.sflag [#allocation3], 1
    %1370 = vsyncpa %s1369, 1
    %1371 = vsyncpa [#allocation4], 1
    %s1372 = scalar_lea.sflag [#allocation4], 1
    %1373 = vsyncpa %s1372, 1
    %1374 = vsyncpa [#allocation7], 1
    %s1375 = scalar_lea.sflag [#allocation7], 1
    %1376 = vsyncpa %s1375, 1

</llo_original>
